<compile_context>
chip_gen: v6e
topology: v6e:2x2x1
jax: 0.10.0
libtpu: 0.0.40
codegen_flags: <defaults>
</compile_context>

<pallas_src>
import functools

import jax
import jax.numpy as jnp
from jax.experimental import pallas as pl
from jax.experimental.pallas import tpu as pltpu


# ----------------------------------------------------------------------------
# helpers
# ----------------------------------------------------------------------------
def _layernorm(v, g, b, eps=1e-8):
    mu = jnp.mean(v, axis=-1, keepdims=True)
    var = jnp.mean((v - mu) ** 2, axis=-1, keepdims=True)
    return (v - mu) * jax.lax.rsqrt(var + eps) * g + b


# ----------------------------------------------------------------------------
# Fused forward kernel (one batch tile per grid step)
# ----------------------------------------------------------------------------
def _mbsrec_kernel(emb_ref, cxt_ref, mask_ref, ist_ref, bias_ref, ptab_ref,
                   wc_ref, bc_ref, wje_ref, wjc_ref, bj_ref,
                   ln1g_ref, ln1b_ref, wqkv_ref, bqkv_ref, wo_ref, bo_ref,
                   ln2g_ref, ln2b_ref, w1_ref, b1_ref, w2_ref, b2_ref,
                   fg_ref, fb_ref,
                   seqemb_ref, lossn_ref, aucn_ref, cnt_ref,
                   *, num_heads, num_blocks, block_batch, seqlen):
    TB, L = block_batch, seqlen
    M = TB * L
    H = ptab_ref.shape[-1]
    hd = H // num_heads
    bf16 = jnp.bfloat16

    # ---- ItemContextProcessor for seq / pos / neg rows in one fused pass ----
    emb = emb_ref[...].reshape(3 * M, H)                         # bf16
    cxt = cxt_ref[...].reshape(3 * M, cxt_ref.shape[-1])         # bf16
    ctx_e = (jnp.dot(cxt, wc_ref[...],
                     preferred_element_type=jnp.float32) + bc_ref[...])
    # joint = emb @ wj_emb + ctx_e @ wj_ctx + bj   (no lane-axis concat)
    joint = (jnp.dot(emb, wje_ref[...], preferred_element_type=jnp.float32)
             + jnp.dot(ctx_e.astype(bf16), wjc_ref[...],
                       preferred_element_type=jnp.float32)
             + bj_ref[...])                                      # (3M, H) f32
    pos_e = joint[M:2 * M, :]
    neg_e = joint[2 * M:, :]

    # ---- lane-dense mask / istarget -> (TB, L, 1) (minor-dims transpose) ----
    mask3 = jnp.transpose(mask_ref[...], (0, 2, 1))              # (TB, L, 1)
    ist2 = jnp.transpose(ist_ref[...], (0, 2, 1)).reshape(M, 1)  # (M, 1)

    # ---- sequence: + positional embedding, mask (dropout == identity) ----
    x = joint[:M, :].reshape(TB, L, H) + ptab_ref[...][None]
    x = x * mask3

    bias = bias_ref[...][None]                                   # (1, L, L)

    # ---- transformer blocks (weights stacked along a leading axis) ----
    for blk in range(num_blocks):
        # pre-LN causal MHA with fused QKV projection (scale folded into Q)
        xn = _layernorm(x, ln1g_ref[blk], ln1b_ref[blk]).reshape(M, H)
        qkv = (jnp.dot(xn.astype(bf16), wqkv_ref[blk],
                       preferred_element_type=jnp.float32) + bqkv_ref[blk])
        q = qkv[:, :H].reshape(TB, L, H)
        k = qkv[:, H:2 * H].reshape(TB, L, H)
        v = qkv[:, 2 * H:].reshape(TB, L, H)

        # accumulate the per-head output-projection partials (no head concat)
        attn_out = jnp.zeros((M, H), jnp.float32) + bo_ref[blk]
        for h in range(num_heads):
            sl = slice(h * hd, (h + 1) * hd)
            s = jnp.einsum('bqd,bkd->bqk', q[..., sl].astype(bf16),
                           k[..., sl].astype(bf16),
                           preferred_element_type=jnp.float32) + bias
            s = s - jnp.max(s, axis=-1, keepdims=True)
            p = jnp.exp(s)
            p = p * pl.reciprocal(jnp.sum(p, axis=-1, keepdims=True),
                                  approx=True)
            oh = jnp.einsum('bqk,bkd->bqd', p.astype(bf16),
                            v[..., sl].astype(bf16),
                            preferred_element_type=jnp.float32)   # (TB, L, hd)
            attn_out = attn_out + jnp.dot(oh.reshape(M, hd).astype(bf16),
                                          wo_ref[blk, h],
                                          preferred_element_type=jnp.float32)
        x = x + attn_out.reshape(TB, L, H)

        # pre-LN feed-forward
        xn2 = _layernorm(x, ln2g_ref[blk], ln2b_ref[blk]).reshape(M, H)
        h1 = (jnp.dot(xn2.astype(bf16), w1_ref[blk],
                      preferred_element_type=jnp.float32) + b1_ref[blk])
        # TODO(synk): tanh-approx GELU (PyTorch nn.GELU default is exact erf).
        h1 = 0.5 * h1 * (1.0 + jnp.tanh(0.7978845608028654
                                        * (h1 + 0.044715 * h1 * h1 * h1)))
        ff = (jnp.dot(h1.astype(bf16), w2_ref[blk],
                      preferred_element_type=jnp.float32) + b2_ref[blk])
        x = (x + ff.reshape(TB, L, H)) * mask3                    # seq*mask

    # ---- final LayerNorm -> seq_emb ----
    se3 = _layernorm(x, fg_ref[...], fb_ref[...])                 # (TB, L, H)
    seqemb_ref[...] = se3
    se = se3.reshape(M, H)

    # ---- per-tile partial loss / AUC numerators (reduced in the wrapper) ----
    pos_logits = jnp.sum(pos_e * se, axis=-1, keepdims=True)      # (M, 1)
    neg_logits = jnp.sum(neg_e * se, axis=-1, keepdims=True)

    def log_sig(z):
        return jnp.minimum(z, 0.0) - jnp.log(1.0 + jnp.exp(-jnp.abs(z)))

    ll = (log_sig(pos_logits) + log_sig(-neg_logits)) * ist2
    d = pos_logits - neg_logits
    sgn = jnp.where(d > 0, 1.0, jnp.where(d < 0, -1.0, 0.0))
    au = (sgn + 1.0) * 0.5 * ist2

    lossn_ref[...] = jnp.sum(ll, axis=0, keepdims=True).reshape(1, 1, 1)
    aucn_ref[...] = jnp.sum(au, axis=0, keepdims=True).reshape(1, 1, 1)
    cnt_ref[...] = jnp.sum(ist2, axis=0, keepdims=True).reshape(1, 1, 1)


# ----------------------------------------------------------------------------
# MBSRec.forward wrapper: gathers + weight prep + batch-tiled pallas_call
# ----------------------------------------------------------------------------
def mbsrec_forward(params, input_seq, pos, neg, seq_cxt, pos_cxt, num_heads,
                   block_batch=1):
    B, L = input_seq.shape
    H = params["item_table"].shape[1]
    C = seq_cxt.shape[-1]
    nb = params["blk_wqkv"].shape[0]
    assert H % num_heads == 0, "hidden_units must be divisible by num_heads"
    assert B % block_batch == 0, "batch must be divisible by block_batch"
    hd = H // num_heads
    T = B // block_batch
    bf16, f32 = jnp.bfloat16, jnp.float32

    # lane-dense mask / istarget: (B, 1, L)
    mask = (input_seq > 0).astype(f32).reshape(B, 1, L)
    ist = (pos > 0).astype(f32).reshape(B, 1, L)

    # one batched item-embedding gather for seq / pos / neg (neg uses pos_cxt)
    ids_all = jnp.stack([input_seq, pos, neg], axis=0)                 # (3,B,L)
    emb_all = jnp.take(params["item_table"], ids_all, axis=0).astype(bf16)
    cxt_all = jnp.stack([seq_cxt, pos_cxt, pos_cxt], axis=0).astype(bf16)

    # precomputed additive causal bias (0 on/below diagonal, -1e30 above)
    row = jax.lax.broadcasted_iota(jnp.int32, (L, L), 0)
    col = jax.lax.broadcasted_iota(jnp.int32, (L, L), 1)
    causal_bias = jnp.where(col > row, -1e30, 0.0).astype(f32)

    # ---- weight prep: bf16 MXU operands, split joint proj, fold 1/sqrt(hd)
    #      into the Q columns, split out-projection per head ----
    scale = 1.0 / float(hd) ** 0.5
    wj = params["wj"]
    wje = wj[:H].astype(bf16)
    wjc = wj[H:].astype(bf16)
    wc = params["wc"].astype(bf16)
    wqkv = params["blk_wqkv"].at[:, :, :H].multiply(scale).astype(bf16)
    bqkv = params["blk_bqkv"].at[:, :, :H].multiply(scale)
    wo = params["blk_wo"].reshape(nb, num_heads, hd, H).astype(bf16)
    w1 = params["blk_w1"].astype(bf16)
    w2 = params["blk_w2"].astype(bf16)
    ptab = params["pos_table"][:L]

    weight_args = (causal_bias, ptab, wc, params["bc"], wje, wjc, params["bj"],
                   params["blk_ln1_g"], params["blk_ln1_b"], wqkv, bqkv,
                   wo, params["blk_bo"],
                   params["blk_ln2_g"], params["blk_ln2_b"],
                   w1, params["blk_b1"], w2, params["blk_b2"],
                   params["final_g"], params["final_b"])

    def _full(arr):
        nd = arr.ndim
        return pl.BlockSpec(arr.shape, lambda i, _n=nd: (0,) * _n)

    in_specs = [
        pl.BlockSpec((3, block_batch, L, H), lambda i: (0, i, 0, 0)),  # emb
        pl.BlockSpec((3, block_batch, L, C), lambda i: (0, i, 0, 0)),  # cxt
        pl.BlockSpec((block_batch, 1, L), lambda i: (i, 0, 0)),        # mask
        pl.BlockSpec((block_batch, 1, L), lambda i: (i, 0, 0)),        # istarget
    ] + [_full(a) for a in weight_args]

    out_shape = (jax.ShapeDtypeStruct((B, L, H), f32),
                 jax.ShapeDtypeStruct((T, 1, 1), f32),
                 jax.ShapeDtypeStruct((T, 1, 1), f32),
                 jax.ShapeDtypeStruct((T, 1, 1), f32))
    out_specs = (pl.BlockSpec((block_batch, L, H), lambda i: (i, 0, 0)),
                 pl.BlockSpec((1, 1, 1), lambda i: (i, 0, 0)),
                 pl.BlockSpec((1, 1, 1), lambda i: (i, 0, 0)),
                 pl.BlockSpec((1, 1, 1), lambda i: (i, 0, 0)))

    kern = functools.partial(_mbsrec_kernel, num_heads=num_heads,
                             num_blocks=nb, block_batch=block_batch, seqlen=L)

    seq_emb, loss_num, auc_num, cnt = pl.pallas_call(
        kern,
        grid=(T,),
        out_shape=out_shape,
        in_specs=in_specs,
        out_specs=out_specs,
        compiler_params=pltpu.CompilerParams(
            dimension_semantics=("parallel",),
            # explicit budget: below v7x's 64 MiB physical, above 32 MiB default
            vmem_limit_bytes=48 * 1024 * 1024),
    )(emb_all, cxt_all, mask, ist, *weight_args)

    denom = jnp.sum(cnt)
    loss = -jnp.sum(loss_num) / denom
    auc = jnp.sum(auc_num) / denom
    return loss, auc, seq_emb.reshape(B * L, H)


# ----------------------------------------------------------------------------
# deterministic synthetic parameters (per-block weights pre-stacked, f32)
# ----------------------------------------------------------------------------
def init_params(key, itemnum, H, C, maxlen, num_blocks):
    ks = iter(jax.random.split(key, 32))

    def nrm(shape, std=0.02):
        return (jax.random.normal(next(ks), shape) * std).astype(jnp.float32)

    item_table = nrm((itemnum + 1, H), 0.01).at[0].set(0.0)   # padding_idx=0
    params = {
        "item_table": item_table,
        "wc": nrm((C, H), 0.01), "bc": jnp.zeros((1, H), jnp.float32),
        "wj": nrm((2 * H, H), 0.01), "bj": jnp.zeros((1, H), jnp.float32),
        "pos_table": nrm((maxlen, H), 0.01),
        "final_g": jnp.ones((1, H), jnp.float32),
        "final_b": jnp.zeros((1, H), jnp.float32),
        "blk_ln1_g": jnp.ones((num_blocks, 1, H), jnp.float32),
        "blk_ln1_b": jnp.zeros((num_blocks, 1, H), jnp.float32),
        "blk_wqkv": nrm((num_blocks, H, 3 * H)),
        "blk_bqkv": jnp.zeros((num_blocks, 1, 3 * H), jnp.float32),
        "blk_wo": nrm((num_blocks, H, H)),
        "blk_bo": jnp.zeros((num_blocks, 1, H), jnp.float32),
        "blk_ln2_g": jnp.ones((num_blocks, 1, H), jnp.float32),
        "blk_ln2_b": jnp.zeros((num_blocks, 1, H), jnp.float32),
        "blk_w1": nrm((num_blocks, H, H)),
        "blk_b1": jnp.zeros((num_blocks, 1, H), jnp.float32),
        "blk_w2": nrm((num_blocks, H, H)),
        "blk_b2": jnp.zeros((num_blocks, 1, H), jnp.float32),
    }
    return params


# ----------------------------------------------------------------------------
if __name__ == "__main__":
    B, L, H, C = 4, 8, 32, 4          # batch, maxlen, hidden_units, context_size
    NUM_HEADS, NUM_BLOCKS = 2, 2
    ITEMNUM = 50

    key = jax.random.PRNGKey(0)
    kp, k1, k2, k3, k4, k5 = jax.random.split(key, 6)
    params = init_params(kp, ITEMNUM, H, C, L, NUM_BLOCKS)

    input_seq = jax.random.randint(k1, (B, L), 0, ITEMNUM + 1, dtype=jnp.int32)
    pos = jax.random.randint(k2, (B, L), 1, ITEMNUM + 1, dtype=jnp.int32)
    pos = pos.at[:, :2].set(0)        # some padding targets so istarget < N
    neg = jax.random.randint(k3, (B, L), 1, ITEMNUM + 1, dtype=jnp.int32)
    seq_cxt = jax.random.normal(k4, (B, L, C), jnp.float32)
    pos_cxt = jax.random.normal(k5, (B, L, C), jnp.float32)

    loss, auc, seq_emb = mbsrec_forward(params, input_seq, pos, neg,
                                        seq_cxt, pos_cxt, NUM_HEADS,
                                        block_batch=1)
    jax.block_until_ready((loss, auc, seq_emb))

    assert seq_emb.shape == (B * L, H)
    assert bool(jnp.isfinite(loss)) and bool(jnp.isfinite(auc))
    print("KERNEL_OK")
</pallas_src>

<mosaic_0001>
module attributes {stable_mosaic.version = 11 : i64} {
  func.func @_mbsrec_kernel(%arg0: i32, %arg1: memref<3x1x8x32xbf16, #tpu.memory_space<vmem>>, %arg2: memref<3x1x8x4xbf16, #tpu.memory_space<vmem>>, %arg3: memref<1x1x8xf32, #tpu.memory_space<vmem>>, %arg4: memref<1x1x8xf32, #tpu.memory_space<vmem>>, %arg5: memref<8x8xf32, #tpu.memory_space<vmem>>, %arg6: memref<8x32xf32, #tpu.memory_space<vmem>>, %arg7: memref<4x32xbf16, #tpu.memory_space<vmem>>, %arg8: memref<1x32xf32, #tpu.memory_space<vmem>>, %arg9: memref<32x32xbf16, #tpu.memory_space<vmem>>, %arg10: memref<32x32xbf16, #tpu.memory_space<vmem>>, %arg11: memref<1x32xf32, #tpu.memory_space<vmem>>, %arg12: memref<2x1x32xf32, #tpu.memory_space<vmem>>, %arg13: memref<2x1x32xf32, #tpu.memory_space<vmem>>, %arg14: memref<2x32x96xbf16, #tpu.memory_space<vmem>>, %arg15: memref<2x1x96xf32, #tpu.memory_space<vmem>>, %arg16: memref<2x2x16x32xbf16, #tpu.memory_space<vmem>>, %arg17: memref<2x1x32xf32, #tpu.memory_space<vmem>>, %arg18: memref<2x1x32xf32, #tpu.memory_space<vmem>>, %arg19: memref<2x1x32xf32, #tpu.memory_space<vmem>>, %arg20: memref<2x32x32xbf16, #tpu.memory_space<vmem>>, %arg21: memref<2x1x32xf32, #tpu.memory_space<vmem>>, %arg22: memref<2x32x32xbf16, #tpu.memory_space<vmem>>, %arg23: memref<2x1x32xf32, #tpu.memory_space<vmem>>, %arg24: memref<1x32xf32, #tpu.memory_space<vmem>>, %arg25: memref<1x32xf32, #tpu.memory_space<vmem>>, %arg26: memref<1x8x32xf32, #tpu.memory_space<vmem>>, %arg27: memref<1x1x1xf32, #tpu.memory_space<vmem>>, %arg28: memref<1x1x1xf32, #tpu.memory_space<vmem>>, %arg29: memref<1x1x1xf32, #tpu.memory_space<vmem>>) attributes {dimension_semantics = [#tpu.dimension_semantics<parallel>], iteration_bounds = array<i64: 4>, scalar_prefetch = 0 : i64, scratch_operands = 0 : i64, tpu.core_type = #tpu.core_type<tc>, window_params = [{transform_indices = @transform_0, window_bounds = array<i64: 3, 1, 8, 32>}, {transform_indices = @transform_1, window_bounds = array<i64: 3, 1, 8, 4>}, {transform_indices = @transform_2, window_bounds = array<i64: 1, 1, 8>}, {transform_indices = @transform_3, window_bounds = array<i64: 1, 1, 8>}, {pipeline_mode = #tpu.pipeline_mode<synchronous>, transform_indices = @transform_4, window_bounds = array<i64: 8, 8>}, {pipeline_mode = #tpu.pipeline_mode<synchronous>, transform_indices = @transform_5, window_bounds = array<i64: 8, 32>}, {pipeline_mode = #tpu.pipeline_mode<synchronous>, transform_indices = @transform_6, window_bounds = array<i64: 4, 32>}, {pipeline_mode = #tpu.pipeline_mode<synchronous>, transform_indices = @transform_7, window_bounds = array<i64: 1, 32>}, {pipeline_mode = #tpu.pipeline_mode<synchronous>, transform_indices = @transform_8, window_bounds = array<i64: 32, 32>}, {pipeline_mode = #tpu.pipeline_mode<synchronous>, transform_indices = @transform_9, window_bounds = array<i64: 32, 32>}, {pipeline_mode = #tpu.pipeline_mode<synchronous>, transform_indices = @transform_10, window_bounds = array<i64: 1, 32>}, {pipeline_mode = #tpu.pipeline_mode<synchronous>, transform_indices = @transform_11, window_bounds = array<i64: 2, 1, 32>}, {pipeline_mode = #tpu.pipeline_mode<synchronous>, transform_indices = @transform_12, window_bounds = array<i64: 2, 1, 32>}, {pipeline_mode = #tpu.pipeline_mode<synchronous>, transform_indices = @transform_13, window_bounds = array<i64: 2, 32, 96>}, {pipeline_mode = #tpu.pipeline_mode<synchronous>, transform_indices = @transform_14, window_bounds = array<i64: 2, 1, 96>}, {pipeline_mode = #tpu.pipeline_mode<synchronous>, transform_indices = @transform_15, window_bounds = array<i64: 2, 2, 16, 32>}, {pipeline_mode = #tpu.pipeline_mode<synchronous>, transform_indices = @transform_16, window_bounds = array<i64: 2, 1, 32>}, {pipeline_mode = #tpu.pipeline_mode<synchronous>, transform_indices = @transform_17, window_bounds = array<i64: 2, 1, 32>}, {pipeline_mode = #tpu.pipeline_mode<synchronous>, transform_indices = @transform_18, window_bounds = array<i64: 2, 1, 32>}, {pipeline_mode = #tpu.pipeline_mode<synchronous>, transform_indices = @transform_19, window_bounds = array<i64: 2, 32, 32>}, {pipeline_mode = #tpu.pipeline_mode<synchronous>, transform_indices = @transform_20, window_bounds = array<i64: 2, 1, 32>}, {pipeline_mode = #tpu.pipeline_mode<synchronous>, transform_indices = @transform_21, window_bounds = array<i64: 2, 32, 32>}, {pipeline_mode = #tpu.pipeline_mode<synchronous>, transform_indices = @transform_22, window_bounds = array<i64: 2, 1, 32>}, {pipeline_mode = #tpu.pipeline_mode<synchronous>, transform_indices = @transform_23, window_bounds = array<i64: 1, 32>}, {pipeline_mode = #tpu.pipeline_mode<synchronous>, transform_indices = @transform_24, window_bounds = array<i64: 1, 32>}, {transform_indices = @transform_25, window_bounds = array<i64: 1, 8, 32>}, {transform_indices = @transform_26, window_bounds = array<i64: 1, 1, 1>}, {transform_indices = @transform_27, window_bounds = array<i64: 1, 1, 1>}, {transform_indices = @transform_28, window_bounds = array<i64: 1, 1, 1>}]} {
    %c0 = arith.constant 0 : index
    %c0_0 = arith.constant 0 : index
    %c0_1 = arith.constant 0 : index
    %c0_2 = arith.constant 0 : index
    %0 = vector.load %arg1[%c0, %c0_0, %c0_1, %c0_2] : memref<3x1x8x32xbf16, #tpu.memory_space<vmem>>, vector<3x1x8x32xbf16>
    %1 = vector.shape_cast %0 : vector<3x1x8x32xbf16> to vector<24x32xbf16>
    %c0_3 = arith.constant 0 : index
    %c0_4 = arith.constant 0 : index
    %c0_5 = arith.constant 0 : index
    %c0_6 = arith.constant 0 : index
    %2 = vector.load %arg2[%c0_3, %c0_4, %c0_5, %c0_6] : memref<3x1x8x4xbf16, #tpu.memory_space<vmem>>, vector<3x1x8x4xbf16>
    %3 = vector.shape_cast %2 : vector<3x1x8x4xbf16> to vector<24x4xbf16>
    %c0_7 = arith.constant 0 : index
    %c0_8 = arith.constant 0 : index
    %4 = vector.load %arg7[%c0_7, %c0_8] : memref<4x32xbf16, #tpu.memory_space<vmem>>, vector<4x32xbf16>
    %cst = arith.constant dense<0.000000e+00> : vector<24x32xf32>
    %5 = tpu.matmul %3, %4, %cst {dimension_numbers = #tpu.dot_dimension_numbers<[1], [0], [0], [1], [0, 0, 1, 1], [], []>} : vector<24x4xbf16>, vector<4x32xbf16>, vector<24x32xf32> -> vector<24x32xf32>
    %c0_9 = arith.constant 0 : index
    %c0_10 = arith.constant 0 : index
    %6 = vector.load %arg8[%c0_9, %c0_10] : memref<1x32xf32, #tpu.memory_space<vmem>>, vector<1x32xf32>
    %7 = vector.broadcast %6 : vector<1x32xf32> to vector<24x32xf32>
    %8 = arith.addf %5, %7 : vector<24x32xf32>
    %c0_11 = arith.constant 0 : index
    %c0_12 = arith.constant 0 : index
    %9 = vector.load %arg9[%c0_11, %c0_12] : memref<32x32xbf16, #tpu.memory_space<vmem>>, vector<32x32xbf16>
    %cst_13 = arith.constant dense<0.000000e+00> : vector<24x32xf32>
    %10 = tpu.matmul %1, %9, %cst_13 {dimension_numbers = #tpu.dot_dimension_numbers<[1], [0], [0], [1], [0, 0, 1, 1], [], []>} : vector<24x32xbf16>, vector<32x32xbf16>, vector<24x32xf32> -> vector<24x32xf32>
    %11 = arith.truncf %8 : vector<24x32xf32> to vector<24x32xbf16>
    %c0_14 = arith.constant 0 : index
    %c0_15 = arith.constant 0 : index
    %12 = vector.load %arg10[%c0_14, %c0_15] : memref<32x32xbf16, #tpu.memory_space<vmem>>, vector<32x32xbf16>
    %cst_16 = arith.constant dense<0.000000e+00> : vector<24x32xf32>
    %13 = tpu.matmul %11, %12, %cst_16 {dimension_numbers = #tpu.dot_dimension_numbers<[1], [0], [0], [1], [0, 0, 1, 1], [], []>} : vector<24x32xbf16>, vector<32x32xbf16>, vector<24x32xf32> -> vector<24x32xf32>
    %14 = arith.addf %10, %13 : vector<24x32xf32>
    %c0_17 = arith.constant 0 : index
    %c0_18 = arith.constant 0 : index
    %15 = vector.load %arg11[%c0_17, %c0_18] : memref<1x32xf32, #tpu.memory_space<vmem>>, vector<1x32xf32>
    %16 = vector.broadcast %15 : vector<1x32xf32> to vector<24x32xf32>
    %17 = arith.addf %14, %16 : vector<24x32xf32>
    %18 = vector.extract_strided_slice %17 {offsets = [8, 0], sizes = [8, 32], strides = [1, 1]} : vector<24x32xf32> to vector<8x32xf32>
    %19 = vector.extract_strided_slice %17 {offsets = [16, 0], sizes = [8, 32], strides = [1, 1]} : vector<24x32xf32> to vector<8x32xf32>
    %c0_19 = arith.constant 0 : index
    %c0_20 = arith.constant 0 : index
    %c0_21 = arith.constant 0 : index
    %20 = vector.load %arg3[%c0_19, %c0_20, %c0_21] : memref<1x1x8xf32, #tpu.memory_space<vmem>>, vector<1x1x8xf32>
    %21 = tpu.transpose %20, [0, 2, 1] : vector<1x1x8xf32> -> vector<1x8x1xf32>
    %c0_22 = arith.constant 0 : index
    %c0_23 = arith.constant 0 : index
    %c0_24 = arith.constant 0 : index
    %22 = vector.load %arg4[%c0_22, %c0_23, %c0_24] : memref<1x1x8xf32, #tpu.memory_space<vmem>>, vector<1x1x8xf32>
    %23 = tpu.transpose %22, [0, 2, 1] : vector<1x1x8xf32> -> vector<1x8x1xf32>
    %24 = vector.shape_cast %23 : vector<1x8x1xf32> to vector<8x1xf32>
    %25 = vector.extract_strided_slice %17 {offsets = [0, 0], sizes = [8, 32], strides = [1, 1]} : vector<24x32xf32> to vector<8x32xf32>
    %26 = vector.shape_cast %25 : vector<8x32xf32> to vector<1x8x32xf32>
    %c0_25 = arith.constant 0 : index
    %c0_26 = arith.constant 0 : index
    %27 = vector.load %arg6[%c0_25, %c0_26] : memref<8x32xf32, #tpu.memory_space<vmem>>, vector<8x32xf32>
    %28 = vector.shape_cast %27 : vector<8x32xf32> to vector<1x8x32xf32>
    %29 = arith.addf %26, %28 : vector<1x8x32xf32>
    %30 = vector.broadcast %21 : vector<1x8x1xf32> to vector<1x8x32xf32>
    %31 = arith.mulf %29, %30 : vector<1x8x32xf32>
    %c0_27 = arith.constant 0 : index
    %c0_28 = arith.constant 0 : index
    %32 = vector.load %arg5[%c0_27, %c0_28] : memref<8x8xf32, #tpu.memory_space<vmem>>, vector<8x8xf32>
    %33 = vector.shape_cast %32 : vector<8x8xf32> to vector<1x8x8xf32>
    %c0_29 = arith.constant 0 : index
    %c0_30 = arith.constant 0 : index
    %c0_31 = arith.constant 0 : index
    %34 = vector.load %arg12[%c0_29, %c0_30, %c0_31] : memref<2x1x32xf32, #tpu.memory_space<vmem>>, vector<1x1x32xf32>
    %35 = vector.shape_cast %34 : vector<1x1x32xf32> to vector<1x32xf32>
    %c0_32 = arith.constant 0 : index
    %c0_33 = arith.constant 0 : index
    %c0_34 = arith.constant 0 : index
    %36 = vector.load %arg13[%c0_32, %c0_33, %c0_34] : memref<2x1x32xf32, #tpu.memory_space<vmem>>, vector<1x1x32xf32>
    %37 = vector.shape_cast %36 : vector<1x1x32xf32> to vector<1x32xf32>
    %cst_35 = arith.constant dense<0.000000e+00> : vector<1x8xf32>
    %38 = vector.multi_reduction <add>, %31, %cst_35 [2] : vector<1x8x32xf32> to vector<1x8xf32>
    %39 = vector.shape_cast %38 : vector<1x8xf32> to vector<1x8x1xf32>
    %cst_36 = arith.constant 3.200000e+01 : f32
    %40 = vector.broadcast %cst_36 : f32 to vector<1x8x1xf32>
    %41 = arith.divf %39, %40 : vector<1x8x1xf32>
    %42 = vector.broadcast %41 : vector<1x8x1xf32> to vector<1x8x32xf32>
    %43 = arith.subf %31, %42 : vector<1x8x32xf32>
    %44 = arith.mulf %43, %43 : vector<1x8x32xf32>
    %cst_37 = arith.constant dense<0.000000e+00> : vector<1x8xf32>
    %45 = vector.multi_reduction <add>, %44, %cst_37 [2] : vector<1x8x32xf32> to vector<1x8xf32>
    %46 = vector.shape_cast %45 : vector<1x8xf32> to vector<1x8x1xf32>
    %cst_38 = arith.constant 3.200000e+01 : f32
    %47 = vector.broadcast %cst_38 : f32 to vector<1x8x1xf32>
    %48 = arith.divf %46, %47 : vector<1x8x1xf32>
    %49 = vector.broadcast %41 : vector<1x8x1xf32> to vector<1x8x32xf32>
    %50 = arith.subf %31, %49 : vector<1x8x32xf32>
    %cst_39 = arith.constant 9.99999993E-9 : f32
    %51 = vector.broadcast %cst_39 : f32 to vector<1x8x1xf32>
    %52 = arith.addf %48, %51 : vector<1x8x1xf32>
    %53 = math.rsqrt %52 : vector<1x8x1xf32>
    %54 = vector.broadcast %53 : vector<1x8x1xf32> to vector<1x8x32xf32>
    %55 = arith.mulf %50, %54 : vector<1x8x32xf32>
    %56 = vector.shape_cast %35 : vector<1x32xf32> to vector<1x1x32xf32>
    %57 = vector.broadcast %56 : vector<1x1x32xf32> to vector<1x8x32xf32>
    %58 = arith.mulf %55, %57 : vector<1x8x32xf32>
    %59 = vector.shape_cast %37 : vector<1x32xf32> to vector<1x1x32xf32>
    %60 = vector.broadcast %59 : vector<1x1x32xf32> to vector<1x8x32xf32>
    %61 = arith.addf %58, %60 : vector<1x8x32xf32>
    %62 = vector.shape_cast %61 : vector<1x8x32xf32> to vector<8x32xf32>
    %63 = arith.truncf %62 : vector<8x32xf32> to vector<8x32xbf16>
    %c0_40 = arith.constant 0 : index
    %c0_41 = arith.constant 0 : index
    %c0_42 = arith.constant 0 : index
    %64 = vector.load %arg14[%c0_40, %c0_41, %c0_42] : memref<2x32x96xbf16, #tpu.memory_space<vmem>>, vector<1x32x96xbf16>
    %65 = vector.shape_cast %64 : vector<1x32x96xbf16> to vector<32x96xbf16>
    %cst_43 = arith.constant dense<0.000000e+00> : vector<8x96xf32>
    %66 = tpu.matmul %63, %65, %cst_43 {dimension_numbers = #tpu.dot_dimension_numbers<[1], [0], [0], [1], [0, 0, 1, 1], [], []>} : vector<8x32xbf16>, vector<32x96xbf16>, vector<8x96xf32> -> vector<8x96xf32>
    %c0_44 = arith.constant 0 : index
    %c0_45 = arith.constant 0 : index
    %c0_46 = arith.constant 0 : index
    %67 = vector.load %arg15[%c0_44, %c0_45, %c0_46] : memref<2x1x96xf32, #tpu.memory_space<vmem>>, vector<1x1x96xf32>
    %68 = vector.shape_cast %67 : vector<1x1x96xf32> to vector<1x96xf32>
    %69 = vector.broadcast %68 : vector<1x96xf32> to vector<8x96xf32>
    %70 = arith.addf %66, %69 : vector<8x96xf32>
    %71 = vector.extract_strided_slice %70 {offsets = [0, 0], sizes = [8, 32], strides = [1, 1]} : vector<8x96xf32> to vector<8x32xf32>
    %72 = vector.shape_cast %71 : vector<8x32xf32> to vector<1x8x32xf32>
    %73 = vector.extract_strided_slice %70 {offsets = [0, 32], sizes = [8, 32], strides = [1, 1]} : vector<8x96xf32> to vector<8x32xf32>
    %74 = vector.shape_cast %73 : vector<8x32xf32> to vector<1x8x32xf32>
    %75 = vector.extract_strided_slice %70 {offsets = [0, 64], sizes = [8, 32], strides = [1, 1]} : vector<8x96xf32> to vector<8x32xf32>
    %76 = vector.shape_cast %75 : vector<8x32xf32> to vector<1x8x32xf32>
    %cst_47 = arith.constant 0.000000e+00 : f32
    %77 = vector.broadcast %cst_47 : f32 to vector<8x32xf32>
    %c0_48 = arith.constant 0 : index
    %c0_49 = arith.constant 0 : index
    %c0_50 = arith.constant 0 : index
    %78 = vector.load %arg17[%c0_48, %c0_49, %c0_50] : memref<2x1x32xf32, #tpu.memory_space<vmem>>, vector<1x1x32xf32>
    %79 = vector.shape_cast %78 : vector<1x1x32xf32> to vector<1x32xf32>
    %80 = vector.broadcast %79 : vector<1x32xf32> to vector<8x32xf32>
    %81 = arith.addf %77, %80 : vector<8x32xf32>
    %82 = vector.extract_strided_slice %72 {offsets = [0, 0, 0], sizes = [1, 8, 16], strides = [1, 1, 1]} : vector<1x8x32xf32> to vector<1x8x16xf32>
    %83 = arith.truncf %82 : vector<1x8x16xf32> to vector<1x8x16xbf16>
    %84 = vector.extract_strided_slice %74 {offsets = [0, 0, 0], sizes = [1, 8, 16], strides = [1, 1, 1]} : vector<1x8x32xf32> to vector<1x8x16xf32>
    %85 = arith.truncf %84 : vector<1x8x16xf32> to vector<1x8x16xbf16>
    "tpu.trace_start"() <{level = 10 : i32, message = "bqd,bkd->bqk"}> : () -> ()
    %cst_51 = arith.constant dense<0.000000e+00> : vector<1x8x8xf32>
    %86 = tpu.matmul %83, %85, %cst_51 {dimension_numbers = #tpu.dot_dimension_numbers<[2], [2], [1], [1], [0, 0, 0, 1, 1, 1], [0], [0]>} : vector<1x8x16xbf16>, vector<1x8x16xbf16>, vector<1x8x8xf32> -> vector<1x8x8xf32>
    "tpu.trace_stop"() : () -> ()
    %87 = arith.addf %86, %33 : vector<1x8x8xf32>
    %cst_52 = arith.constant dense<0xFF800000> : vector<1x8xf32>
    %88 = vector.multi_reduction <maximumf>, %87, %cst_52 [2] : vector<1x8x8xf32> to vector<1x8xf32>
    %89 = vector.shape_cast %88 : vector<1x8xf32> to vector<1x8x1xf32>
    %90 = vector.broadcast %89 : vector<1x8x1xf32> to vector<1x8x8xf32>
    %91 = arith.subf %87, %90 : vector<1x8x8xf32>
    %92 = math.exp %91 : vector<1x8x8xf32>
    %cst_53 = arith.constant dense<0.000000e+00> : vector<1x8xf32>
    %93 = vector.multi_reduction <add>, %92, %cst_53 [2] : vector<1x8x8xf32> to vector<1x8xf32>
    %94 = vector.shape_cast %93 : vector<1x8xf32> to vector<1x8x1xf32>
    %95 = tpu.reciprocal %94 {approx = true} : vector<1x8x1xf32> -> vector<1x8x1xf32>
    %96 = vector.broadcast %95 : vector<1x8x1xf32> to vector<1x8x8xf32>
    %97 = arith.mulf %92, %96 : vector<1x8x8xf32>
    %98 = arith.truncf %97 : vector<1x8x8xf32> to vector<1x8x8xbf16>
    %99 = vector.extract_strided_slice %76 {offsets = [0, 0, 0], sizes = [1, 8, 16], strides = [1, 1, 1]} : vector<1x8x32xf32> to vector<1x8x16xf32>
    %100 = arith.truncf %99 : vector<1x8x16xf32> to vector<1x8x16xbf16>
    "tpu.trace_start"() <{level = 10 : i32, message = "bqk,bkd->bqd"}> : () -> ()
    %cst_54 = arith.constant dense<0.000000e+00> : vector<1x8x16xf32>
    %101 = tpu.matmul %98, %100, %cst_54 {dimension_numbers = #tpu.dot_dimension_numbers<[2], [1], [1], [2], [0, 0, 0, 1, 1, 2], [0], [0]>} : vector<1x8x8xbf16>, vector<1x8x16xbf16>, vector<1x8x16xf32> -> vector<1x8x16xf32>
    "tpu.trace_stop"() : () -> ()
    %102 = vector.shape_cast %101 : vector<1x8x16xf32> to vector<8x16xf32>
    %103 = arith.truncf %102 : vector<8x16xf32> to vector<8x16xbf16>
    %c0_55 = arith.constant 0 : index
    %c0_56 = arith.constant 0 : index
    %c0_57 = arith.constant 0 : index
    %c0_58 = arith.constant 0 : index
    %104 = vector.load %arg16[%c0_55, %c0_56, %c0_57, %c0_58] : memref<2x2x16x32xbf16, #tpu.memory_space<vmem>>, vector<1x1x16x32xbf16>
    %105 = vector.shape_cast %104 : vector<1x1x16x32xbf16> to vector<16x32xbf16>
    %cst_59 = arith.constant dense<0.000000e+00> : vector<8x32xf32>
    %106 = tpu.matmul %103, %105, %cst_59 {dimension_numbers = #tpu.dot_dimension_numbers<[1], [0], [0], [1], [0, 0, 1, 1], [], []>} : vector<8x16xbf16>, vector<16x32xbf16>, vector<8x32xf32> -> vector<8x32xf32>
    %107 = arith.addf %81, %106 : vector<8x32xf32>
    %108 = vector.extract_strided_slice %72 {offsets = [0, 0, 16], sizes = [1, 8, 16], strides = [1, 1, 1]} : vector<1x8x32xf32> to vector<1x8x16xf32>
    %109 = arith.truncf %108 : vector<1x8x16xf32> to vector<1x8x16xbf16>
    %110 = vector.extract_strided_slice %74 {offsets = [0, 0, 16], sizes = [1, 8, 16], strides = [1, 1, 1]} : vector<1x8x32xf32> to vector<1x8x16xf32>
    %111 = arith.truncf %110 : vector<1x8x16xf32> to vector<1x8x16xbf16>
    "tpu.trace_start"() <{level = 10 : i32, message = "bqd,bkd->bqk"}> : () -> ()
    %cst_60 = arith.constant dense<0.000000e+00> : vector<1x8x8xf32>
    %112 = tpu.matmul %109, %111, %cst_60 {dimension_numbers = #tpu.dot_dimension_numbers<[2], [2], [1], [1], [0, 0, 0, 1, 1, 1], [0], [0]>} : vector<1x8x16xbf16>, vector<1x8x16xbf16>, vector<1x8x8xf32> -> vector<1x8x8xf32>
    "tpu.trace_stop"() : () -> ()
    %113 = arith.addf %112, %33 : vector<1x8x8xf32>
    %cst_61 = arith.constant dense<0xFF800000> : vector<1x8xf32>
    %114 = vector.multi_reduction <maximumf>, %113, %cst_61 [2] : vector<1x8x8xf32> to vector<1x8xf32>
    %115 = vector.shape_cast %114 : vector<1x8xf32> to vector<1x8x1xf32>
    %116 = vector.broadcast %115 : vector<1x8x1xf32> to vector<1x8x8xf32>
    %117 = arith.subf %113, %116 : vector<1x8x8xf32>
    %118 = math.exp %117 : vector<1x8x8xf32>
    %cst_62 = arith.constant dense<0.000000e+00> : vector<1x8xf32>
    %119 = vector.multi_reduction <add>, %118, %cst_62 [2] : vector<1x8x8xf32> to vector<1x8xf32>
    %120 = vector.shape_cast %119 : vector<1x8xf32> to vector<1x8x1xf32>
    %121 = tpu.reciprocal %120 {approx = true} : vector<1x8x1xf32> -> vector<1x8x1xf32>
    %122 = vector.broadcast %121 : vector<1x8x1xf32> to vector<1x8x8xf32>
    %123 = arith.mulf %118, %122 : vector<1x8x8xf32>
    %124 = arith.truncf %123 : vector<1x8x8xf32> to vector<1x8x8xbf16>
    %125 = vector.extract_strided_slice %76 {offsets = [0, 0, 16], sizes = [1, 8, 16], strides = [1, 1, 1]} : vector<1x8x32xf32> to vector<1x8x16xf32>
    %126 = arith.truncf %125 : vector<1x8x16xf32> to vector<1x8x16xbf16>
    "tpu.trace_start"() <{level = 10 : i32, message = "bqk,bkd->bqd"}> : () -> ()
    %cst_63 = arith.constant dense<0.000000e+00> : vector<1x8x16xf32>
    %127 = tpu.matmul %124, %126, %cst_63 {dimension_numbers = #tpu.dot_dimension_numbers<[2], [1], [1], [2], [0, 0, 0, 1, 1, 2], [0], [0]>} : vector<1x8x8xbf16>, vector<1x8x16xbf16>, vector<1x8x16xf32> -> vector<1x8x16xf32>
    "tpu.trace_stop"() : () -> ()
    %128 = vector.shape_cast %127 : vector<1x8x16xf32> to vector<8x16xf32>
    %129 = arith.truncf %128 : vector<8x16xf32> to vector<8x16xbf16>
    %c0_64 = arith.constant 0 : index
    %c1 = arith.constant 1 : index
    %c0_65 = arith.constant 0 : index
    %c0_66 = arith.constant 0 : index
    %130 = vector.load %arg16[%c0_64, %c1, %c0_65, %c0_66] : memref<2x2x16x32xbf16, #tpu.memory_space<vmem>>, vector<1x1x16x32xbf16>
    %131 = vector.shape_cast %130 : vector<1x1x16x32xbf16> to vector<16x32xbf16>
    %cst_67 = arith.constant dense<0.000000e+00> : vector<8x32xf32>
    %132 = tpu.matmul %129, %131, %cst_67 {dimension_numbers = #tpu.dot_dimension_numbers<[1], [0], [0], [1], [0, 0, 1, 1], [], []>} : vector<8x16xbf16>, vector<16x32xbf16>, vector<8x32xf32> -> vector<8x32xf32>
    %133 = arith.addf %107, %132 : vector<8x32xf32>
    %134 = vector.shape_cast %133 : vector<8x32xf32> to vector<1x8x32xf32>
    %135 = arith.addf %31, %134 : vector<1x8x32xf32>
    %c0_68 = arith.constant 0 : index
    %c0_69 = arith.constant 0 : index
    %c0_70 = arith.constant 0 : index
    %136 = vector.load %arg18[%c0_68, %c0_69, %c0_70] : memref<2x1x32xf32, #tpu.memory_space<vmem>>, vector<1x1x32xf32>
    %137 = vector.shape_cast %136 : vector<1x1x32xf32> to vector<1x32xf32>
    %c0_71 = arith.constant 0 : index
    %c0_72 = arith.constant 0 : index
    %c0_73 = arith.constant 0 : index
    %138 = vector.load %arg19[%c0_71, %c0_72, %c0_73] : memref<2x1x32xf32, #tpu.memory_space<vmem>>, vector<1x1x32xf32>
    %139 = vector.shape_cast %138 : vector<1x1x32xf32> to vector<1x32xf32>
    %cst_74 = arith.constant dense<0.000000e+00> : vector<1x8xf32>
    %140 = vector.multi_reduction <add>, %135, %cst_74 [2] : vector<1x8x32xf32> to vector<1x8xf32>
    %141 = vector.shape_cast %140 : vector<1x8xf32> to vector<1x8x1xf32>
    %cst_75 = arith.constant 3.200000e+01 : f32
    %142 = vector.broadcast %cst_75 : f32 to vector<1x8x1xf32>
    %143 = arith.divf %141, %142 : vector<1x8x1xf32>
    %144 = vector.broadcast %143 : vector<1x8x1xf32> to vector<1x8x32xf32>
    %145 = arith.subf %135, %144 : vector<1x8x32xf32>
    %146 = arith.mulf %145, %145 : vector<1x8x32xf32>
    %cst_76 = arith.constant dense<0.000000e+00> : vector<1x8xf32>
    %147 = vector.multi_reduction <add>, %146, %cst_76 [2] : vector<1x8x32xf32> to vector<1x8xf32>
    %148 = vector.shape_cast %147 : vector<1x8xf32> to vector<1x8x1xf32>
    %cst_77 = arith.constant 3.200000e+01 : f32
    %149 = vector.broadcast %cst_77 : f32 to vector<1x8x1xf32>
    %150 = arith.divf %148, %149 : vector<1x8x1xf32>
    %151 = vector.broadcast %143 : vector<1x8x1xf32> to vector<1x8x32xf32>
    %152 = arith.subf %135, %151 : vector<1x8x32xf32>
    %cst_78 = arith.constant 9.99999993E-9 : f32
    %153 = vector.broadcast %cst_78 : f32 to vector<1x8x1xf32>
    %154 = arith.addf %150, %153 : vector<1x8x1xf32>
    %155 = math.rsqrt %154 : vector<1x8x1xf32>
    %156 = vector.broadcast %155 : vector<1x8x1xf32> to vector<1x8x32xf32>
    %157 = arith.mulf %152, %156 : vector<1x8x32xf32>
    %158 = vector.shape_cast %137 : vector<1x32xf32> to vector<1x1x32xf32>
    %159 = vector.broadcast %158 : vector<1x1x32xf32> to vector<1x8x32xf32>
    %160 = arith.mulf %157, %159 : vector<1x8x32xf32>
    %161 = vector.shape_cast %139 : vector<1x32xf32> to vector<1x1x32xf32>
    %162 = vector.broadcast %161 : vector<1x1x32xf32> to vector<1x8x32xf32>
    %163 = arith.addf %160, %162 : vector<1x8x32xf32>
    %164 = vector.shape_cast %163 : vector<1x8x32xf32> to vector<8x32xf32>
    %165 = arith.truncf %164 : vector<8x32xf32> to vector<8x32xbf16>
    %c0_79 = arith.constant 0 : index
    %c0_80 = arith.constant 0 : index
    %c0_81 = arith.constant 0 : index
    %166 = vector.load %arg20[%c0_79, %c0_80, %c0_81] : memref<2x32x32xbf16, #tpu.memory_space<vmem>>, vector<1x32x32xbf16>
    %167 = vector.shape_cast %166 : vector<1x32x32xbf16> to vector<32x32xbf16>
    %cst_82 = arith.constant dense<0.000000e+00> : vector<8x32xf32>
    %168 = tpu.matmul %165, %167, %cst_82 {dimension_numbers = #tpu.dot_dimension_numbers<[1], [0], [0], [1], [0, 0, 1, 1], [], []>} : vector<8x32xbf16>, vector<32x32xbf16>, vector<8x32xf32> -> vector<8x32xf32>
    %c0_83 = arith.constant 0 : index
    %c0_84 = arith.constant 0 : index
    %c0_85 = arith.constant 0 : index
    %169 = vector.load %arg21[%c0_83, %c0_84, %c0_85] : memref<2x1x32xf32, #tpu.memory_space<vmem>>, vector<1x1x32xf32>
    %170 = vector.shape_cast %169 : vector<1x1x32xf32> to vector<1x32xf32>
    %171 = vector.broadcast %170 : vector<1x32xf32> to vector<8x32xf32>
    %172 = arith.addf %168, %171 : vector<8x32xf32>
    %cst_86 = arith.constant 5.000000e-01 : f32
    %173 = vector.broadcast %cst_86 : f32 to vector<8x32xf32>
    %174 = arith.mulf %173, %172 : vector<8x32xf32>
    %cst_87 = arith.constant 4.471500e-02 : f32
    %175 = vector.broadcast %cst_87 : f32 to vector<8x32xf32>
    %176 = arith.mulf %175, %172 : vector<8x32xf32>
    %177 = arith.mulf %176, %172 : vector<8x32xf32>
    %178 = arith.mulf %177, %172 : vector<8x32xf32>
    %179 = arith.addf %172, %178 : vector<8x32xf32>
    %cst_88 = arith.constant 0.797884583 : f32
    %180 = vector.broadcast %cst_88 : f32 to vector<8x32xf32>
    %181 = arith.mulf %180, %179 : vector<8x32xf32>
    %182 = math.tanh %181 : vector<8x32xf32>
    %cst_89 = arith.constant 1.000000e+00 : f32
    %183 = vector.broadcast %cst_89 : f32 to vector<8x32xf32>
    %184 = arith.addf %183, %182 : vector<8x32xf32>
    %185 = arith.mulf %174, %184 : vector<8x32xf32>
    %186 = arith.truncf %185 : vector<8x32xf32> to vector<8x32xbf16>
    %c0_90 = arith.constant 0 : index
    %c0_91 = arith.constant 0 : index
    %c0_92 = arith.constant 0 : index
    %187 = vector.load %arg22[%c0_90, %c0_91, %c0_92] : memref<2x32x32xbf16, #tpu.memory_space<vmem>>, vector<1x32x32xbf16>
    %188 = vector.shape_cast %187 : vector<1x32x32xbf16> to vector<32x32xbf16>
    %cst_93 = arith.constant dense<0.000000e+00> : vector<8x32xf32>
    %189 = tpu.matmul %186, %188, %cst_93 {dimension_numbers = #tpu.dot_dimension_numbers<[1], [0], [0], [1], [0, 0, 1, 1], [], []>} : vector<8x32xbf16>, vector<32x32xbf16>, vector<8x32xf32> -> vector<8x32xf32>
    %c0_94 = arith.constant 0 : index
    %c0_95 = arith.constant 0 : index
    %c0_96 = arith.constant 0 : index
    %190 = vector.load %arg23[%c0_94, %c0_95, %c0_96] : memref<2x1x32xf32, #tpu.memory_space<vmem>>, vector<1x1x32xf32>
    %191 = vector.shape_cast %190 : vector<1x1x32xf32> to vector<1x32xf32>
    %192 = vector.broadcast %191 : vector<1x32xf32> to vector<8x32xf32>
    %193 = arith.addf %189, %192 : vector<8x32xf32>
    %194 = vector.shape_cast %193 : vector<8x32xf32> to vector<1x8x32xf32>
    %195 = arith.addf %135, %194 : vector<1x8x32xf32>
    %196 = vector.broadcast %21 : vector<1x8x1xf32> to vector<1x8x32xf32>
    %197 = arith.mulf %195, %196 : vector<1x8x32xf32>
    %c1_97 = arith.constant 1 : index
    %c0_98 = arith.constant 0 : index
    %c0_99 = arith.constant 0 : index
    %198 = vector.load %arg12[%c1_97, %c0_98, %c0_99] : memref<2x1x32xf32, #tpu.memory_space<vmem>>, vector<1x1x32xf32>
    %199 = vector.shape_cast %198 : vector<1x1x32xf32> to vector<1x32xf32>
    %c1_100 = arith.constant 1 : index
    %c0_101 = arith.constant 0 : index
    %c0_102 = arith.constant 0 : index
    %200 = vector.load %arg13[%c1_100, %c0_101, %c0_102] : memref<2x1x32xf32, #tpu.memory_space<vmem>>, vector<1x1x32xf32>
    %201 = vector.shape_cast %200 : vector<1x1x32xf32> to vector<1x32xf32>
    %cst_103 = arith.constant dense<0.000000e+00> : vector<1x8xf32>
    %202 = vector.multi_reduction <add>, %197, %cst_103 [2] : vector<1x8x32xf32> to vector<1x8xf32>
    %203 = vector.shape_cast %202 : vector<1x8xf32> to vector<1x8x1xf32>
    %cst_104 = arith.constant 3.200000e+01 : f32
    %204 = vector.broadcast %cst_104 : f32 to vector<1x8x1xf32>
    %205 = arith.divf %203, %204 : vector<1x8x1xf32>
    %206 = vector.broadcast %205 : vector<1x8x1xf32> to vector<1x8x32xf32>
    %207 = arith.subf %197, %206 : vector<1x8x32xf32>
    %208 = arith.mulf %207, %207 : vector<1x8x32xf32>
    %cst_105 = arith.constant dense<0.000000e+00> : vector<1x8xf32>
    %209 = vector.multi_reduction <add>, %208, %cst_105 [2] : vector<1x8x32xf32> to vector<1x8xf32>
    %210 = vector.shape_cast %209 : vector<1x8xf32> to vector<1x8x1xf32>
    %cst_106 = arith.constant 3.200000e+01 : f32
    %211 = vector.broadcast %cst_106 : f32 to vector<1x8x1xf32>
    %212 = arith.divf %210, %211 : vector<1x8x1xf32>
    %213 = vector.broadcast %205 : vector<1x8x1xf32> to vector<1x8x32xf32>
    %214 = arith.subf %197, %213 : vector<1x8x32xf32>
    %cst_107 = arith.constant 9.99999993E-9 : f32
    %215 = vector.broadcast %cst_107 : f32 to vector<1x8x1xf32>
    %216 = arith.addf %212, %215 : vector<1x8x1xf32>
    %217 = math.rsqrt %216 : vector<1x8x1xf32>
    %218 = vector.broadcast %217 : vector<1x8x1xf32> to vector<1x8x32xf32>
    %219 = arith.mulf %214, %218 : vector<1x8x32xf32>
    %220 = vector.shape_cast %199 : vector<1x32xf32> to vector<1x1x32xf32>
    %221 = vector.broadcast %220 : vector<1x1x32xf32> to vector<1x8x32xf32>
    %222 = arith.mulf %219, %221 : vector<1x8x32xf32>
    %223 = vector.shape_cast %201 : vector<1x32xf32> to vector<1x1x32xf32>
    %224 = vector.broadcast %223 : vector<1x1x32xf32> to vector<1x8x32xf32>
    %225 = arith.addf %222, %224 : vector<1x8x32xf32>
    %226 = vector.shape_cast %225 : vector<1x8x32xf32> to vector<8x32xf32>
    %227 = arith.truncf %226 : vector<8x32xf32> to vector<8x32xbf16>
    %c1_108 = arith.constant 1 : index
    %c0_109 = arith.constant 0 : index
    %c0_110 = arith.constant 0 : index
    %228 = vector.load %arg14[%c1_108, %c0_109, %c0_110] : memref<2x32x96xbf16, #tpu.memory_space<vmem>>, vector<1x32x96xbf16>
    %229 = vector.shape_cast %228 : vector<1x32x96xbf16> to vector<32x96xbf16>
    %cst_111 = arith.constant dense<0.000000e+00> : vector<8x96xf32>
    %230 = tpu.matmul %227, %229, %cst_111 {dimension_numbers = #tpu.dot_dimension_numbers<[1], [0], [0], [1], [0, 0, 1, 1], [], []>} : vector<8x32xbf16>, vector<32x96xbf16>, vector<8x96xf32> -> vector<8x96xf32>
    %c1_112 = arith.constant 1 : index
    %c0_113 = arith.constant 0 : index
    %c0_114 = arith.constant 0 : index
    %231 = vector.load %arg15[%c1_112, %c0_113, %c0_114] : memref<2x1x96xf32, #tpu.memory_space<vmem>>, vector<1x1x96xf32>
    %232 = vector.shape_cast %231 : vector<1x1x96xf32> to vector<1x96xf32>
    %233 = vector.broadcast %232 : vector<1x96xf32> to vector<8x96xf32>
    %234 = arith.addf %230, %233 : vector<8x96xf32>
    %235 = vector.extract_strided_slice %234 {offsets = [0, 0], sizes = [8, 32], strides = [1, 1]} : vector<8x96xf32> to vector<8x32xf32>
    %236 = vector.shape_cast %235 : vector<8x32xf32> to vector<1x8x32xf32>
    %237 = vector.extract_strided_slice %234 {offsets = [0, 32], sizes = [8, 32], strides = [1, 1]} : vector<8x96xf32> to vector<8x32xf32>
    %238 = vector.shape_cast %237 : vector<8x32xf32> to vector<1x8x32xf32>
    %239 = vector.extract_strided_slice %234 {offsets = [0, 64], sizes = [8, 32], strides = [1, 1]} : vector<8x96xf32> to vector<8x32xf32>
    %240 = vector.shape_cast %239 : vector<8x32xf32> to vector<1x8x32xf32>
    %cst_115 = arith.constant 0.000000e+00 : f32
    %241 = vector.broadcast %cst_115 : f32 to vector<8x32xf32>
    %c1_116 = arith.constant 1 : index
    %c0_117 = arith.constant 0 : index
    %c0_118 = arith.constant 0 : index
    %242 = vector.load %arg17[%c1_116, %c0_117, %c0_118] : memref<2x1x32xf32, #tpu.memory_space<vmem>>, vector<1x1x32xf32>
    %243 = vector.shape_cast %242 : vector<1x1x32xf32> to vector<1x32xf32>
    %244 = vector.broadcast %243 : vector<1x32xf32> to vector<8x32xf32>
    %245 = arith.addf %241, %244 : vector<8x32xf32>
    %246 = vector.extract_strided_slice %236 {offsets = [0, 0, 0], sizes = [1, 8, 16], strides = [1, 1, 1]} : vector<1x8x32xf32> to vector<1x8x16xf32>
    %247 = arith.truncf %246 : vector<1x8x16xf32> to vector<1x8x16xbf16>
    %248 = vector.extract_strided_slice %238 {offsets = [0, 0, 0], sizes = [1, 8, 16], strides = [1, 1, 1]} : vector<1x8x32xf32> to vector<1x8x16xf32>
    %249 = arith.truncf %248 : vector<1x8x16xf32> to vector<1x8x16xbf16>
    "tpu.trace_start"() <{level = 10 : i32, message = "bqd,bkd->bqk"}> : () -> ()
    %cst_119 = arith.constant dense<0.000000e+00> : vector<1x8x8xf32>
    %250 = tpu.matmul %247, %249, %cst_119 {dimension_numbers = #tpu.dot_dimension_numbers<[2], [2], [1], [1], [0, 0, 0, 1, 1, 1], [0], [0]>} : vector<1x8x16xbf16>, vector<1x8x16xbf16>, vector<1x8x8xf32> -> vector<1x8x8xf32>
    "tpu.trace_stop"() : () -> ()
    %251 = arith.addf %250, %33 : vector<1x8x8xf32>
    %cst_120 = arith.constant dense<0xFF800000> : vector<1x8xf32>
    %252 = vector.multi_reduction <maximumf>, %251, %cst_120 [2] : vector<1x8x8xf32> to vector<1x8xf32>
    %253 = vector.shape_cast %252 : vector<1x8xf32> to vector<1x8x1xf32>
    %254 = vector.broadcast %253 : vector<1x8x1xf32> to vector<1x8x8xf32>
    %255 = arith.subf %251, %254 : vector<1x8x8xf32>
    %256 = math.exp %255 : vector<1x8x8xf32>
    %cst_121 = arith.constant dense<0.000000e+00> : vector<1x8xf32>
    %257 = vector.multi_reduction <add>, %256, %cst_121 [2] : vector<1x8x8xf32> to vector<1x8xf32>
    %258 = vector.shape_cast %257 : vector<1x8xf32> to vector<1x8x1xf32>
    %259 = tpu.reciprocal %258 {approx = true} : vector<1x8x1xf32> -> vector<1x8x1xf32>
    %260 = vector.broadcast %259 : vector<1x8x1xf32> to vector<1x8x8xf32>
    %261 = arith.mulf %256, %260 : vector<1x8x8xf32>
    %262 = arith.truncf %261 : vector<1x8x8xf32> to vector<1x8x8xbf16>
    %263 = vector.extract_strided_slice %240 {offsets = [0, 0, 0], sizes = [1, 8, 16], strides = [1, 1, 1]} : vector<1x8x32xf32> to vector<1x8x16xf32>
    %264 = arith.truncf %263 : vector<1x8x16xf32> to vector<1x8x16xbf16>
    "tpu.trace_start"() <{level = 10 : i32, message = "bqk,bkd->bqd"}> : () -> ()
    %cst_122 = arith.constant dense<0.000000e+00> : vector<1x8x16xf32>
    %265 = tpu.matmul %262, %264, %cst_122 {dimension_numbers = #tpu.dot_dimension_numbers<[2], [1], [1], [2], [0, 0, 0, 1, 1, 2], [0], [0]>} : vector<1x8x8xbf16>, vector<1x8x16xbf16>, vector<1x8x16xf32> -> vector<1x8x16xf32>
    "tpu.trace_stop"() : () -> ()
    %266 = vector.shape_cast %265 : vector<1x8x16xf32> to vector<8x16xf32>
    %267 = arith.truncf %266 : vector<8x16xf32> to vector<8x16xbf16>
    %c1_123 = arith.constant 1 : index
    %c0_124 = arith.constant 0 : index
    %c0_125 = arith.constant 0 : index
    %c0_126 = arith.constant 0 : index
    %268 = vector.load %arg16[%c1_123, %c0_124, %c0_125, %c0_126] : memref<2x2x16x32xbf16, #tpu.memory_space<vmem>>, vector<1x1x16x32xbf16>
    %269 = vector.shape_cast %268 : vector<1x1x16x32xbf16> to vector<16x32xbf16>
    %cst_127 = arith.constant dense<0.000000e+00> : vector<8x32xf32>
    %270 = tpu.matmul %267, %269, %cst_127 {dimension_numbers = #tpu.dot_dimension_numbers<[1], [0], [0], [1], [0, 0, 1, 1], [], []>} : vector<8x16xbf16>, vector<16x32xbf16>, vector<8x32xf32> -> vector<8x32xf32>
    %271 = arith.addf %245, %270 : vector<8x32xf32>
    %272 = vector.extract_strided_slice %236 {offsets = [0, 0, 16], sizes = [1, 8, 16], strides = [1, 1, 1]} : vector<1x8x32xf32> to vector<1x8x16xf32>
    %273 = arith.truncf %272 : vector<1x8x16xf32> to vector<1x8x16xbf16>
    %274 = vector.extract_strided_slice %238 {offsets = [0, 0, 16], sizes = [1, 8, 16], strides = [1, 1, 1]} : vector<1x8x32xf32> to vector<1x8x16xf32>
    %275 = arith.truncf %274 : vector<1x8x16xf32> to vector<1x8x16xbf16>
    "tpu.trace_start"() <{level = 10 : i32, message = "bqd,bkd->bqk"}> : () -> ()
    %cst_128 = arith.constant dense<0.000000e+00> : vector<1x8x8xf32>
    %276 = tpu.matmul %273, %275, %cst_128 {dimension_numbers = #tpu.dot_dimension_numbers<[2], [2], [1], [1], [0, 0, 0, 1, 1, 1], [0], [0]>} : vector<1x8x16xbf16>, vector<1x8x16xbf16>, vector<1x8x8xf32> -> vector<1x8x8xf32>
    "tpu.trace_stop"() : () -> ()
    %277 = arith.addf %276, %33 : vector<1x8x8xf32>
    %cst_129 = arith.constant dense<0xFF800000> : vector<1x8xf32>
    %278 = vector.multi_reduction <maximumf>, %277, %cst_129 [2] : vector<1x8x8xf32> to vector<1x8xf32>
    %279 = vector.shape_cast %278 : vector<1x8xf32> to vector<1x8x1xf32>
    %280 = vector.broadcast %279 : vector<1x8x1xf32> to vector<1x8x8xf32>
    %281 = arith.subf %277, %280 : vector<1x8x8xf32>
    %282 = math.exp %281 : vector<1x8x8xf32>
    %cst_130 = arith.constant dense<0.000000e+00> : vector<1x8xf32>
    %283 = vector.multi_reduction <add>, %282, %cst_130 [2] : vector<1x8x8xf32> to vector<1x8xf32>
    %284 = vector.shape_cast %283 : vector<1x8xf32> to vector<1x8x1xf32>
    %285 = tpu.reciprocal %284 {approx = true} : vector<1x8x1xf32> -> vector<1x8x1xf32>
    %286 = vector.broadcast %285 : vector<1x8x1xf32> to vector<1x8x8xf32>
    %287 = arith.mulf %282, %286 : vector<1x8x8xf32>
    %288 = arith.truncf %287 : vector<1x8x8xf32> to vector<1x8x8xbf16>
    %289 = vector.extract_strided_slice %240 {offsets = [0, 0, 16], sizes = [1, 8, 16], strides = [1, 1, 1]} : vector<1x8x32xf32> to vector<1x8x16xf32>
    %290 = arith.truncf %289 : vector<1x8x16xf32> to vector<1x8x16xbf16>
    "tpu.trace_start"() <{level = 10 : i32, message = "bqk,bkd->bqd"}> : () -> ()
    %cst_131 = arith.constant dense<0.000000e+00> : vector<1x8x16xf32>
    %291 = tpu.matmul %288, %290, %cst_131 {dimension_numbers = #tpu.dot_dimension_numbers<[2], [1], [1], [2], [0, 0, 0, 1, 1, 2], [0], [0]>} : vector<1x8x8xbf16>, vector<1x8x16xbf16>, vector<1x8x16xf32> -> vector<1x8x16xf32>
    "tpu.trace_stop"() : () -> ()
    %292 = vector.shape_cast %291 : vector<1x8x16xf32> to vector<8x16xf32>
    %293 = arith.truncf %292 : vector<8x16xf32> to vector<8x16xbf16>
    %c1_132 = arith.constant 1 : index
    %c1_133 = arith.constant 1 : index
    %c0_134 = arith.constant 0 : index
    %c0_135 = arith.constant 0 : index
    %294 = vector.load %arg16[%c1_132, %c1_133, %c0_134, %c0_135] : memref<2x2x16x32xbf16, #tpu.memory_space<vmem>>, vector<1x1x16x32xbf16>
    %295 = vector.shape_cast %294 : vector<1x1x16x32xbf16> to vector<16x32xbf16>
    %cst_136 = arith.constant dense<0.000000e+00> : vector<8x32xf32>
    %296 = tpu.matmul %293, %295, %cst_136 {dimension_numbers = #tpu.dot_dimension_numbers<[1], [0], [0], [1], [0, 0, 1, 1], [], []>} : vector<8x16xbf16>, vector<16x32xbf16>, vector<8x32xf32> -> vector<8x32xf32>
    %297 = arith.addf %271, %296 : vector<8x32xf32>
    %298 = vector.shape_cast %297 : vector<8x32xf32> to vector<1x8x32xf32>
    %299 = arith.addf %197, %298 : vector<1x8x32xf32>
    %c1_137 = arith.constant 1 : index
    %c0_138 = arith.constant 0 : index
    %c0_139 = arith.constant 0 : index
    %300 = vector.load %arg18[%c1_137, %c0_138, %c0_139] : memref<2x1x32xf32, #tpu.memory_space<vmem>>, vector<1x1x32xf32>
    %301 = vector.shape_cast %300 : vector<1x1x32xf32> to vector<1x32xf32>
    %c1_140 = arith.constant 1 : index
    %c0_141 = arith.constant 0 : index
    %c0_142 = arith.constant 0 : index
    %302 = vector.load %arg19[%c1_140, %c0_141, %c0_142] : memref<2x1x32xf32, #tpu.memory_space<vmem>>, vector<1x1x32xf32>
    %303 = vector.shape_cast %302 : vector<1x1x32xf32> to vector<1x32xf32>
    %cst_143 = arith.constant dense<0.000000e+00> : vector<1x8xf32>
    %304 = vector.multi_reduction <add>, %299, %cst_143 [2] : vector<1x8x32xf32> to vector<1x8xf32>
    %305 = vector.shape_cast %304 : vector<1x8xf32> to vector<1x8x1xf32>
    %cst_144 = arith.constant 3.200000e+01 : f32
    %306 = vector.broadcast %cst_144 : f32 to vector<1x8x1xf32>
    %307 = arith.divf %305, %306 : vector<1x8x1xf32>
    %308 = vector.broadcast %307 : vector<1x8x1xf32> to vector<1x8x32xf32>
    %309 = arith.subf %299, %308 : vector<1x8x32xf32>
    %310 = arith.mulf %309, %309 : vector<1x8x32xf32>
    %cst_145 = arith.constant dense<0.000000e+00> : vector<1x8xf32>
    %311 = vector.multi_reduction <add>, %310, %cst_145 [2] : vector<1x8x32xf32> to vector<1x8xf32>
    %312 = vector.shape_cast %311 : vector<1x8xf32> to vector<1x8x1xf32>
    %cst_146 = arith.constant 3.200000e+01 : f32
    %313 = vector.broadcast %cst_146 : f32 to vector<1x8x1xf32>
    %314 = arith.divf %312, %313 : vector<1x8x1xf32>
    %315 = vector.broadcast %307 : vector<1x8x1xf32> to vector<1x8x32xf32>
    %316 = arith.subf %299, %315 : vector<1x8x32xf32>
    %cst_147 = arith.constant 9.99999993E-9 : f32
    %317 = vector.broadcast %cst_147 : f32 to vector<1x8x1xf32>
    %318 = arith.addf %314, %317 : vector<1x8x1xf32>
    %319 = math.rsqrt %318 : vector<1x8x1xf32>
    %320 = vector.broadcast %319 : vector<1x8x1xf32> to vector<1x8x32xf32>
    %321 = arith.mulf %316, %320 : vector<1x8x32xf32>
    %322 = vector.shape_cast %301 : vector<1x32xf32> to vector<1x1x32xf32>
    %323 = vector.broadcast %322 : vector<1x1x32xf32> to vector<1x8x32xf32>
    %324 = arith.mulf %321, %323 : vector<1x8x32xf32>
    %325 = vector.shape_cast %303 : vector<1x32xf32> to vector<1x1x32xf32>
    %326 = vector.broadcast %325 : vector<1x1x32xf32> to vector<1x8x32xf32>
    %327 = arith.addf %324, %326 : vector<1x8x32xf32>
    %328 = vector.shape_cast %327 : vector<1x8x32xf32> to vector<8x32xf32>
    %329 = arith.truncf %328 : vector<8x32xf32> to vector<8x32xbf16>
    %c1_148 = arith.constant 1 : index
    %c0_149 = arith.constant 0 : index
    %c0_150 = arith.constant 0 : index
    %330 = vector.load %arg20[%c1_148, %c0_149, %c0_150] : memref<2x32x32xbf16, #tpu.memory_space<vmem>>, vector<1x32x32xbf16>
    %331 = vector.shape_cast %330 : vector<1x32x32xbf16> to vector<32x32xbf16>
    %cst_151 = arith.constant dense<0.000000e+00> : vector<8x32xf32>
    %332 = tpu.matmul %329, %331, %cst_151 {dimension_numbers = #tpu.dot_dimension_numbers<[1], [0], [0], [1], [0, 0, 1, 1], [], []>} : vector<8x32xbf16>, vector<32x32xbf16>, vector<8x32xf32> -> vector<8x32xf32>
    %c1_152 = arith.constant 1 : index
    %c0_153 = arith.constant 0 : index
    %c0_154 = arith.constant 0 : index
    %333 = vector.load %arg21[%c1_152, %c0_153, %c0_154] : memref<2x1x32xf32, #tpu.memory_space<vmem>>, vector<1x1x32xf32>
    %334 = vector.shape_cast %333 : vector<1x1x32xf32> to vector<1x32xf32>
    %335 = vector.broadcast %334 : vector<1x32xf32> to vector<8x32xf32>
    %336 = arith.addf %332, %335 : vector<8x32xf32>
    %cst_155 = arith.constant 5.000000e-01 : f32
    %337 = vector.broadcast %cst_155 : f32 to vector<8x32xf32>
    %338 = arith.mulf %337, %336 : vector<8x32xf32>
    %cst_156 = arith.constant 4.471500e-02 : f32
    %339 = vector.broadcast %cst_156 : f32 to vector<8x32xf32>
    %340 = arith.mulf %339, %336 : vector<8x32xf32>
    %341 = arith.mulf %340, %336 : vector<8x32xf32>
    %342 = arith.mulf %341, %336 : vector<8x32xf32>
    %343 = arith.addf %336, %342 : vector<8x32xf32>
    %cst_157 = arith.constant 0.797884583 : f32
    %344 = vector.broadcast %cst_157 : f32 to vector<8x32xf32>
    %345 = arith.mulf %344, %343 : vector<8x32xf32>
    %346 = math.tanh %345 : vector<8x32xf32>
    %cst_158 = arith.constant 1.000000e+00 : f32
    %347 = vector.broadcast %cst_158 : f32 to vector<8x32xf32>
    %348 = arith.addf %347, %346 : vector<8x32xf32>
    %349 = arith.mulf %338, %348 : vector<8x32xf32>
    %350 = arith.truncf %349 : vector<8x32xf32> to vector<8x32xbf16>
    %c1_159 = arith.constant 1 : index
    %c0_160 = arith.constant 0 : index
    %c0_161 = arith.constant 0 : index
    %351 = vector.load %arg22[%c1_159, %c0_160, %c0_161] : memref<2x32x32xbf16, #tpu.memory_space<vmem>>, vector<1x32x32xbf16>
    %352 = vector.shape_cast %351 : vector<1x32x32xbf16> to vector<32x32xbf16>
    %cst_162 = arith.constant dense<0.000000e+00> : vector<8x32xf32>
    %353 = tpu.matmul %350, %352, %cst_162 {dimension_numbers = #tpu.dot_dimension_numbers<[1], [0], [0], [1], [0, 0, 1, 1], [], []>} : vector<8x32xbf16>, vector<32x32xbf16>, vector<8x32xf32> -> vector<8x32xf32>
    %c1_163 = arith.constant 1 : index
    %c0_164 = arith.constant 0 : index
    %c0_165 = arith.constant 0 : index
    %354 = vector.load %arg23[%c1_163, %c0_164, %c0_165] : memref<2x1x32xf32, #tpu.memory_space<vmem>>, vector<1x1x32xf32>
    %355 = vector.shape_cast %354 : vector<1x1x32xf32> to vector<1x32xf32>
    %356 = vector.broadcast %355 : vector<1x32xf32> to vector<8x32xf32>
    %357 = arith.addf %353, %356 : vector<8x32xf32>
    %358 = vector.shape_cast %357 : vector<8x32xf32> to vector<1x8x32xf32>
    %359 = arith.addf %299, %358 : vector<1x8x32xf32>
    %360 = vector.broadcast %21 : vector<1x8x1xf32> to vector<1x8x32xf32>
    %361 = arith.mulf %359, %360 : vector<1x8x32xf32>
    %c0_166 = arith.constant 0 : index
    %c0_167 = arith.constant 0 : index
    %362 = vector.load %arg24[%c0_166, %c0_167] : memref<1x32xf32, #tpu.memory_space<vmem>>, vector<1x32xf32>
    %c0_168 = arith.constant 0 : index
    %c0_169 = arith.constant 0 : index
    %363 = vector.load %arg25[%c0_168, %c0_169] : memref<1x32xf32, #tpu.memory_space<vmem>>, vector<1x32xf32>
    %cst_170 = arith.constant dense<0.000000e+00> : vector<1x8xf32>
    %364 = vector.multi_reduction <add>, %361, %cst_170 [2] : vector<1x8x32xf32> to vector<1x8xf32>
    %365 = vector.shape_cast %364 : vector<1x8xf32> to vector<1x8x1xf32>
    %cst_171 = arith.constant 3.200000e+01 : f32
    %366 = vector.broadcast %cst_171 : f32 to vector<1x8x1xf32>
    %367 = arith.divf %365, %366 : vector<1x8x1xf32>
    %368 = vector.broadcast %367 : vector<1x8x1xf32> to vector<1x8x32xf32>
    %369 = arith.subf %361, %368 : vector<1x8x32xf32>
    %370 = arith.mulf %369, %369 : vector<1x8x32xf32>
    %cst_172 = arith.constant dense<0.000000e+00> : vector<1x8xf32>
    %371 = vector.multi_reduction <add>, %370, %cst_172 [2] : vector<1x8x32xf32> to vector<1x8xf32>
    %372 = vector.shape_cast %371 : vector<1x8xf32> to vector<1x8x1xf32>
    %cst_173 = arith.constant 3.200000e+01 : f32
    %373 = vector.broadcast %cst_173 : f32 to vector<1x8x1xf32>
    %374 = arith.divf %372, %373 : vector<1x8x1xf32>
    %375 = vector.broadcast %367 : vector<1x8x1xf32> to vector<1x8x32xf32>
    %376 = arith.subf %361, %375 : vector<1x8x32xf32>
    %cst_174 = arith.constant 9.99999993E-9 : f32
    %377 = vector.broadcast %cst_174 : f32 to vector<1x8x1xf32>
    %378 = arith.addf %374, %377 : vector<1x8x1xf32>
    %379 = math.rsqrt %378 : vector<1x8x1xf32>
    %380 = vector.broadcast %379 : vector<1x8x1xf32> to vector<1x8x32xf32>
    %381 = arith.mulf %376, %380 : vector<1x8x32xf32>
    %382 = vector.shape_cast %362 : vector<1x32xf32> to vector<1x1x32xf32>
    %383 = vector.broadcast %382 : vector<1x1x32xf32> to vector<1x8x32xf32>
    %384 = arith.mulf %381, %383 : vector<1x8x32xf32>
    %385 = vector.shape_cast %363 : vector<1x32xf32> to vector<1x1x32xf32>
    %386 = vector.broadcast %385 : vector<1x1x32xf32> to vector<1x8x32xf32>
    %387 = arith.addf %384, %386 : vector<1x8x32xf32>
    %c0_175 = arith.constant 0 : index
    %c0_176 = arith.constant 0 : index
    %c0_177 = arith.constant 0 : index
    %388 = vector.load %arg26[%c0_175, %c0_176, %c0_177] : memref<1x8x32xf32, #tpu.memory_space<vmem>>, vector<1x8x32xf32>
    tpu.vector_store %arg26[%c0_175, %c0_176, %c0_177], %387 {strides = array<i32>} : memref<1x8x32xf32, #tpu.memory_space<vmem>>, vector<1x8x32xf32>,
    %389 = vector.shape_cast %387 : vector<1x8x32xf32> to vector<8x32xf32>
    %390 = arith.mulf %18, %389 : vector<8x32xf32>
    %cst_178 = arith.constant dense<0.000000e+00> : vector<8xf32>
    %391 = vector.multi_reduction <add>, %390, %cst_178 [1] : vector<8x32xf32> to vector<8xf32>
    %392 = vector.shape_cast %391 : vector<8xf32> to vector<8x1xf32>
    %393 = arith.mulf %19, %389 : vector<8x32xf32>
    %cst_179 = arith.constant dense<0.000000e+00> : vector<8xf32>
    %394 = vector.multi_reduction <add>, %393, %cst_179 [1] : vector<8x32xf32> to vector<8xf32>
    %395 = vector.shape_cast %394 : vector<8xf32> to vector<8x1xf32>
    %cst_180 = arith.constant 0.000000e+00 : f32
    %396 = vector.broadcast %cst_180 : f32 to vector<8x1xf32>
    %397 = arith.minimumf %392, %396 : vector<8x1xf32>
    %398 = math.absf %392 : vector<8x1xf32>
    %cst_181 = arith.constant 0.000000e+00 : f32
    %399 = vector.broadcast %cst_181 : f32 to vector<8x1xf32>
    %400 = arith.subf %399, %398 : vector<8x1xf32>
    %401 = math.exp %400 : vector<8x1xf32>
    %cst_182 = arith.constant 1.000000e+00 : f32
    %402 = vector.broadcast %cst_182 : f32 to vector<8x1xf32>
    %403 = arith.addf %402, %401 : vector<8x1xf32>
    %404 = math.log %403 : vector<8x1xf32>
    %405 = arith.subf %397, %404 : vector<8x1xf32>
    %cst_183 = arith.constant 0.000000e+00 : f32
    %406 = vector.broadcast %cst_183 : f32 to vector<8x1xf32>
    %407 = arith.subf %406, %395 : vector<8x1xf32>
    %cst_184 = arith.constant 0.000000e+00 : f32
    %408 = vector.broadcast %cst_184 : f32 to vector<8x1xf32>
    %409 = arith.minimumf %407, %408 : vector<8x1xf32>
    %410 = math.absf %407 : vector<8x1xf32>
    %cst_185 = arith.constant 0.000000e+00 : f32
    %411 = vector.broadcast %cst_185 : f32 to vector<8x1xf32>
    %412 = arith.subf %411, %410 : vector<8x1xf32>
    %413 = math.exp %412 : vector<8x1xf32>
    %cst_186 = arith.constant 1.000000e+00 : f32
    %414 = vector.broadcast %cst_186 : f32 to vector<8x1xf32>
    %415 = arith.addf %414, %413 : vector<8x1xf32>
    %416 = math.log %415 : vector<8x1xf32>
    %417 = arith.subf %409, %416 : vector<8x1xf32>
    %418 = arith.addf %405, %417 : vector<8x1xf32>
    %419 = arith.mulf %418, %24 : vector<8x1xf32>
    %420 = arith.subf %392, %395 : vector<8x1xf32>
    %cst_187 = arith.constant 0.000000e+00 : f32
    %421 = vector.broadcast %cst_187 : f32 to vector<8x1xf32>
    %422 = arith.cmpf ogt, %420, %421 : vector<8x1xf32>
    %cst_188 = arith.constant 0.000000e+00 : f32
    %423 = vector.broadcast %cst_188 : f32 to vector<8x1xf32>
    %424 = arith.cmpf olt, %420, %423 : vector<8x1xf32>
    %cst_189 = arith.constant -1.000000e+00 : f32
    %cst_190 = arith.constant 0.000000e+00 : f32
    %425 = vector.broadcast %cst_189 : f32 to vector<8x1xf32>
    %426 = vector.broadcast %cst_190 : f32 to vector<8x1xf32>
    %427 = arith.select %424, %425, %426 : vector<8x1xi1>, vector<8x1xf32>
    %cst_191 = arith.constant 1.000000e+00 : f32
    %428 = vector.broadcast %cst_191 : f32 to vector<8x1xf32>
    %429 = arith.select %422, %428, %427 : vector<8x1xi1>, vector<8x1xf32>
    %cst_192 = arith.constant 1.000000e+00 : f32
    %430 = vector.broadcast %cst_192 : f32 to vector<8x1xf32>
    %431 = arith.addf %429, %430 : vector<8x1xf32>
    %cst_193 = arith.constant 5.000000e-01 : f32
    %432 = vector.broadcast %cst_193 : f32 to vector<8x1xf32>
    %433 = arith.mulf %431, %432 : vector<8x1xf32>
    %434 = arith.mulf %433, %24 : vector<8x1xf32>
    %cst_194 = arith.constant dense<0.000000e+00> : vector<1xf32>
    %435 = vector.multi_reduction <add>, %419, %cst_194 [0] : vector<8x1xf32> to vector<1xf32>
    %436 = vector.shape_cast %435 : vector<1xf32> to vector<1x1xf32>
    %437 = vector.shape_cast %436 : vector<1x1xf32> to vector<1x1x1xf32>
    %c0_195 = arith.constant 0 : index
    %c0_196 = arith.constant 0 : index
    %c0_197 = arith.constant 0 : index
    %438 = vector.load %arg27[%c0_195, %c0_196, %c0_197] : memref<1x1x1xf32, #tpu.memory_space<vmem>>, vector<1x1x1xf32>
    tpu.vector_store %arg27[%c0_195, %c0_196, %c0_197], %437 {strides = array<i32>} : memref<1x1x1xf32, #tpu.memory_space<vmem>>, vector<1x1x1xf32>,
    %cst_198 = arith.constant dense<0.000000e+00> : vector<1xf32>
    %439 = vector.multi_reduction <add>, %434, %cst_198 [0] : vector<8x1xf32> to vector<1xf32>
    %440 = vector.shape_cast %439 : vector<1xf32> to vector<1x1xf32>
    %441 = vector.shape_cast %440 : vector<1x1xf32> to vector<1x1x1xf32>
    %c0_199 = arith.constant 0 : index
    %c0_200 = arith.constant 0 : index
    %c0_201 = arith.constant 0 : index
    %442 = vector.load %arg28[%c0_199, %c0_200, %c0_201] : memref<1x1x1xf32, #tpu.memory_space<vmem>>, vector<1x1x1xf32>
    tpu.vector_store %arg28[%c0_199, %c0_200, %c0_201], %441 {strides = array<i32>} : memref<1x1x1xf32, #tpu.memory_space<vmem>>, vector<1x1x1xf32>,
    %cst_202 = arith.constant dense<0.000000e+00> : vector<1xf32>
    %443 = vector.multi_reduction <add>, %24, %cst_202 [0] : vector<8x1xf32> to vector<1xf32>
    %444 = vector.shape_cast %443 : vector<1xf32> to vector<1x1xf32>
    %445 = vector.shape_cast %444 : vector<1x1xf32> to vector<1x1x1xf32>
    %c0_203 = arith.constant 0 : index
    %c0_204 = arith.constant 0 : index
    %c0_205 = arith.constant 0 : index
    %446 = vector.load %arg29[%c0_203, %c0_204, %c0_205] : memref<1x1x1xf32, #tpu.memory_space<vmem>>, vector<1x1x1xf32>
    tpu.vector_store %arg29[%c0_203, %c0_204, %c0_205], %445 {strides = array<i32>} : memref<1x1x1xf32, #tpu.memory_space<vmem>>, vector<1x1x1xf32>,
    return
  }
  func.func @transform_0(%arg0: i32) -> (i32, i32, i32, i32) {
    %c0_i32 = arith.constant 0 : i32
    %c0_i32_0 = arith.constant 0 : i32
    %c0_i32_1 = arith.constant 0 : i32
    %c0_i32_2 = arith.constant 0 : i32
    return %c0_i32, %arg0, %c0_i32_0, %c0_i32_1 : i32, i32, i32, i32
  }
  func.func @transform_1(%arg0: i32) -> (i32, i32, i32, i32) {
    %c0_i32 = arith.constant 0 : i32
    %c0_i32_0 = arith.constant 0 : i32
    %c0_i32_1 = arith.constant 0 : i32
    %c0_i32_2 = arith.constant 0 : i32
    return %c0_i32, %arg0, %c0_i32_0, %c0_i32_1 : i32, i32, i32, i32
  }
  func.func @transform_2(%arg0: i32) -> (i32, i32, i32) {
    %c0_i32 = arith.constant 0 : i32
    %c0_i32_0 = arith.constant 0 : i32
    %c0_i32_1 = arith.constant 0 : i32
    return %arg0, %c0_i32, %c0_i32_0 : i32, i32, i32
  }
  func.func @transform_3(%arg0: i32) -> (i32, i32, i32) {
    %c0_i32 = arith.constant 0 : i32
    %c0_i32_0 = arith.constant 0 : i32
    %c0_i32_1 = arith.constant 0 : i32
    return %arg0, %c0_i32, %c0_i32_0 : i32, i32, i32
  }
  func.func @transform_4(%arg0: i32) -> (i32, i32) {
    %c0_i32 = arith.constant 0 : i32
    %c0_i32_0 = arith.constant 0 : i32
    %c0_i32_1 = arith.constant 0 : i32
    return %c0_i32, %c0_i32_0 : i32, i32
  }
  func.func @transform_5(%arg0: i32) -> (i32, i32) {
    %c0_i32 = arith.constant 0 : i32
    %c0_i32_0 = arith.constant 0 : i32
    %c0_i32_1 = arith.constant 0 : i32
    return %c0_i32, %c0_i32_0 : i32, i32
  }
  func.func @transform_6(%arg0: i32) -> (i32, i32) {
    %c0_i32 = arith.constant 0 : i32
    %c0_i32_0 = arith.constant 0 : i32
    %c0_i32_1 = arith.constant 0 : i32
    return %c0_i32, %c0_i32_0 : i32, i32
  }
  func.func @transform_7(%arg0: i32) -> (i32, i32) {
    %c0_i32 = arith.constant 0 : i32
    %c0_i32_0 = arith.constant 0 : i32
    %c0_i32_1 = arith.constant 0 : i32
    return %c0_i32, %c0_i32_0 : i32, i32
  }
  func.func @transform_8(%arg0: i32) -> (i32, i32) {
    %c0_i32 = arith.constant 0 : i32
    %c0_i32_0 = arith.constant 0 : i32
    %c0_i32_1 = arith.constant 0 : i32
    return %c0_i32, %c0_i32_0 : i32, i32
  }
  func.func @transform_9(%arg0: i32) -> (i32, i32) {
    %c0_i32 = arith.constant 0 : i32
    %c0_i32_0 = arith.constant 0 : i32
    %c0_i32_1 = arith.constant 0 : i32
    return %c0_i32, %c0_i32_0 : i32, i32
  }
  func.func @transform_10(%arg0: i32) -> (i32, i32) {
    %c0_i32 = arith.constant 0 : i32
    %c0_i32_0 = arith.constant 0 : i32
    %c0_i32_1 = arith.constant 0 : i32
    return %c0_i32, %c0_i32_0 : i32, i32
  }
  func.func @transform_11(%arg0: i32) -> (i32, i32, i32) {
    %c0_i32 = arith.constant 0 : i32
    %c0_i32_0 = arith.constant 0 : i32
    %c0_i32_1 = arith.constant 0 : i32
    %c0_i32_2 = arith.constant 0 : i32
    return %c0_i32, %c0_i32_0, %c0_i32_1 : i32, i32, i32
  }
  func.func @transform_12(%arg0: i32) -> (i32, i32, i32) {
    %c0_i32 = arith.constant 0 : i32
    %c0_i32_0 = arith.constant 0 : i32
    %c0_i32_1 = arith.constant 0 : i32
    %c0_i32_2 = arith.constant 0 : i32
    return %c0_i32, %c0_i32_0, %c0_i32_1 : i32, i32, i32
  }
  func.func @transform_13(%arg0: i32) -> (i32, i32, i32) {
    %c0_i32 = arith.constant 0 : i32
    %c0_i32_0 = arith.constant 0 : i32
    %c0_i32_1 = arith.constant 0 : i32
    %c0_i32_2 = arith.constant 0 : i32
    return %c0_i32, %c0_i32_0, %c0_i32_1 : i32, i32, i32
  }
  func.func @transform_14(%arg0: i32) -> (i32, i32, i32) {
    %c0_i32 = arith.constant 0 : i32
    %c0_i32_0 = arith.constant 0 : i32
    %c0_i32_1 = arith.constant 0 : i32
    %c0_i32_2 = arith.constant 0 : i32
    return %c0_i32, %c0_i32_0, %c0_i32_1 : i32, i32, i32
  }
  func.func @transform_15(%arg0: i32) -> (i32, i32, i32, i32) {
    %c0_i32 = arith.constant 0 : i32
    %c0_i32_0 = arith.constant 0 : i32
    %c0_i32_1 = arith.constant 0 : i32
    %c0_i32_2 = arith.constant 0 : i32
    %c0_i32_3 = arith.constant 0 : i32
    return %c0_i32, %c0_i32_0, %c0_i32_1, %c0_i32_2 : i32, i32, i32, i32
  }
  func.func @transform_16(%arg0: i32) -> (i32, i32, i32) {
    %c0_i32 = arith.constant 0 : i32
    %c0_i32_0 = arith.constant 0 : i32
    %c0_i32_1 = arith.constant 0 : i32
    %c0_i32_2 = arith.constant 0 : i32
    return %c0_i32, %c0_i32_0, %c0_i32_1 : i32, i32, i32
  }
  func.func @transform_17(%arg0: i32) -> (i32, i32, i32) {
    %c0_i32 = arith.constant 0 : i32
    %c0_i32_0 = arith.constant 0 : i32
    %c0_i32_1 = arith.constant 0 : i32
    %c0_i32_2 = arith.constant 0 : i32
    return %c0_i32, %c0_i32_0, %c0_i32_1 : i32, i32, i32
  }
  func.func @transform_18(%arg0: i32) -> (i32, i32, i32) {
    %c0_i32 = arith.constant 0 : i32
    %c0_i32_0 = arith.constant 0 : i32
    %c0_i32_1 = arith.constant 0 : i32
    %c0_i32_2 = arith.constant 0 : i32
    return %c0_i32, %c0_i32_0, %c0_i32_1 : i32, i32, i32
  }
  func.func @transform_19(%arg0: i32) -> (i32, i32, i32) {
    %c0_i32 = arith.constant 0 : i32
    %c0_i32_0 = arith.constant 0 : i32
    %c0_i32_1 = arith.constant 0 : i32
    %c0_i32_2 = arith.constant 0 : i32
    return %c0_i32, %c0_i32_0, %c0_i32_1 : i32, i32, i32
  }
  func.func @transform_20(%arg0: i32) -> (i32, i32, i32) {
    %c0_i32 = arith.constant 0 : i32
    %c0_i32_0 = arith.constant 0 : i32
    %c0_i32_1 = arith.constant 0 : i32
    %c0_i32_2 = arith.constant 0 : i32
    return %c0_i32, %c0_i32_0, %c0_i32_1 : i32, i32, i32
  }
  func.func @transform_21(%arg0: i32) -> (i32, i32, i32) {
    %c0_i32 = arith.constant 0 : i32
    %c0_i32_0 = arith.constant 0 : i32
    %c0_i32_1 = arith.constant 0 : i32
    %c0_i32_2 = arith.constant 0 : i32
    return %c0_i32, %c0_i32_0, %c0_i32_1 : i32, i32, i32
  }
  func.func @transform_22(%arg0: i32) -> (i32, i32, i32) {
    %c0_i32 = arith.constant 0 : i32
    %c0_i32_0 = arith.constant 0 : i32
    %c0_i32_1 = arith.constant 0 : i32
    %c0_i32_2 = arith.constant 0 : i32
    return %c0_i32, %c0_i32_0, %c0_i32_1 : i32, i32, i32
  }
  func.func @transform_23(%arg0: i32) -> (i32, i32) {
    %c0_i32 = arith.constant 0 : i32
    %c0_i32_0 = arith.constant 0 : i32
    %c0_i32_1 = arith.constant 0 : i32
    return %c0_i32, %c0_i32_0 : i32, i32
  }
  func.func @transform_24(%arg0: i32) -> (i32, i32) {
    %c0_i32 = arith.constant 0 : i32
    %c0_i32_0 = arith.constant 0 : i32
    %c0_i32_1 = arith.constant 0 : i32
    return %c0_i32, %c0_i32_0 : i32, i32
  }
  func.func @transform_25(%arg0: i32) -> (i32, i32, i32) {
    %c0_i32 = arith.constant 0 : i32
    %c0_i32_0 = arith.constant 0 : i32
    %c0_i32_1 = arith.constant 0 : i32
    return %arg0, %c0_i32, %c0_i32_0 : i32, i32, i32
  }
  func.func @transform_26(%arg0: i32) -> (i32, i32, i32) {
    %c0_i32 = arith.constant 0 : i32
    %c0_i32_0 = arith.constant 0 : i32
    %c0_i32_1 = arith.constant 0 : i32
    return %arg0, %c0_i32, %c0_i32_0 : i32, i32, i32
  }
  func.func @transform_27(%arg0: i32) -> (i32, i32, i32) {
    %c0_i32 = arith.constant 0 : i32
    %c0_i32_0 = arith.constant 0 : i32
    %c0_i32_1 = arith.constant 0 : i32
    return %arg0, %c0_i32, %c0_i32_0 : i32, i32, i32
  }
  func.func @transform_28(%arg0: i32) -> (i32, i32, i32) {
    %c0_i32 = arith.constant 0 : i32
    %c0_i32_0 = arith.constant 0 : i32
    %c0_i32_1 = arith.constant 0 : i32
    return %arg0, %c0_i32, %c0_i32_0 : i32, i32, i32
  }
}

</mosaic_0001>

<llo_original>
// kernel: tpu_custom_call.1
$region0: #{tpu_custom_call.1}
  #allocation0 [shape = 'u32[]', space=smem, size = 0x4, offset = 0x4, fixed_abs, tag = 'smem constant byte address 0x4 - core index']
  #allocation1 [shape = 'u32[144,128]{1,0:T(1,128)}', space=vmem, size = 0x12000, scoped, tag = 'internal scratch']
  %s0 = inlined_call_operand.vmem [shape: bf16[3,4,8,32], index: 0, kind: input, shape index: {}]
  %s1 = inlined_call_operand.vmem [shape: bf16[3,4,8,4], index: 1, kind: input, shape index: {}]
  %s2 = inlined_call_operand.hbm [shape: f32[4,1,8], index: 2, kind: input, shape index: {}]
  %s3 = inlined_call_operand.hbm [shape: f32[4,1,8], index: 3, kind: input, shape index: {}]
  %s4 = inlined_call_operand.hbm [shape: f32[8,8], index: 4, kind: input, shape index: {}]
  %s5 = inlined_call_operand.hbm [shape: f32[8,32], index: 5, kind: input, shape index: {}]
  %s6 = inlined_call_operand.vmem [shape: bf16[4,32], index: 6, kind: input, shape index: {}]
  %s7 = inlined_call_operand.hbm [shape: f32[1,32], index: 7, kind: input, shape index: {}]
  %s8 = inlined_call_operand.hbm [shape: bf16[32,32], index: 8, kind: input, shape index: {}]
  %s9 = inlined_call_operand.hbm [shape: bf16[32,32], index: 9, kind: input, shape index: {}]
  %s10 = inlined_call_operand.hbm [shape: f32[1,32], index: 10, kind: input, shape index: {}]
  %s11 = inlined_call_operand.vmem [shape: f32[2,1,32], index: 11, kind: input, shape index: {}]
  %s12 = inlined_call_operand.vmem [shape: f32[2,1,32], index: 12, kind: input, shape index: {}]
  %s13 = inlined_call_operand.vmem [shape: bf16[2,32,96], index: 13, kind: input, shape index: {}]
  %s14 = inlined_call_operand.vmem [shape: f32[2,1,96], index: 14, kind: input, shape index: {}]
  %s15 = inlined_call_operand.hbm [shape: bf16[2,2,16,32], index: 15, kind: input, shape index: {}]
  %s16 = inlined_call_operand.vmem [shape: f32[2,1,32], index: 16, kind: input, shape index: {}]
  %s17 = inlined_call_operand.vmem [shape: f32[2,1,32], index: 17, kind: input, shape index: {}]
  %s18 = inlined_call_operand.vmem [shape: f32[2,1,32], index: 18, kind: input, shape index: {}]
  %s19 = inlined_call_operand.hbm [shape: bf16[2,32,32], index: 19, kind: input, shape index: {}]
  %s20 = inlined_call_operand.vmem [shape: f32[2,1,32], index: 20, kind: input, shape index: {}]
  %s21 = inlined_call_operand.hbm [shape: bf16[2,32,32], index: 21, kind: input, shape index: {}]
  %s22 = inlined_call_operand.vmem [shape: f32[2,1,32], index: 22, kind: input, shape index: {}]
  %s23 = inlined_call_operand.vmem [shape: f32[1,32], index: 23, kind: input, shape index: {}]
  %s24 = inlined_call_operand.vmem [shape: f32[1,32], index: 24, kind: input, shape index: {}]
  %s25 = inlined_call_operand.hbm [shape: f32[4,8,32], index: 25, kind: output, shape index: {0}]
  %s26 = inlined_call_operand.vmem [shape: f32[4,1,1], index: 26, kind: output, shape index: {1}]
  %s27 = inlined_call_operand.vmem [shape: f32[4,1,1], index: 27, kind: output, shape index: {2}]
  %s28 = inlined_call_operand.vmem [shape: f32[4,1,1], index: 28, kind: output, shape index: {3}]
  %29 = xla_tuple %s25, %s26, %s27, %s28
  %s30 = sld [smem:[#allocation0]]
  $region283: #{tpu_custom_call.1} parent=0
    _
  %s32 = ssub.s32 1, %s30
  %s33 = scalar_select 0, %s32, %s30
  $region1: #{tpu_custom_call.1} parent=0
    #allocation2 [shape = 'u8[12288]{0}', space=vmem, size = 0x3000, scoped, tag = 'input window, operand 0']
    #allocation3 [shape = 'u8[12288]{0}', space=vmem, size = 0x3000, scoped, tag = 'input window, operand 1']
    #allocation4 [shape = 'u8[1024]{0}', space=vmem, size = 0x400, scoped, tag = 'input window, operand 2']
    #allocation5 [shape = 's32[2]{0}', space=sflag, size = 0x8, scoped, tag = 'scoped memory for tpu_custom_call.1']
    #allocation6 [shape = 's32[2]{0}', space=sflag, size = 0x8, scoped, tag = 'scoped memory for tpu_custom_call.1']
    #allocation7 [shape = 'u8[1024]{0}', space=vmem, size = 0x400, scoped, tag = 'input window, operand 3']
    #allocation8 [shape = 's32[2]{0}', space=sflag, size = 0x8, scoped, tag = 'scoped memory for tpu_custom_call.1']
    #allocation9 [shape = 'u8[4096]{0}', space=vmem, size = 0x1000, scoped, tag = 'input window, operand 4, single buffered']
    #allocation10 [shape = 'u8[4096]{0}', space=vmem, size = 0x1000, scoped, tag = 'input window, operand 5, single buffered']
    #allocation11 [shape = 's32[1]{0}', space=sflag, size = 0x4, scoped, tag = 'scoped memory for tpu_custom_call.1']
    #allocation12 [shape = 'u8[512]{0}', space=vmem, size = 0x400, scoped, tag = 'input window, operand 7, single buffered']
    #allocation13 [shape = 'u8[8192]{0}', space=vmem, size = 0x2000, scoped, tag = 'input window, operand 8, single buffered']
    #allocation14 [shape = 's32[1]{0}', space=sflag, size = 0x4, scoped, tag = 'scoped memory for tpu_custom_call.1']
    #allocation15 [shape = 'u8[8192]{0}', space=vmem, size = 0x2000, scoped, tag = 'input window, operand 9, single buffered']
    #allocation16 [shape = 'u8[512]{0}', space=vmem, size = 0x400, scoped, tag = 'input window, operand 10, single buffered']
    #allocation17 [shape = 's32[1]{0}', space=sflag, size = 0x4, scoped, tag = 'scoped memory for tpu_custom_call.1']
    #allocation18 [shape = 'u8[16384]{0}', space=vmem, size = 0x4000, scoped, tag = 'input window, operand 15, single buffered']
    #allocation19 [shape = 'u8[16384]{0}', space=vmem, size = 0x4000, scoped, tag = 'input window, operand 19, single buffered']
    #allocation20 [shape = 's32[1]{0}', space=sflag, size = 0x4, scoped, tag = 'scoped memory for tpu_custom_call.1']
    #allocation21 [shape = 'u8[16384]{0}', space=vmem, size = 0x4000, scoped, tag = 'input window, operand 21, single buffered']
    #allocation22 [shape = 'u8[8192]{0}', space=vmem, size = 0x2000, scoped, tag = 'output window, operand 0']
    %34 = vsyncpa [#allocation5], 0
    %s35 = scalar_lea.sflag [#allocation5], 1
    %36 = vsyncpa %s35, 0
    %37 = vsyncpa [#allocation8], 0
    %s38 = scalar_lea.sflag [#allocation8], 1
    %39 = vsyncpa %s38, 0
    %40 = vsyncpa [#allocation11], 0
    %41 = vsyncpa [#allocation14], 0
    %42 = vsyncpa [#allocation17], 0
    %43 = vsyncpa [#allocation20], 0
    %44 = vsyncpa [#allocation6], 0
    %s45 = scalar_lea.sflag [#allocation6], 1
    %46 = vsyncpa %s45, 0
    loop: start=0, step=1, limit=6
    $region2: #{tpu_custom_call.1} parent=1 // loop_pre_header
      _
    $region3: #{tpu_custom_call.1} parent=1 // loop_header
      %s48 = sphi 0, %s52
      %p49 = scmp.ge.s32.totalorder %s48, 6
      %s58 = sphi 0, %s60
      %s61 = sphi 0, %s58
      %s62 = sphi 0, %s61
      %s78 = sphi 0, %s62
      %s84 = sphi 0, %s86
      %s87 = sphi 0, %s84
      %s88 = sphi 0, %s87
      %s104 = sphi 0, %s88
      %s110 = sphi 0, %s112
      %s113 = sphi 0, %s110
      %s114 = sphi 0, %s113
      %s130 = sphi 0, %s114
      %s136 = sphi 0, %s138
      %s139 = sphi 0, %s136
      %s140 = sphi 0, %s139
      %s156 = sphi 0, %s140
      %s160 = sphi 0, %s160
      %s162 = sphi 0, %s160
      %s163 = sphi 0, %s162
      %s177 = sphi 0, %s163
      %s181 = sphi 0, %s181
      %s183 = sphi 0, %s181
      %s184 = sphi 0, %s183
      %s198 = sphi 0, %s184
      %s202 = sphi 0, %s202
      %s204 = sphi 0, %s202
      %s205 = sphi 0, %s204
      %s219 = sphi 0, %s205
      %s223 = sphi 0, %s223
      %s225 = sphi 0, %s223
      %s226 = sphi 0, %s225
      %s240 = sphi 0, %s226
      %s244 = sphi 0, %s244
      %s246 = sphi 0, %s244
      %s247 = sphi 0, %s246
      %s261 = sphi 0, %s247
      %s265 = sphi 0, %s265
      %s267 = sphi 0, %s265
      %s268 = sphi 0, %s267
      %s282 = sphi 0, %s268
      %s286 = sphi 0, %s286
      %s288 = sphi 0, %s286
      %s289 = sphi 0, %s288
      %s303 = sphi 0, %s289
      %s307 = sphi 0, %s307
      %s309 = sphi 0, %s307
      %s310 = sphi 0, %s309
      %s324 = sphi 0, %s310
      %s328 = sphi 0, %s328
      %s330 = sphi 0, %s328
      %s331 = sphi 0, %s330
      %s345 = sphi 0, %s331
      %s349 = sphi 0, %s349
      %s351 = sphi 0, %s349
      %s352 = sphi 0, %s351
      %s366 = sphi 0, %s352
      %s370 = sphi 0, %s370
      %s372 = sphi 0, %s370
      %s373 = sphi 0, %s372
      %s387 = sphi 0, %s373
      %s391 = sphi 0, %s391
      %s393 = sphi 0, %s391
      %s394 = sphi 0, %s393
      %s408 = sphi 0, %s394
      %s412 = sphi 0, %s412
      %s414 = sphi 0, %s412
      %s415 = sphi 0, %s414
      %s429 = sphi 0, %s415
      %s433 = sphi 0, %s433
      %s435 = sphi 0, %s433
      %s436 = sphi 0, %s435
      %s450 = sphi 0, %s436
      %s454 = sphi 0, %s454
      %s456 = sphi 0, %s454
      %s457 = sphi 0, %s456
      %s471 = sphi 0, %s457
      %s475 = sphi 0, %s475
      %s477 = sphi 0, %s475
      %s478 = sphi 0, %s477
      %s492 = sphi 0, %s478
      %s496 = sphi 0, %s496
      %s498 = sphi 0, %s496
      %s499 = sphi 0, %s498
      %s513 = sphi 0, %s499
      %s517 = sphi 0, %s517
      %s519 = sphi 0, %s517
      %s520 = sphi 0, %s519
      %s534 = sphi 0, %s520
      %s538 = sphi 0, %s538
      %s540 = sphi 0, %s538
      %s541 = sphi 0, %s540
      %s555 = sphi 0, %s541
      %s559 = sphi 0, %s559
      %s561 = sphi 0, %s559
      %s562 = sphi 0, %s561
      %s576 = sphi 0, %s562
      %s580 = sphi 0, %s580
      %s582 = sphi 0, %s580
      %s583 = sphi 0, %s582
      %s597 = sphi 0, %s583
      %s603 = sphi 0, %s605
      %s606 = sphi 0, %s603
      %s607 = sphi 0, %s606
      %s623 = sphi 0, %s607
      %s629 = sphi 0, %s631
      %s632 = sphi 0, %s629
      %s633 = sphi 0, %s632
      %s649 = sphi 0, %s633
      %s655 = sphi 0, %s657
      %s658 = sphi 0, %s655
      %s659 = sphi 0, %s658
      %s675 = sphi 0, %s659
      %s681 = sphi 0, %s683
      %s684 = sphi 0, %s681
      %s685 = sphi 0, %s684
      %s701 = sphi 0, %s685
    $region4: #{tpu_custom_call.1} parent=1 // loop_header_branch
      %51 = sbr.rel (%p49) target = $region8
    $region5: #{tpu_custom_call.1} parent=1 // loop_body
      %s53 = ssub.s32 %s48, 1
      %s54 = ssub.s32 %s48, 2
      %s55 = sadd.s32 %s48, 1
      %s56 = ssub.s32 %s48, %s55
      %p57 = scmp.eq.s32.totalorder %s56, 0
      %s59 = sadd.s32 %s58, 1
      %s60 = scalar_select %p57, %s58, %s59
      %p63 = pneg %p57
      %p64 = scmp.eq.s32.totalorder %s48, 3
      %p65 = por %p63, %p64
      %p66 = scmp.ne.s32.totalorder %s58, %s61
      %p67 = scmp.eq.s32.totalorder %s48, 0
      %p68 = por %p66, %p67
      %p69 = scmp.ne.s32.totalorder %s58, %s61
      %p70 = scmp.eq.s32.totalorder %s53, 3
      %p71 = por %p69, %p70
      %p72 = scmp.ne.s32.totalorder %s61, %s62
      %p73 = scmp.eq.s32.totalorder %s53, 0
      %p74 = por %p72, %p73
      %p75 = scmp.ne.s32.totalorder %s61, %s62
      %p76 = scmp.eq.s32.totalorder %s54, 3
      %p77 = por %p75, %p76
      %p79 = scmp.ne.s32.totalorder %s62, %s78
      %p80 = scmp.eq.s32.totalorder %s54, 0
      %p81 = por %p79, %p80
      %s82 = ssub.s32 %s48, %s55
      %p83 = scmp.eq.s32.totalorder %s82, 0
      %s85 = sadd.s32 %s84, 1
      %s86 = scalar_select %p83, %s84, %s85
      %p89 = pneg %p83
      %p90 = scmp.eq.s32.totalorder %s48, 3
      %p91 = por %p89, %p90
      %p92 = scmp.ne.s32.totalorder %s84, %s87
      %p93 = scmp.eq.s32.totalorder %s48, 0
      %p94 = por %p92, %p93
      %p95 = scmp.ne.s32.totalorder %s84, %s87
      %p96 = scmp.eq.s32.totalorder %s53, 3
      %p97 = por %p95, %p96
      %p98 = scmp.ne.s32.totalorder %s87, %s88
      %p99 = scmp.eq.s32.totalorder %s53, 0
      %p100 = por %p98, %p99
      %p101 = scmp.ne.s32.totalorder %s87, %s88
      %p102 = scmp.eq.s32.totalorder %s54, 3
      %p103 = por %p101, %p102
      %p105 = scmp.ne.s32.totalorder %s88, %s104
      %p106 = scmp.eq.s32.totalorder %s54, 0
      %p107 = por %p105, %p106
      %s108 = ssub.s32 %s48, %s55
      %p109 = scmp.eq.s32.totalorder %s108, 0
      %s111 = sadd.s32 %s110, 1
      %s112 = scalar_select %p109, %s110, %s111
      %p115 = pneg %p109
      %p116 = scmp.eq.s32.totalorder %s48, 3
      %p117 = por %p115, %p116
      %p118 = scmp.ne.s32.totalorder %s110, %s113
      %p119 = scmp.eq.s32.totalorder %s48, 0
      %p120 = por %p118, %p119
      %p121 = scmp.ne.s32.totalorder %s110, %s113
      %p122 = scmp.eq.s32.totalorder %s53, 3
      %p123 = por %p121, %p122
      %p124 = scmp.ne.s32.totalorder %s113, %s114
      %p125 = scmp.eq.s32.totalorder %s53, 0
      %p126 = por %p124, %p125
      %p127 = scmp.ne.s32.totalorder %s113, %s114
      %p128 = scmp.eq.s32.totalorder %s54, 3
      %p129 = por %p127, %p128
      %p131 = scmp.ne.s32.totalorder %s114, %s130
      %p132 = scmp.eq.s32.totalorder %s54, 0
      %p133 = por %p131, %p132
      %s134 = ssub.s32 %s48, %s55
      %p135 = scmp.eq.s32.totalorder %s134, 0
      %s137 = sadd.s32 %s136, 1
      %s138 = scalar_select %p135, %s136, %s137
      %p141 = pneg %p135
      %p142 = scmp.eq.s32.totalorder %s48, 3
      %p143 = por %p141, %p142
      %p144 = scmp.ne.s32.totalorder %s136, %s139
      %p145 = scmp.eq.s32.totalorder %s48, 0
      %p146 = por %p144, %p145
      %p147 = scmp.ne.s32.totalorder %s136, %s139
      %p148 = scmp.eq.s32.totalorder %s53, 3
      %p149 = por %p147, %p148
      %p150 = scmp.ne.s32.totalorder %s139, %s140
      %p151 = scmp.eq.s32.totalorder %s53, 0
      %p152 = por %p150, %p151
      %p153 = scmp.ne.s32.totalorder %s139, %s140
      %p154 = scmp.eq.s32.totalorder %s54, 3
      %p155 = por %p153, %p154
      %p157 = scmp.ne.s32.totalorder %s140, %s156
      %p158 = scmp.eq.s32.totalorder %s54, 0
      %p159 = por %p157, %p158
      %s161 = sadd.s32 %s160, 1
      %p164 = scmp.eq.s32.totalorder %s48, 3
      %p165 = scmp.ne.s32.totalorder %s160, %s162
      %p166 = scmp.eq.s32.totalorder %s48, 0
      %p167 = por %p165, %p166
      %p168 = scmp.ne.s32.totalorder %s160, %s162
      %p169 = scmp.eq.s32.totalorder %s53, 3
      %p170 = por %p168, %p169
      %p171 = scmp.ne.s32.totalorder %s162, %s163
      %p172 = scmp.eq.s32.totalorder %s53, 0
      %p173 = por %p171, %p172
      %p174 = scmp.ne.s32.totalorder %s162, %s163
      %p175 = scmp.eq.s32.totalorder %s54, 3
      %p176 = por %p174, %p175
      %p178 = scmp.ne.s32.totalorder %s163, %s177
      %p179 = scmp.eq.s32.totalorder %s54, 0
      %p180 = por %p178, %p179
      %s182 = sadd.s32 %s181, 1
      %p185 = scmp.eq.s32.totalorder %s48, 3
      %p186 = scmp.ne.s32.totalorder %s181, %s183
      %p187 = scmp.eq.s32.totalorder %s48, 0
      %p188 = por %p186, %p187
      %p189 = scmp.ne.s32.totalorder %s181, %s183
      %p190 = scmp.eq.s32.totalorder %s53, 3
      %p191 = por %p189, %p190
      %p192 = scmp.ne.s32.totalorder %s183, %s184
      %p193 = scmp.eq.s32.totalorder %s53, 0
      %p194 = por %p192, %p193
      %p195 = scmp.ne.s32.totalorder %s183, %s184
      %p196 = scmp.eq.s32.totalorder %s54, 3
      %p197 = por %p195, %p196
      %p199 = scmp.ne.s32.totalorder %s184, %s198
      %p200 = scmp.eq.s32.totalorder %s54, 0
      %p201 = por %p199, %p200
      %s203 = sadd.s32 %s202, 1
      %p206 = scmp.eq.s32.totalorder %s48, 3
      %p207 = scmp.ne.s32.totalorder %s202, %s204
      %p208 = scmp.eq.s32.totalorder %s48, 0
      %p209 = por %p207, %p208
      %p210 = scmp.ne.s32.totalorder %s202, %s204
      %p211 = scmp.eq.s32.totalorder %s53, 3
      %p212 = por %p210, %p211
      %p213 = scmp.ne.s32.totalorder %s204, %s205
      %p214 = scmp.eq.s32.totalorder %s53, 0
      %p215 = por %p213, %p214
      %p216 = scmp.ne.s32.totalorder %s204, %s205
      %p217 = scmp.eq.s32.totalorder %s54, 3
      %p218 = por %p216, %p217
      %p220 = scmp.ne.s32.totalorder %s205, %s219
      %p221 = scmp.eq.s32.totalorder %s54, 0
      %p222 = por %p220, %p221
      %s224 = sadd.s32 %s223, 1
      %p227 = scmp.eq.s32.totalorder %s48, 3
      %p228 = scmp.ne.s32.totalorder %s223, %s225
      %p229 = scmp.eq.s32.totalorder %s48, 0
      %p230 = por %p228, %p229
      %p231 = scmp.ne.s32.totalorder %s223, %s225
      %p232 = scmp.eq.s32.totalorder %s53, 3
      %p233 = por %p231, %p232
      %p234 = scmp.ne.s32.totalorder %s225, %s226
      %p235 = scmp.eq.s32.totalorder %s53, 0
      %p236 = por %p234, %p235
      %p237 = scmp.ne.s32.totalorder %s225, %s226
      %p238 = scmp.eq.s32.totalorder %s54, 3
      %p239 = por %p237, %p238
      %p241 = scmp.ne.s32.totalorder %s226, %s240
      %p242 = scmp.eq.s32.totalorder %s54, 0
      %p243 = por %p241, %p242
      %s245 = sadd.s32 %s244, 1
      %p248 = scmp.eq.s32.totalorder %s48, 3
      %p249 = scmp.ne.s32.totalorder %s244, %s246
      %p250 = scmp.eq.s32.totalorder %s48, 0
      %p251 = por %p249, %p250
      %p252 = scmp.ne.s32.totalorder %s244, %s246
      %p253 = scmp.eq.s32.totalorder %s53, 3
      %p254 = por %p252, %p253
      %p255 = scmp.ne.s32.totalorder %s246, %s247
      %p256 = scmp.eq.s32.totalorder %s53, 0
      %p257 = por %p255, %p256
      %p258 = scmp.ne.s32.totalorder %s246, %s247
      %p259 = scmp.eq.s32.totalorder %s54, 3
      %p260 = por %p258, %p259
      %p262 = scmp.ne.s32.totalorder %s247, %s261
      %p263 = scmp.eq.s32.totalorder %s54, 0
      %p264 = por %p262, %p263
      %s266 = sadd.s32 %s265, 1
      %p269 = scmp.eq.s32.totalorder %s48, 3
      %p270 = scmp.ne.s32.totalorder %s265, %s267
      %p271 = scmp.eq.s32.totalorder %s48, 0
      %p272 = por %p270, %p271
      %p273 = scmp.ne.s32.totalorder %s265, %s267
      %p274 = scmp.eq.s32.totalorder %s53, 3
      %p275 = por %p273, %p274
      %p276 = scmp.ne.s32.totalorder %s267, %s268
      %p277 = scmp.eq.s32.totalorder %s53, 0
      %p278 = por %p276, %p277
      %p279 = scmp.ne.s32.totalorder %s267, %s268
      %p280 = scmp.eq.s32.totalorder %s54, 3
      %p281 = por %p279, %p280
      %p283 = scmp.ne.s32.totalorder %s268, %s282
      %p284 = scmp.eq.s32.totalorder %s54, 0
      %p285 = por %p283, %p284
      %s287 = sadd.s32 %s286, 1
      %p290 = scmp.eq.s32.totalorder %s48, 3
      %p291 = scmp.ne.s32.totalorder %s286, %s288
      %p292 = scmp.eq.s32.totalorder %s48, 0
      %p293 = por %p291, %p292
      %p294 = scmp.ne.s32.totalorder %s286, %s288
      %p295 = scmp.eq.s32.totalorder %s53, 3
      %p296 = por %p294, %p295
      %p297 = scmp.ne.s32.totalorder %s288, %s289
      %p298 = scmp.eq.s32.totalorder %s53, 0
      %p299 = por %p297, %p298
      %p300 = scmp.ne.s32.totalorder %s288, %s289
      %p301 = scmp.eq.s32.totalorder %s54, 3
      %p302 = por %p300, %p301
      %p304 = scmp.ne.s32.totalorder %s289, %s303
      %p305 = scmp.eq.s32.totalorder %s54, 0
      %p306 = por %p304, %p305
      %s308 = sadd.s32 %s307, 1
      %p311 = scmp.eq.s32.totalorder %s48, 3
      %p312 = scmp.ne.s32.totalorder %s307, %s309
      %p313 = scmp.eq.s32.totalorder %s48, 0
      %p314 = por %p312, %p313
      %p315 = scmp.ne.s32.totalorder %s307, %s309
      %p316 = scmp.eq.s32.totalorder %s53, 3
      %p317 = por %p315, %p316
      %p318 = scmp.ne.s32.totalorder %s309, %s310
      %p319 = scmp.eq.s32.totalorder %s53, 0
      %p320 = por %p318, %p319
      %p321 = scmp.ne.s32.totalorder %s309, %s310
      %p322 = scmp.eq.s32.totalorder %s54, 3
      %p323 = por %p321, %p322
      %p325 = scmp.ne.s32.totalorder %s310, %s324
      %p326 = scmp.eq.s32.totalorder %s54, 0
      %p327 = por %p325, %p326
      %s329 = sadd.s32 %s328, 1
      %p332 = scmp.eq.s32.totalorder %s48, 3
      %p333 = scmp.ne.s32.totalorder %s328, %s330
      %p334 = scmp.eq.s32.totalorder %s48, 0
      %p335 = por %p333, %p334
      %p336 = scmp.ne.s32.totalorder %s328, %s330
      %p337 = scmp.eq.s32.totalorder %s53, 3
      %p338 = por %p336, %p337
      %p339 = scmp.ne.s32.totalorder %s330, %s331
      %p340 = scmp.eq.s32.totalorder %s53, 0
      %p341 = por %p339, %p340
      %p342 = scmp.ne.s32.totalorder %s330, %s331
      %p343 = scmp.eq.s32.totalorder %s54, 3
      %p344 = por %p342, %p343
      %p346 = scmp.ne.s32.totalorder %s331, %s345
      %p347 = scmp.eq.s32.totalorder %s54, 0
      %p348 = por %p346, %p347
      %s350 = sadd.s32 %s349, 1
      %p353 = scmp.eq.s32.totalorder %s48, 3
      %p354 = scmp.ne.s32.totalorder %s349, %s351
      %p355 = scmp.eq.s32.totalorder %s48, 0
      %p356 = por %p354, %p355
      %p357 = scmp.ne.s32.totalorder %s349, %s351
      %p358 = scmp.eq.s32.totalorder %s53, 3
      %p359 = por %p357, %p358
      %p360 = scmp.ne.s32.totalorder %s351, %s352
      %p361 = scmp.eq.s32.totalorder %s53, 0
      %p362 = por %p360, %p361
      %p363 = scmp.ne.s32.totalorder %s351, %s352
      %p364 = scmp.eq.s32.totalorder %s54, 3
      %p365 = por %p363, %p364
      %p367 = scmp.ne.s32.totalorder %s352, %s366
      %p368 = scmp.eq.s32.totalorder %s54, 0
      %p369 = por %p367, %p368
      %s371 = sadd.s32 %s370, 1
      %p374 = scmp.eq.s32.totalorder %s48, 3
      %p375 = scmp.ne.s32.totalorder %s370, %s372
      %p376 = scmp.eq.s32.totalorder %s48, 0
      %p377 = por %p375, %p376
      %p378 = scmp.ne.s32.totalorder %s370, %s372
      %p379 = scmp.eq.s32.totalorder %s53, 3
      %p380 = por %p378, %p379
      %p381 = scmp.ne.s32.totalorder %s372, %s373
      %p382 = scmp.eq.s32.totalorder %s53, 0
      %p383 = por %p381, %p382
      %p384 = scmp.ne.s32.totalorder %s372, %s373
      %p385 = scmp.eq.s32.totalorder %s54, 3
      %p386 = por %p384, %p385
      %p388 = scmp.ne.s32.totalorder %s373, %s387
      %p389 = scmp.eq.s32.totalorder %s54, 0
      %p390 = por %p388, %p389
      %s392 = sadd.s32 %s391, 1
      %p395 = scmp.eq.s32.totalorder %s48, 3
      %p396 = scmp.ne.s32.totalorder %s391, %s393
      %p397 = scmp.eq.s32.totalorder %s48, 0
      %p398 = por %p396, %p397
      %p399 = scmp.ne.s32.totalorder %s391, %s393
      %p400 = scmp.eq.s32.totalorder %s53, 3
      %p401 = por %p399, %p400
      %p402 = scmp.ne.s32.totalorder %s393, %s394
      %p403 = scmp.eq.s32.totalorder %s53, 0
      %p404 = por %p402, %p403
      %p405 = scmp.ne.s32.totalorder %s393, %s394
      %p406 = scmp.eq.s32.totalorder %s54, 3
      %p407 = por %p405, %p406
      %p409 = scmp.ne.s32.totalorder %s394, %s408
      %p410 = scmp.eq.s32.totalorder %s54, 0
      %p411 = por %p409, %p410
      %s413 = sadd.s32 %s412, 1
      %p416 = scmp.eq.s32.totalorder %s48, 3
      %p417 = scmp.ne.s32.totalorder %s412, %s414
      %p418 = scmp.eq.s32.totalorder %s48, 0
      %p419 = por %p417, %p418
      %p420 = scmp.ne.s32.totalorder %s412, %s414
      %p421 = scmp.eq.s32.totalorder %s53, 3
      %p422 = por %p420, %p421
      %p423 = scmp.ne.s32.totalorder %s414, %s415
      %p424 = scmp.eq.s32.totalorder %s53, 0
      %p425 = por %p423, %p424
      %p426 = scmp.ne.s32.totalorder %s414, %s415
      %p427 = scmp.eq.s32.totalorder %s54, 3
      %p428 = por %p426, %p427
      %p430 = scmp.ne.s32.totalorder %s415, %s429
      %p431 = scmp.eq.s32.totalorder %s54, 0
      %p432 = por %p430, %p431
      %s434 = sadd.s32 %s433, 1
      %p437 = scmp.eq.s32.totalorder %s48, 3
      %p438 = scmp.ne.s32.totalorder %s433, %s435
      %p439 = scmp.eq.s32.totalorder %s48, 0
      %p440 = por %p438, %p439
      %p441 = scmp.ne.s32.totalorder %s433, %s435
      %p442 = scmp.eq.s32.totalorder %s53, 3
      %p443 = por %p441, %p442
      %p444 = scmp.ne.s32.totalorder %s435, %s436
      %p445 = scmp.eq.s32.totalorder %s53, 0
      %p446 = por %p444, %p445
      %p447 = scmp.ne.s32.totalorder %s435, %s436
      %p448 = scmp.eq.s32.totalorder %s54, 3
      %p449 = por %p447, %p448
      %p451 = scmp.ne.s32.totalorder %s436, %s450
      %p452 = scmp.eq.s32.totalorder %s54, 0
      %p453 = por %p451, %p452
      %s455 = sadd.s32 %s454, 1
      %p458 = scmp.eq.s32.totalorder %s48, 3
      %p459 = scmp.ne.s32.totalorder %s454, %s456
      %p460 = scmp.eq.s32.totalorder %s48, 0
      %p461 = por %p459, %p460
      %p462 = scmp.ne.s32.totalorder %s454, %s456
      %p463 = scmp.eq.s32.totalorder %s53, 3
      %p464 = por %p462, %p463
      %p465 = scmp.ne.s32.totalorder %s456, %s457
      %p466 = scmp.eq.s32.totalorder %s53, 0
      %p467 = por %p465, %p466
      %p468 = scmp.ne.s32.totalorder %s456, %s457
      %p469 = scmp.eq.s32.totalorder %s54, 3
      %p470 = por %p468, %p469
      %p472 = scmp.ne.s32.totalorder %s457, %s471
      %p473 = scmp.eq.s32.totalorder %s54, 0
      %p474 = por %p472, %p473
      %s476 = sadd.s32 %s475, 1
      %p479 = scmp.eq.s32.totalorder %s48, 3
      %p480 = scmp.ne.s32.totalorder %s475, %s477
      %p481 = scmp.eq.s32.totalorder %s48, 0
      %p482 = por %p480, %p481
      %p483 = scmp.ne.s32.totalorder %s475, %s477
      %p484 = scmp.eq.s32.totalorder %s53, 3
      %p485 = por %p483, %p484
      %p486 = scmp.ne.s32.totalorder %s477, %s478
      %p487 = scmp.eq.s32.totalorder %s53, 0
      %p488 = por %p486, %p487
      %p489 = scmp.ne.s32.totalorder %s477, %s478
      %p490 = scmp.eq.s32.totalorder %s54, 3
      %p491 = por %p489, %p490
      %p493 = scmp.ne.s32.totalorder %s478, %s492
      %p494 = scmp.eq.s32.totalorder %s54, 0
      %p495 = por %p493, %p494
      %s497 = sadd.s32 %s496, 1
      %p500 = scmp.eq.s32.totalorder %s48, 3
      %p501 = scmp.ne.s32.totalorder %s496, %s498
      %p502 = scmp.eq.s32.totalorder %s48, 0
      %p503 = por %p501, %p502
      %p504 = scmp.ne.s32.totalorder %s496, %s498
      %p505 = scmp.eq.s32.totalorder %s53, 3
      %p506 = por %p504, %p505
      %p507 = scmp.ne.s32.totalorder %s498, %s499
      %p508 = scmp.eq.s32.totalorder %s53, 0
      %p509 = por %p507, %p508
      %p510 = scmp.ne.s32.totalorder %s498, %s499
      %p511 = scmp.eq.s32.totalorder %s54, 3
      %p512 = por %p510, %p511
      %p514 = scmp.ne.s32.totalorder %s499, %s513
      %p515 = scmp.eq.s32.totalorder %s54, 0
      %p516 = por %p514, %p515
      %s518 = sadd.s32 %s517, 1
      %p521 = scmp.eq.s32.totalorder %s48, 3
      %p522 = scmp.ne.s32.totalorder %s517, %s519
      %p523 = scmp.eq.s32.totalorder %s48, 0
      %p524 = por %p522, %p523
      %p525 = scmp.ne.s32.totalorder %s517, %s519
      %p526 = scmp.eq.s32.totalorder %s53, 3
      %p527 = por %p525, %p526
      %p528 = scmp.ne.s32.totalorder %s519, %s520
      %p529 = scmp.eq.s32.totalorder %s53, 0
      %p530 = por %p528, %p529
      %p531 = scmp.ne.s32.totalorder %s519, %s520
      %p532 = scmp.eq.s32.totalorder %s54, 3
      %p533 = por %p531, %p532
      %p535 = scmp.ne.s32.totalorder %s520, %s534
      %p536 = scmp.eq.s32.totalorder %s54, 0
      %p537 = por %p535, %p536
      %s539 = sadd.s32 %s538, 1
      %p542 = scmp.eq.s32.totalorder %s48, 3
      %p543 = scmp.ne.s32.totalorder %s538, %s540
      %p544 = scmp.eq.s32.totalorder %s48, 0
      %p545 = por %p543, %p544
      %p546 = scmp.ne.s32.totalorder %s538, %s540
      %p547 = scmp.eq.s32.totalorder %s53, 3
      %p548 = por %p546, %p547
      %p549 = scmp.ne.s32.totalorder %s540, %s541
      %p550 = scmp.eq.s32.totalorder %s53, 0
      %p551 = por %p549, %p550
      %p552 = scmp.ne.s32.totalorder %s540, %s541
      %p553 = scmp.eq.s32.totalorder %s54, 3
      %p554 = por %p552, %p553
      %p556 = scmp.ne.s32.totalorder %s541, %s555
      %p557 = scmp.eq.s32.totalorder %s54, 0
      %p558 = por %p556, %p557
      %s560 = sadd.s32 %s559, 1
      %p563 = scmp.eq.s32.totalorder %s48, 3
      %p564 = scmp.ne.s32.totalorder %s559, %s561
      %p565 = scmp.eq.s32.totalorder %s48, 0
      %p566 = por %p564, %p565
      %p567 = scmp.ne.s32.totalorder %s559, %s561
      %p568 = scmp.eq.s32.totalorder %s53, 3
      %p569 = por %p567, %p568
      %p570 = scmp.ne.s32.totalorder %s561, %s562
      %p571 = scmp.eq.s32.totalorder %s53, 0
      %p572 = por %p570, %p571
      %p573 = scmp.ne.s32.totalorder %s561, %s562
      %p574 = scmp.eq.s32.totalorder %s54, 3
      %p575 = por %p573, %p574
      %p577 = scmp.ne.s32.totalorder %s562, %s576
      %p578 = scmp.eq.s32.totalorder %s54, 0
      %p579 = por %p577, %p578
      %s581 = sadd.s32 %s580, 1
      %p584 = scmp.eq.s32.totalorder %s48, 3
      %p585 = scmp.ne.s32.totalorder %s580, %s582
      %p586 = scmp.eq.s32.totalorder %s48, 0
      %p587 = por %p585, %p586
      %p588 = scmp.ne.s32.totalorder %s580, %s582
      %p589 = scmp.eq.s32.totalorder %s53, 3
      %p590 = por %p588, %p589
      %p591 = scmp.ne.s32.totalorder %s582, %s583
      %p592 = scmp.eq.s32.totalorder %s53, 0
      %p593 = por %p591, %p592
      %p594 = scmp.ne.s32.totalorder %s582, %s583
      %p595 = scmp.eq.s32.totalorder %s54, 3
      %p596 = por %p594, %p595
      %p598 = scmp.ne.s32.totalorder %s583, %s597
      %p599 = scmp.eq.s32.totalorder %s54, 0
      %p600 = por %p598, %p599
      %s601 = ssub.s32 %s48, %s55
      %p602 = scmp.eq.s32.totalorder %s601, 0
      %s604 = sadd.s32 %s603, 1
      %s605 = scalar_select %p602, %s603, %s604
      %p608 = pneg %p602
      %p609 = scmp.eq.s32.totalorder %s48, 3
      %p610 = por %p608, %p609
      %p611 = scmp.ne.s32.totalorder %s603, %s606
      %p612 = scmp.eq.s32.totalorder %s48, 0
      %p613 = por %p611, %p612
      %p614 = scmp.ne.s32.totalorder %s603, %s606
      %p615 = scmp.eq.s32.totalorder %s53, 3
      %p616 = por %p614, %p615
      %p617 = scmp.ne.s32.totalorder %s606, %s607
      %p618 = scmp.eq.s32.totalorder %s53, 0
      %p619 = por %p617, %p618
      %p620 = scmp.ne.s32.totalorder %s606, %s607
      %p621 = scmp.eq.s32.totalorder %s54, 3
      %p622 = por %p620, %p621
      %p624 = scmp.ne.s32.totalorder %s607, %s623
      %p625 = scmp.eq.s32.totalorder %s54, 0
      %p626 = por %p624, %p625
      %s627 = ssub.s32 %s48, %s55
      %p628 = scmp.eq.s32.totalorder %s627, 0
      %s630 = sadd.s32 %s629, 1
      %s631 = scalar_select %p628, %s629, %s630
      %p634 = pneg %p628
      %p635 = scmp.eq.s32.totalorder %s48, 3
      %p636 = por %p634, %p635
      %p637 = scmp.ne.s32.totalorder %s629, %s632
      %p638 = scmp.eq.s32.totalorder %s48, 0
      %p639 = por %p637, %p638
      %p640 = scmp.ne.s32.totalorder %s629, %s632
      %p641 = scmp.eq.s32.totalorder %s53, 3
      %p642 = por %p640, %p641
      %p643 = scmp.ne.s32.totalorder %s632, %s633
      %p644 = scmp.eq.s32.totalorder %s53, 0
      %p645 = por %p643, %p644
      %p646 = scmp.ne.s32.totalorder %s632, %s633
      %p647 = scmp.eq.s32.totalorder %s54, 3
      %p648 = por %p646, %p647
      %p650 = scmp.ne.s32.totalorder %s633, %s649
      %p651 = scmp.eq.s32.totalorder %s54, 0
      %p652 = por %p650, %p651
      %s653 = ssub.s32 %s48, %s55
      %p654 = scmp.eq.s32.totalorder %s653, 0
      %s656 = sadd.s32 %s655, 1
      %s657 = scalar_select %p654, %s655, %s656
      %p660 = pneg %p654
      %p661 = scmp.eq.s32.totalorder %s48, 3
      %p662 = por %p660, %p661
      %p663 = scmp.ne.s32.totalorder %s655, %s658
      %p664 = scmp.eq.s32.totalorder %s48, 0
      %p665 = por %p663, %p664
      %p666 = scmp.ne.s32.totalorder %s655, %s658
      %p667 = scmp.eq.s32.totalorder %s53, 3
      %p668 = por %p666, %p667
      %p669 = scmp.ne.s32.totalorder %s658, %s659
      %p670 = scmp.eq.s32.totalorder %s53, 0
      %p671 = por %p669, %p670
      %p672 = scmp.ne.s32.totalorder %s658, %s659
      %p673 = scmp.eq.s32.totalorder %s54, 3
      %p674 = por %p672, %p673
      %p676 = scmp.ne.s32.totalorder %s659, %s675
      %p677 = scmp.eq.s32.totalorder %s54, 0
      %p678 = por %p676, %p677
      %s679 = ssub.s32 %s48, %s55
      %p680 = scmp.eq.s32.totalorder %s679, 0
      %s682 = sadd.s32 %s681, 1
      %s683 = scalar_select %p680, %s681, %s682
      %p686 = pneg %p680
      %p687 = scmp.eq.s32.totalorder %s48, 3
      %p688 = por %p686, %p687
      %p689 = scmp.ne.s32.totalorder %s681, %s684
      %p690 = scmp.eq.s32.totalorder %s48, 0
      %p691 = por %p689, %p690
      %p692 = scmp.ne.s32.totalorder %s681, %s684
      %p693 = scmp.eq.s32.totalorder %s53, 3
      %p694 = por %p692, %p693
      %p695 = scmp.ne.s32.totalorder %s684, %s685
      %p696 = scmp.eq.s32.totalorder %s53, 0
      %p697 = por %p695, %p696
      %p698 = scmp.ne.s32.totalorder %s684, %s685
      %p699 = scmp.eq.s32.totalorder %s54, 3
      %p700 = por %p698, %p699
      %p702 = scmp.ne.s32.totalorder %s685, %s701
      %p703 = scmp.eq.s32.totalorder %s54, 0
      %p704 = por %p702, %p703
      %p705 = scmp.le.s32.totalorder 1, %s48
      %p706 = scmp.lt.s32.totalorder %s48, 5
      %p707 = pnand %p705, %p706
      %p708 = pneg %p707
      // Predicated region
      $region9: #{tpu_custom_call.1} parent=5 // pred_check
        _
      $region10: #{tpu_custom_call.1} parent=5 // pred_check_branch
        %710 = sbr.rel (%p707) target = $region12
      $region11: #{tpu_custom_call.1} parent=5 // pred_region
        %s711 = ssub.s32 %s48, 1
        // Predicated region
        $region13: #{tpu_custom_call.1} parent=11 // pred_check
          %p712 = pneg %p173
        $region14: #{tpu_custom_call.1} parent=11 // pred_check_branch
          %714 = sbr.rel (%p712) target = $region16
        $region15: #{tpu_custom_call.1} parent=11 // pred_region
          %s716 = ssub.s32 128, 128
          %717 = vsyncadd [#allocation8], %s716
          %s719 = sshll.u32 [#allocation9], 4
          %s720 = int_to_ptr.vmem [resolvable:$true] %s719
          %722 = dma.hbm_to_vmem [thread:$0]  %s4, 128, %s720, [#allocation8]
        $region16: #{tpu_custom_call.1} parent=11 // pred_fallthru
          _
        // Predicated region
        $region17: #{tpu_custom_call.1} parent=11 // pred_check
          %p723 = pneg %p194
        $region18: #{tpu_custom_call.1} parent=11 // pred_check_branch
          %725 = sbr.rel (%p723) target = $region20
        $region19: #{tpu_custom_call.1} parent=11 // pred_region
          %s727 = ssub.s32 128, 128
          %728 = vsyncadd [#allocation11], %s727
          %s730 = sshll.u32 [#allocation10], 4
          %s731 = int_to_ptr.vmem [resolvable:$true] %s730
          %733 = dma.hbm_to_vmem [thread:$0]  %s5, 128, %s731, [#allocation11]
        $region20: #{tpu_custom_call.1} parent=11 // pred_fallthru
          _
        // Predicated region
        $region21: #{tpu_custom_call.1} parent=11 // pred_check
          %p734 = pneg %p215
        $region22: #{tpu_custom_call.1} parent=11 // pred_check_branch
          %736 = sbr.rel (%p734) target = $region24
        $region23: #{tpu_custom_call.1} parent=11 // pred_region
          _
        $region24: #{tpu_custom_call.1} parent=11 // pred_fallthru
          _
        // Predicated region
        $region25: #{tpu_custom_call.1} parent=11 // pred_check
          %p737 = pneg %p236
        $region26: #{tpu_custom_call.1} parent=11 // pred_check_branch
          %739 = sbr.rel (%p737) target = $region28
        $region27: #{tpu_custom_call.1} parent=11 // pred_region
          %s741 = ssub.s32 16, 16
          %742 = vsyncadd [#allocation11], %s741
          %s744 = sshll.u32 [#allocation12], 4
          %s745 = int_to_ptr.vmem [resolvable:$true] %s744
          %747 = dma.hbm_to_vmem [thread:$0]  %s7, 16, %s745, [#allocation11]
        $region28: #{tpu_custom_call.1} parent=11 // pred_fallthru
          _
        // Predicated region
        $region29: #{tpu_custom_call.1} parent=11 // pred_check
          %p748 = pneg %p257
        $region30: #{tpu_custom_call.1} parent=11 // pred_check_branch
          %750 = sbr.rel (%p748) target = $region32
        $region31: #{tpu_custom_call.1} parent=11 // pred_region
          %s752 = ssub.s32 256, 256
          %753 = vsyncadd [#allocation14], %s752
          %s754 = sshll.u32 [#allocation13], 4
          %s755 = int_to_ptr.vmem [resolvable:$true] %s754
          %760 = dma.hbm_to_vmem [thread:$0]  %s8, 256, %s755, [#allocation14], 64, 64, 4
        $region32: #{tpu_custom_call.1} parent=11 // pred_fallthru
          _
        // Predicated region
        $region33: #{tpu_custom_call.1} parent=11 // pred_check
          %p761 = pneg %p278
        $region34: #{tpu_custom_call.1} parent=11 // pred_check_branch
          %763 = sbr.rel (%p761) target = $region36
        $region35: #{tpu_custom_call.1} parent=11 // pred_region
          %s765 = ssub.s32 256, 256
          %766 = vsyncadd [#allocation14], %s765
          %s767 = sshll.u32 [#allocation15], 4
          %s768 = int_to_ptr.vmem [resolvable:$true] %s767
          %773 = dma.hbm_to_vmem [thread:$0]  %s9, 256, %s768, [#allocation14], 64, 64, 4
        $region36: #{tpu_custom_call.1} parent=11 // pred_fallthru
          _
        // Predicated region
        $region37: #{tpu_custom_call.1} parent=11 // pred_check
          %p774 = pneg %p299
        $region38: #{tpu_custom_call.1} parent=11 // pred_check_branch
          %776 = sbr.rel (%p774) target = $region40
        $region39: #{tpu_custom_call.1} parent=11 // pred_region
          %s778 = ssub.s32 16, 16
          %779 = vsyncadd [#allocation17], %s778
          %s781 = sshll.u32 [#allocation16], 4
          %s782 = int_to_ptr.vmem [resolvable:$true] %s781
          %784 = dma.hbm_to_vmem [thread:$0]  %s10, 16, %s782, [#allocation17]
        $region40: #{tpu_custom_call.1} parent=11 // pred_fallthru
          _
        // Predicated region
        $region41: #{tpu_custom_call.1} parent=11 // pred_check
          %p785 = pneg %p320
        $region42: #{tpu_custom_call.1} parent=11 // pred_check_branch
          %787 = sbr.rel (%p785) target = $region44
        $region43: #{tpu_custom_call.1} parent=11 // pred_region
          _
        $region44: #{tpu_custom_call.1} parent=11 // pred_fallthru
          _
        // Predicated region
        $region45: #{tpu_custom_call.1} parent=11 // pred_check
          %p788 = pneg %p341
        $region46: #{tpu_custom_call.1} parent=11 // pred_check_branch
          %790 = sbr.rel (%p788) target = $region48
        $region47: #{tpu_custom_call.1} parent=11 // pred_region
          _
        $region48: #{tpu_custom_call.1} parent=11 // pred_fallthru
          _
        // Predicated region
        $region49: #{tpu_custom_call.1} parent=11 // pred_check
          %p791 = pneg %p362
        $region50: #{tpu_custom_call.1} parent=11 // pred_check_branch
          %793 = sbr.rel (%p791) target = $region52
        $region51: #{tpu_custom_call.1} parent=11 // pred_region
          _
        $region52: #{tpu_custom_call.1} parent=11 // pred_fallthru
          _
        // Predicated region
        $region53: #{tpu_custom_call.1} parent=11 // pred_check
          %p794 = pneg %p383
        $region54: #{tpu_custom_call.1} parent=11 // pred_check_branch
          %796 = sbr.rel (%p794) target = $region56
        $region55: #{tpu_custom_call.1} parent=11 // pred_region
          _
        $region56: #{tpu_custom_call.1} parent=11 // pred_fallthru
          _
        // Predicated region
        $region57: #{tpu_custom_call.1} parent=11 // pred_check
          %p797 = pneg %p404
        $region58: #{tpu_custom_call.1} parent=11 // pred_check_branch
          %799 = sbr.rel (%p797) target = $region60
        $region59: #{tpu_custom_call.1} parent=11 // pred_region
          %s801 = ssub.s32 512, 512
          %802 = vsyncadd [#allocation17], %s801
          %s803 = sshll.u32 [#allocation18], 4
          %s804 = int_to_ptr.vmem [resolvable:$true] %s803
          %809 = dma.hbm_to_vmem [thread:$0]  %s15, 512, %s804, [#allocation17], 64, 64, 4
        $region60: #{tpu_custom_call.1} parent=11 // pred_fallthru
          _
        // Predicated region
        $region61: #{tpu_custom_call.1} parent=11 // pred_check
          %p810 = pneg %p425
        $region62: #{tpu_custom_call.1} parent=11 // pred_check_branch
          %812 = sbr.rel (%p810) target = $region64
        $region63: #{tpu_custom_call.1} parent=11 // pred_region
          _
        $region64: #{tpu_custom_call.1} parent=11 // pred_fallthru
          _
        // Predicated region
        $region65: #{tpu_custom_call.1} parent=11 // pred_check
          %p813 = pneg %p446
        $region66: #{tpu_custom_call.1} parent=11 // pred_check_branch
          %815 = sbr.rel (%p813) target = $region68
        $region67: #{tpu_custom_call.1} parent=11 // pred_region
          _
        $region68: #{tpu_custom_call.1} parent=11 // pred_fallthru
          _
        // Predicated region
        $region69: #{tpu_custom_call.1} parent=11 // pred_check
          %p816 = pneg %p467
        $region70: #{tpu_custom_call.1} parent=11 // pred_check_branch
          %818 = sbr.rel (%p816) target = $region72
        $region71: #{tpu_custom_call.1} parent=11 // pred_region
          _
        $region72: #{tpu_custom_call.1} parent=11 // pred_fallthru
          _
        // Predicated region
        $region73: #{tpu_custom_call.1} parent=11 // pred_check
          %p819 = pneg %p488
        $region74: #{tpu_custom_call.1} parent=11 // pred_check_branch
          %821 = sbr.rel (%p819) target = $region76
        $region75: #{tpu_custom_call.1} parent=11 // pred_region
          %s823 = ssub.s32 512, 512
          %824 = vsyncadd [#allocation20], %s823
          %s825 = sshll.u32 [#allocation19], 4
          %s826 = int_to_ptr.vmem [resolvable:$true] %s825
          %831 = dma.hbm_to_vmem [thread:$0]  %s19, 512, %s826, [#allocation20], 64, 64, 4
        $region76: #{tpu_custom_call.1} parent=11 // pred_fallthru
          _
        // Predicated region
        $region77: #{tpu_custom_call.1} parent=11 // pred_check
          %p832 = pneg %p509
        $region78: #{tpu_custom_call.1} parent=11 // pred_check_branch
          %834 = sbr.rel (%p832) target = $region80
        $region79: #{tpu_custom_call.1} parent=11 // pred_region
          _
        $region80: #{tpu_custom_call.1} parent=11 // pred_fallthru
          _
        // Predicated region
        $region81: #{tpu_custom_call.1} parent=11 // pred_check
          %p835 = pneg %p530
        $region82: #{tpu_custom_call.1} parent=11 // pred_check_branch
          %837 = sbr.rel (%p835) target = $region84
        $region83: #{tpu_custom_call.1} parent=11 // pred_region
          %s839 = ssub.s32 512, 512
          %840 = vsyncadd [#allocation20], %s839
          %s841 = sshll.u32 [#allocation21], 4
          %s842 = int_to_ptr.vmem [resolvable:$true] %s841
          %847 = dma.hbm_to_vmem [thread:$0]  %s21, 512, %s842, [#allocation20], 64, 64, 4
        $region84: #{tpu_custom_call.1} parent=11 // pred_fallthru
          _
        // Predicated region
        $region85: #{tpu_custom_call.1} parent=11 // pred_check
          %p848 = pneg %p551
        $region86: #{tpu_custom_call.1} parent=11 // pred_check_branch
          %850 = sbr.rel (%p848) target = $region88
        $region87: #{tpu_custom_call.1} parent=11 // pred_region
          _
        $region88: #{tpu_custom_call.1} parent=11 // pred_fallthru
          _
        // Predicated region
        $region89: #{tpu_custom_call.1} parent=11 // pred_check
          %p851 = pneg %p572
        $region90: #{tpu_custom_call.1} parent=11 // pred_check_branch
          %853 = sbr.rel (%p851) target = $region92
        $region91: #{tpu_custom_call.1} parent=11 // pred_region
          _
        $region92: #{tpu_custom_call.1} parent=11 // pred_fallthru
          _
        // Predicated region
        $region93: #{tpu_custom_call.1} parent=11 // pred_check
          %p854 = pneg %p593
        $region94: #{tpu_custom_call.1} parent=11 // pred_check_branch
          %856 = sbr.rel (%p854) target = $region96
        $region95: #{tpu_custom_call.1} parent=11 // pred_region
          _
        $region96: #{tpu_custom_call.1} parent=11 // pred_fallthru
          _
      $region12: #{tpu_custom_call.1} parent=5 // pred_fallthru
        _
      %p857 = scmp.lt.s32.totalorder %s48, 4
      // Predicated region
      $region97: #{tpu_custom_call.1} parent=5 // pred_check
        %p858 = pneg %p857
      $region98: #{tpu_custom_call.1} parent=5 // pred_check_branch
        %860 = sbr.rel (%p858) target = $region100
      $region99: #{tpu_custom_call.1} parent=5 // pred_region
        // Predicated region
        $region101: #{tpu_custom_call.1} parent=99 // pred_check
          %p861 = pneg %p68
        $region102: #{tpu_custom_call.1} parent=99 // pred_check_branch
          %863 = sbr.rel (%p861) target = $region104
        $region103: #{tpu_custom_call.1} parent=99 // pred_region
          %s864 = sand.u32 %s58, 1
          %s865 = sand.u32 %s58, 1
          %s866 = smul.addr %s865, 12
          %s867 = scalar_lea.vmem [#allocation2], %s866
          %s868 = smul.addr %s48, 4
          %s869 = scalar_lea.vmem %s0, %s868
          // Predicated region
          $region105: #{tpu_custom_call.1} parent=103 // pred_check
            _
          $region106: #{tpu_custom_call.1} parent=103 // pred_check_branch
            %871 = sbr.rel (0) target = $region108
          $region107: #{tpu_custom_call.1} parent=103 // pred_region
            // Predicated region
            $region109: #{tpu_custom_call.1} parent=107 // pred_check
              _
            $region110: #{tpu_custom_call.1} parent=107 // pred_check_branch
              %873 = sbr.rel target = $region112
            $region111: #{tpu_custom_call.1} parent=107 // pred_region
              // Predicated region
              $region124: #{tpu_custom_call.1} parent=111 // pred_check
                _
              $region125: #{tpu_custom_call.1} parent=111 // pred_check_branch
                %893 = sbr.rel (0) target = $region127
              $region126: #{tpu_custom_call.1} parent=111 // pred_region
                loop: start=0, step=1, limit=1
                $region128: #{tpu_custom_call.1} parent=126 // loop_pre_header
                  _
                $region129: #{tpu_custom_call.1} parent=126 // loop_header
                  %s895 = sphi 0, %s899
                  %p896 = scmp.ge.s32.totalorder %s895, 1
                  %s900 = sphi %s869, %s869
                  %s901 = sphi %s867, %s867
                $region130: #{tpu_custom_call.1} parent=126 // loop_header_branch
                  %898 = sbr.rel (%p896) target = $region134
                $region131: #{tpu_custom_call.1} parent=126 // loop_body
                  _
                $region132: #{tpu_custom_call.1} parent=126 // loop_footer
                  %s899 = sadd.s32 1, %s895
                $region133: #{tpu_custom_call.1} parent=126 // loop_footer_branch
                  %894 = sbr.rel target = $region129
                $region134: #{tpu_custom_call.1} parent=126 // loop_exit
                  _
                %s903 = ssub.s32 16, 1
                loop: start=0, step=1, limit=1
                $region135: #{tpu_custom_call.1} parent=126 // loop_pre_header
                  _
                $region136: #{tpu_custom_call.1} parent=126 // loop_header
                  %s905 = sphi 0, %s909
                  %p906 = scmp.ge.s32.totalorder %s905, 1
                  %s910 = sphi %s869, %s869
                  %s911 = sphi %s867, %s867
                $region137: #{tpu_custom_call.1} parent=126 // loop_header_branch
                  %908 = sbr.rel (%p906) target = $region141
                $region138: #{tpu_custom_call.1} parent=126 // loop_body
                  %v912 = vld [vmem:[%s910] sm:%s903]
                  %913 = vst [vmem:[%s911] sm:%s903] %v912
                  %v914 = vld [vmem:[%s910 + $0x10] sm:%s903]
                  %915 = vst [vmem:[%s911 + $0x4] sm:%s903] %v914
                  %v916 = vld [vmem:[%s910 + $0x20] sm:%s903]
                  %917 = vst [vmem:[%s911 + $0x8] sm:%s903] %v916
                $region139: #{tpu_custom_call.1} parent=126 // loop_footer
                  %s909 = sadd.s32 1, %s905
                $region140: #{tpu_custom_call.1} parent=126 // loop_footer_branch
                  %904 = sbr.rel target = $region136
                $region141: #{tpu_custom_call.1} parent=126 // loop_exit
                  _
              $region127: #{tpu_custom_call.1} parent=111 // pred_fallthru
                _
            $region112: #{tpu_custom_call.1} parent=107 // pred_fallthru
              _
            // Predicated region
            $region113: #{tpu_custom_call.1} parent=107 // pred_check
              _
            $region114: #{tpu_custom_call.1} parent=107 // pred_check_branch
              %875 = sbr.rel (0) target = $region116
            $region115: #{tpu_custom_call.1} parent=107 // pred_region
              %s877 = ssub.s32 16, 1
              loop: start=0, step=1, limit=1
              $region117: #{tpu_custom_call.1} parent=115 // loop_pre_header
                _
              $region118: #{tpu_custom_call.1} parent=115 // loop_header
                %s879 = sphi 0, %s883
                %p880 = scmp.ge.s32.totalorder %s879, 1
                %s884 = sphi %s869, %s869
                %s885 = sphi %s867, %s867
              $region119: #{tpu_custom_call.1} parent=115 // loop_header_branch
                %882 = sbr.rel (%p880) target = $region123
              $region120: #{tpu_custom_call.1} parent=115 // loop_body
                %v886 = vld [vmem:[%s884] sm:%s877]
                %887 = vst [vmem:[%s885] sm:%s877] %v886
                %v888 = vld [vmem:[%s884 + $0x10] sm:%s877]
                %889 = vst [vmem:[%s885 + $0x4] sm:%s877] %v888
                %v890 = vld [vmem:[%s884 + $0x20] sm:%s877]
                %891 = vst [vmem:[%s885 + $0x8] sm:%s877] %v890
              $region121: #{tpu_custom_call.1} parent=115 // loop_footer
                %s883 = sadd.s32 1, %s879
              $region122: #{tpu_custom_call.1} parent=115 // loop_footer_branch
                %878 = sbr.rel target = $region118
              $region123: #{tpu_custom_call.1} parent=115 // loop_exit
                _
            $region116: #{tpu_custom_call.1} parent=107 // pred_fallthru
              _
          $region108: #{tpu_custom_call.1} parent=103 // pred_fallthru
            _
          %918 = vnop
        $region104: #{tpu_custom_call.1} parent=99 // pred_fallthru
          _
        // Predicated region
        $region142: #{tpu_custom_call.1} parent=99 // pred_check
          %p919 = pneg %p94
        $region143: #{tpu_custom_call.1} parent=99 // pred_check_branch
          %921 = sbr.rel (%p919) target = $region145
        $region144: #{tpu_custom_call.1} parent=99 // pred_region
          %s922 = sand.u32 %s84, 1
          %s923 = sand.u32 %s84, 1
          %s924 = smul.addr %s923, 12
          %s925 = scalar_lea.vmem [#allocation3], %s924
          %s926 = smul.addr %s48, 4
          %s927 = scalar_lea.vmem %s1, %s926
          // Predicated region
          $region146: #{tpu_custom_call.1} parent=144 // pred_check
            _
          $region147: #{tpu_custom_call.1} parent=144 // pred_check_branch
            %929 = sbr.rel (0) target = $region149
          $region148: #{tpu_custom_call.1} parent=144 // pred_region
            // Predicated region
            $region150: #{tpu_custom_call.1} parent=148 // pred_check
              _
            $region151: #{tpu_custom_call.1} parent=148 // pred_check_branch
              %931 = sbr.rel target = $region153
            $region152: #{tpu_custom_call.1} parent=148 // pred_region
              // Predicated region
              $region165: #{tpu_custom_call.1} parent=152 // pred_check
                _
              $region166: #{tpu_custom_call.1} parent=152 // pred_check_branch
                %951 = sbr.rel (0) target = $region168
              $region167: #{tpu_custom_call.1} parent=152 // pred_region
                loop: start=0, step=1, limit=1
                $region169: #{tpu_custom_call.1} parent=167 // loop_pre_header
                  _
                $region170: #{tpu_custom_call.1} parent=167 // loop_header
                  %s953 = sphi 0, %s957
                  %p954 = scmp.ge.s32.totalorder %s953, 1
                  %s958 = sphi %s927, %s927
                  %s959 = sphi %s925, %s925
                $region171: #{tpu_custom_call.1} parent=167 // loop_header_branch
                  %956 = sbr.rel (%p954) target = $region175
                $region172: #{tpu_custom_call.1} parent=167 // loop_body
                  _
                $region173: #{tpu_custom_call.1} parent=167 // loop_footer
                  %s957 = sadd.s32 1, %s953
                $region174: #{tpu_custom_call.1} parent=167 // loop_footer_branch
                  %952 = sbr.rel target = $region170
                $region175: #{tpu_custom_call.1} parent=167 // loop_exit
                  _
                %s961 = ssub.s32 16, 1
                loop: start=0, step=1, limit=1
                $region176: #{tpu_custom_call.1} parent=167 // loop_pre_header
                  _
                $region177: #{tpu_custom_call.1} parent=167 // loop_header
                  %s963 = sphi 0, %s967
                  %p964 = scmp.ge.s32.totalorder %s963, 1
                  %s968 = sphi %s927, %s927
                  %s969 = sphi %s925, %s925
                $region178: #{tpu_custom_call.1} parent=167 // loop_header_branch
                  %966 = sbr.rel (%p964) target = $region182
                $region179: #{tpu_custom_call.1} parent=167 // loop_body
                  %v970 = vld [vmem:[%s968] sm:%s961]
                  %971 = vst [vmem:[%s969] sm:%s961] %v970
                  %v972 = vld [vmem:[%s968 + $0x10] sm:%s961]
                  %973 = vst [vmem:[%s969 + $0x4] sm:%s961] %v972
                  %v974 = vld [vmem:[%s968 + $0x20] sm:%s961]
                  %975 = vst [vmem:[%s969 + $0x8] sm:%s961] %v974
                $region180: #{tpu_custom_call.1} parent=167 // loop_footer
                  %s967 = sadd.s32 1, %s963
                $region181: #{tpu_custom_call.1} parent=167 // loop_footer_branch
                  %962 = sbr.rel target = $region177
                $region182: #{tpu_custom_call.1} parent=167 // loop_exit
                  _
              $region168: #{tpu_custom_call.1} parent=152 // pred_fallthru
                _
            $region153: #{tpu_custom_call.1} parent=148 // pred_fallthru
              _
            // Predicated region
            $region154: #{tpu_custom_call.1} parent=148 // pred_check
              _
            $region155: #{tpu_custom_call.1} parent=148 // pred_check_branch
              %933 = sbr.rel (0) target = $region157
            $region156: #{tpu_custom_call.1} parent=148 // pred_region
              %s935 = ssub.s32 16, 1
              loop: start=0, step=1, limit=1
              $region158: #{tpu_custom_call.1} parent=156 // loop_pre_header
                _
              $region159: #{tpu_custom_call.1} parent=156 // loop_header
                %s937 = sphi 0, %s941
                %p938 = scmp.ge.s32.totalorder %s937, 1
                %s942 = sphi %s927, %s927
                %s943 = sphi %s925, %s925
              $region160: #{tpu_custom_call.1} parent=156 // loop_header_branch
                %940 = sbr.rel (%p938) target = $region164
              $region161: #{tpu_custom_call.1} parent=156 // loop_body
                %v944 = vld [vmem:[%s942] sm:%s935]
                %945 = vst [vmem:[%s943] sm:%s935] %v944
                %v946 = vld [vmem:[%s942 + $0x10] sm:%s935]
                %947 = vst [vmem:[%s943 + $0x4] sm:%s935] %v946
                %v948 = vld [vmem:[%s942 + $0x20] sm:%s935]
                %949 = vst [vmem:[%s943 + $0x8] sm:%s935] %v948
              $region162: #{tpu_custom_call.1} parent=156 // loop_footer
                %s941 = sadd.s32 1, %s937
              $region163: #{tpu_custom_call.1} parent=156 // loop_footer_branch
                %936 = sbr.rel target = $region159
              $region164: #{tpu_custom_call.1} parent=156 // loop_exit
                _
            $region157: #{tpu_custom_call.1} parent=148 // pred_fallthru
              _
          $region149: #{tpu_custom_call.1} parent=144 // pred_fallthru
            _
          %976 = vnop
        $region145: #{tpu_custom_call.1} parent=99 // pred_fallthru
          _
        // Predicated region
        $region183: #{tpu_custom_call.1} parent=99 // pred_check
          %p977 = pneg %p120
        $region184: #{tpu_custom_call.1} parent=99 // pred_check_branch
          %979 = sbr.rel (%p977) target = $region186
        $region185: #{tpu_custom_call.1} parent=99 // pred_region
          %s980 = sand.u32 %s110, 1
          %s981 = scalar_lea.sflag [#allocation5], %s980
          %s982 = sand.u32 %s110, 1
          %s983 = scalar_lea.vmem [#allocation4], %s982
          %s985 = ssub.s32 16, 16
          %986 = vsyncadd %s981, %s985
          %s987 = smul.addr %s48, 16
          %s988 = scalar_lea.hbm %s2, %s987
          %s990 = sshll.u32 %s983, 4
          %s991 = int_to_ptr.vmem [resolvable:$true] %s990
          %993 = dma.hbm_to_vmem [thread:$0]  %s988, 16, %s991, %s981
        $region186: #{tpu_custom_call.1} parent=99 // pred_fallthru
          _
        // Predicated region
        $region187: #{tpu_custom_call.1} parent=99 // pred_check
          %p994 = pneg %p146
        $region188: #{tpu_custom_call.1} parent=99 // pred_check_branch
          %996 = sbr.rel (%p994) target = $region190
        $region189: #{tpu_custom_call.1} parent=99 // pred_region
          %s997 = sand.u32 %s48, 1
          %s998 = scalar_lea.sflag [#allocation8], %s997
          %s999 = sand.u32 %s136, 1
          %s1000 = scalar_lea.vmem [#allocation7], %s999
          %s1002 = ssub.s32 16, 16
          %1003 = vsyncadd %s998, %s1002
          %s1004 = smul.addr %s48, 16
          %s1005 = scalar_lea.hbm %s3, %s1004
          %s1007 = sshll.u32 %s1000, 4
          %s1008 = int_to_ptr.vmem [resolvable:$true] %s1007
          %1010 = dma.hbm_to_vmem [thread:$0]  %s1005, 16, %s1008, %s998
        $region190: #{tpu_custom_call.1} parent=99 // pred_fallthru
          _
      $region100: #{tpu_custom_call.1} parent=5 // pred_fallthru
        _
      %p1011 = scmp.le.s32.totalorder 1, %s48
      %p1012 = scmp.lt.s32.totalorder %s48, 5
      %p1013 = pnand %p1011, %p1012
      %p1014 = pneg %p1013
      // Predicated region
      $region191: #{tpu_custom_call.1} parent=5 // pred_check
        _
      $region192: #{tpu_custom_call.1} parent=5 // pred_check_branch
        %1016 = sbr.rel (%p1013) target = $region194
      $region193: #{tpu_custom_call.1} parent=5 // pred_region
        %s1017 = ssub.s32 %s48, 1
        %s1018 = sand.u32 %s61, 1
        %s1019 = sand.u32 %s61, 1
        %s1020 = smul.addr %s1019, 12
        %s1021 = scalar_lea.vmem [#allocation2], %s1020
        // Predicated region
        $region195: #{tpu_custom_call.1} parent=193 // pred_check
          %p1022 = pneg %p74
        $region196: #{tpu_custom_call.1} parent=193 // pred_check_branch
          %1024 = sbr.rel (%p1022) target = $region198
        $region197: #{tpu_custom_call.1} parent=193 // pred_region
          _
        $region198: #{tpu_custom_call.1} parent=193 // pred_fallthru
          _
        %s1025 = sand.u32 %s87, 1
        %s1026 = sand.u32 %s87, 1
        %s1027 = smul.addr %s1026, 12
        %s1028 = scalar_lea.vmem [#allocation3], %s1027
        // Predicated region
        $region199: #{tpu_custom_call.1} parent=193 // pred_check
          %p1029 = pneg %p100
        $region200: #{tpu_custom_call.1} parent=193 // pred_check_branch
          %1031 = sbr.rel (%p1029) target = $region202
        $region201: #{tpu_custom_call.1} parent=193 // pred_region
          _
        $region202: #{tpu_custom_call.1} parent=193 // pred_fallthru
          _
        %s1032 = sand.u32 %s113, 1
        %s1033 = scalar_lea.sflag [#allocation5], %s1032
        %s1034 = sand.u32 %s113, 1
        %s1035 = scalar_lea.vmem [#allocation4], %s1034
        // Predicated region
        $region203: #{tpu_custom_call.1} parent=193 // pred_check
          %p1036 = pneg %p126
        $region204: #{tpu_custom_call.1} parent=193 // pred_check_branch
          %1038 = sbr.rel (%p1036) target = $region206
        $region205: #{tpu_custom_call.1} parent=193 // pred_region
          %1039 = dma.done %s1033, 16
        $region206: #{tpu_custom_call.1} parent=193 // pred_fallthru
          _
        %s1040 = sand.u32 %s53, 1
        %s1041 = scalar_lea.sflag [#allocation8], %s1040
        %s1042 = sand.u32 %s139, 1
        %s1043 = scalar_lea.vmem [#allocation7], %s1042
        // Predicated region
        $region207: #{tpu_custom_call.1} parent=193 // pred_check
          %p1044 = pneg %p152
        $region208: #{tpu_custom_call.1} parent=193 // pred_check_branch
          %1046 = sbr.rel (%p1044) target = $region210
        $region209: #{tpu_custom_call.1} parent=193 // pred_region
          %1047 = dma.done %s1041, 16
        $region210: #{tpu_custom_call.1} parent=193 // pred_fallthru
          _
        // Predicated region
        $region211: #{tpu_custom_call.1} parent=193 // pred_check
          %p1048 = pneg %p173
        $region212: #{tpu_custom_call.1} parent=193 // pred_check_branch
          %1050 = sbr.rel (%p1048) target = $region214
        $region213: #{tpu_custom_call.1} parent=193 // pred_region
          %1051 = dma.done [#allocation8], 128
        $region214: #{tpu_custom_call.1} parent=193 // pred_fallthru
          _
        // Predicated region
        $region215: #{tpu_custom_call.1} parent=193 // pred_check
          %p1052 = pneg %p194
        $region216: #{tpu_custom_call.1} parent=193 // pred_check_branch
          %1054 = sbr.rel (%p1052) target = $region218
        $region217: #{tpu_custom_call.1} parent=193 // pred_region
          %1055 = dma.done [#allocation11], 128
        $region218: #{tpu_custom_call.1} parent=193 // pred_fallthru
          _
        // Predicated region
        $region219: #{tpu_custom_call.1} parent=193 // pred_check
          %p1056 = pneg %p236
        $region220: #{tpu_custom_call.1} parent=193 // pred_check_branch
          %1058 = sbr.rel (%p1056) target = $region222
        $region221: #{tpu_custom_call.1} parent=193 // pred_region
          %1059 = dma.done [#allocation11], 16
        $region222: #{tpu_custom_call.1} parent=193 // pred_fallthru
          _
        // Predicated region
        $region223: #{tpu_custom_call.1} parent=193 // pred_check
          %p1060 = pneg %p257
        $region224: #{tpu_custom_call.1} parent=193 // pred_check_branch
          %1062 = sbr.rel (%p1060) target = $region226
        $region225: #{tpu_custom_call.1} parent=193 // pred_region
          %1063 = dma.done [#allocation14], 256
        $region226: #{tpu_custom_call.1} parent=193 // pred_fallthru
          _
        // Predicated region
        $region227: #{tpu_custom_call.1} parent=193 // pred_check
          %p1064 = pneg %p278
        $region228: #{tpu_custom_call.1} parent=193 // pred_check_branch
          %1066 = sbr.rel (%p1064) target = $region230
        $region229: #{tpu_custom_call.1} parent=193 // pred_region
          %1067 = dma.done [#allocation14], 256
        $region230: #{tpu_custom_call.1} parent=193 // pred_fallthru
          _
        // Predicated region
        $region231: #{tpu_custom_call.1} parent=193 // pred_check
          %p1068 = pneg %p299
        $region232: #{tpu_custom_call.1} parent=193 // pred_check_branch
          %1070 = sbr.rel (%p1068) target = $region234
        $region233: #{tpu_custom_call.1} parent=193 // pred_region
          %1071 = dma.done [#allocation17], 16
        $region234: #{tpu_custom_call.1} parent=193 // pred_fallthru
          _
        // Predicated region
        $region235: #{tpu_custom_call.1} parent=193 // pred_check
          %p1072 = pneg %p404
        $region236: #{tpu_custom_call.1} parent=193 // pred_check_branch
          %1074 = sbr.rel (%p1072) target = $region238
        $region237: #{tpu_custom_call.1} parent=193 // pred_region
          %1075 = dma.done [#allocation17], 512
        $region238: #{tpu_custom_call.1} parent=193 // pred_fallthru
          _
        // Predicated region
        $region239: #{tpu_custom_call.1} parent=193 // pred_check
          %p1076 = pneg %p488
        $region240: #{tpu_custom_call.1} parent=193 // pred_check_branch
          %1078 = sbr.rel (%p1076) target = $region242
        $region241: #{tpu_custom_call.1} parent=193 // pred_region
          %1079 = dma.done [#allocation20], 512
        $region242: #{tpu_custom_call.1} parent=193 // pred_fallthru
          _
        // Predicated region
        $region243: #{tpu_custom_call.1} parent=193 // pred_check
          %p1080 = pneg %p530
        $region244: #{tpu_custom_call.1} parent=193 // pred_check_branch
          %1082 = sbr.rel (%p1080) target = $region246
        $region245: #{tpu_custom_call.1} parent=193 // pred_region
          %1083 = dma.done [#allocation20], 512
        $region246: #{tpu_custom_call.1} parent=193 // pred_fallthru
          _
        %s1084 = sand.u32 %s61, 1
        %s1085 = sand.u32 %s61, 1
        %s1086 = smul.addr %s1085, 12
        %s1087 = scalar_lea.vmem [#allocation2], %s1086
        %p1088 = pneg %p74
        %p1089 = pneg %p71
        %s1090 = sand.u32 %s87, 1
        %s1091 = sand.u32 %s87, 1
        %s1092 = smul.addr %s1091, 12
        %s1093 = scalar_lea.vmem [#allocation3], %s1092
        %p1094 = pneg %p100
        %p1095 = pneg %p97
        %s1096 = sand.u32 %s113, 1
        %s1097 = scalar_lea.sflag [#allocation5], %s1096
        %s1098 = sand.u32 %s113, 1
        %s1099 = scalar_lea.vmem [#allocation4], %s1098
        %p1100 = pneg %p126
        %p1101 = pneg %p123
        %s1102 = sand.u32 %s53, 1
        %s1103 = scalar_lea.sflag [#allocation8], %s1102
        %s1104 = sand.u32 %s139, 1
        %s1105 = scalar_lea.vmem [#allocation7], %s1104
        %p1106 = pneg %p152
        %p1107 = pneg %p149
        %p1108 = pneg %p173
        %p1109 = pneg %p170
        %p1110 = pneg %p194
        %p1111 = pneg %p191
        %p1112 = pneg %p215
        %p1113 = pneg %p212
        %p1114 = pneg %p236
        %p1115 = pneg %p233
        %p1116 = pneg %p257
        %p1117 = pneg %p254
        %p1118 = pneg %p278
        %p1119 = pneg %p275
        %p1120 = pneg %p299
        %p1121 = pneg %p296
        %p1122 = pneg %p320
        %p1123 = pneg %p317
        %p1124 = pneg %p341
        %p1125 = pneg %p338
        %p1126 = pneg %p362
        %p1127 = pneg %p359
        %p1128 = pneg %p383
        %p1129 = pneg %p380
        %p1130 = pneg %p404
        %p1131 = pneg %p401
        %p1132 = pneg %p425
        %p1133 = pneg %p422
        %p1134 = pneg %p446
        %p1135 = pneg %p443
        %p1136 = pneg %p467
        %p1137 = pneg %p464
        %p1138 = pneg %p488
        %p1139 = pneg %p485
        %p1140 = pneg %p509
        %p1141 = pneg %p506
        %p1142 = pneg %p530
        %p1143 = pneg %p527
        %p1144 = pneg %p551
        %p1145 = pneg %p548
        %p1146 = pneg %p572
        %p1147 = pneg %p569
        %p1148 = pneg %p593
        %p1149 = pneg %p590
        %p1150 = pneg %p619
        %p1151 = pneg %p616
        %s1152 = sand.u32 %s606, 1
        %s1153 = scalar_lea.sflag [#allocation6], %s1152
        %s1154 = sand.u32 %s606, 1
        %s1155 = smul.addr %s1154, 8
        %s1156 = scalar_lea.vmem [#allocation22], %s1155
        %p1157 = pneg %p645
        %p1158 = pneg %p642
        %p1159 = scmp.lt.s32.totalorder %s53, 3
        %s1160 = scalar_select %p1159, %s53, 3
        %s1161 = scalar_lea.vmem %s26, %s1160
        %p1162 = pneg %p671
        %p1163 = pneg %p668
        %p1164 = scmp.lt.s32.totalorder %s53, 3
        %s1165 = scalar_select %p1164, %s53, 3
        %s1166 = scalar_lea.vmem %s27, %s1165
        %p1167 = pneg %p697
        %p1168 = pneg %p694
        %p1169 = scmp.lt.s32.totalorder %s53, 3
        %s1170 = scalar_select %p1169, %s53, 3
        %s1171 = scalar_lea.vmem %s28, %s1170
        %p1172 = scmp.lt.s32.totalorder %s53, 3
        %s1173 = scalar_select %p1172, %s53, 3
        %s1174 = scalar_lea.vmem %s26, %s1173
        %p1175 = scmp.lt.s32.totalorder %s53, 3
        %s1176 = scalar_select %p1175, %s53, 3
        %s1177 = scalar_lea.vmem %s27, %s1176
        %p1178 = scmp.lt.s32.totalorder %s53, 3
        %s1179 = scalar_select %p1178, %s53, 3
        %s1180 = scalar_lea.vmem %s28, %s1179
        %v1182 = vld [vmem:[%s1021] sm:$0xf]
        %v1183 = vld [vmem:[%s1021 + $0x4] sm:$0xf]
        %v1184 = vld [vmem:[%s1021 + $0x8] sm:$0xf]
        %v1185 = vld [vmem:[%s1028] sm:$0xf]
        %v1186 = vld [vmem:[%s1028 + $0x4] sm:$0xf]
        %v1187 = vld [vmem:[%s1028 + $0x8] sm:$0xf]
        %v1188 = vld [vmem:[%s6] sm:$0x3]
        %v1189 = vld [vmem:[#allocation12] sm:$0x1]
        %v1191 = vlaneseq
        %v1192 = vshrl.u32 %v1191, 7
        %v1193 = vsub.s32 0, %v1192
        %v1194 = vrot.slane %v1189, %v1193
        %v1199 = vunpack.c.l.b16 %v1185
        %v1200 = vunpack.c.l.b16 %v1186
        %v1201 = vunpack.c.l.b16 %v1187
        %v1202 = vpack.c.b16 %v1200, %v1199
        %v1203 = vpack.c.b16 %v1201, %v1201
        %vm1204 = vcmask 31744
        %v1206 = vsel %vm1204, %v1202, 0
        %v1209 = vsel %vm1204, %v1203, 0
        %vm1211 = vcmask 1041408
        %v1213 = vsel %vm1211, %v1188, 0
        %1215 = vmatprep.subr.bf16.mxu0 0
        %1216 = vmatpush1.bf16.msra.mxu0 0
        %1217 = vmatprep.subr.bf16.mxu0 0
        %1218 = vmatpush1.bf16.msra.mxu0 0
        %1219 = vmatprep.subr.bf16.mxu0 0
        %1220 = vmatpush1.bf16.msra.mxu0 0
        %1221 = vmatprep.subr.bf16.mxu0 0
        %1222 = vmatpush1.bf16.msra.mxu0 0
        %1223 = vmatprep.subr.bf16.mxu0 0
        %1224 = vmatpush1.bf16.msra.mxu0 0
        %1225 = vmatprep.subr.bf16.mxu0 0
        %1226 = vmatpush1.bf16.msra.mxu0 0
        %1227 = vmatprep.subr.bf16.mxu0 0
        %1228 = vmatpush1.bf16.msra.mxu0 0
        %1229 = vmatprep.subr.bf16.mxu0 0
        %1230 = vmatpush1.bf16.msra.mxu0 %v1213
        %1231 = vmatprep.subr.bf16.mxu0 0
        %1232 = vmatpush2.bf16.msra.mxu0 0
        %1233 = vmatprep.subr.bf16.mxu0 0
        %1234 = vmatpush2.bf16.msra.mxu0 0
        %1235 = vmatprep.subr.bf16.mxu0 0
        %1236 = vmatpush2.bf16.msra.mxu0 0
        %1237 = vmatprep.subr.bf16.mxu0 0
        %1238 = vmatpush2.bf16.msra.mxu0 0
        %1239 = vmatprep.subr.bf16.mxu0 0
        %1240 = vmatpush2.bf16.msra.mxu0 0
        %1241 = vmatprep.subr.bf16.mxu0 0
        %1242 = vmatpush2.bf16.msra.mxu0 0
        %1243 = vmatprep.subr.bf16.mxu0 0
        %1244 = vmatpush2.bf16.msra.mxu0 0
        %1245 = vmatprep.subr.bf16.mxu0 0
        %1246 = vmatpush2.bf16.msra.mxu0 0
        %1247 = vmatprep.mubr.bf16.mxu0 0
        %1248 = vmatmul.mubr.bf16.gmra.mxu0 %v1206
        %v1249 = vpop.f32.mrf.mxu0
        %v1250 = vadd.f32 %v1194, %v1249
        %v1251 = vpop.f32.mrf.mxu0
        %v1252 = vpop.f32.mrf.mxu0
        %v1253 = vadd.f32 %v1194, %v1252
        %v1254 = vpop.f32.mrf.mxu0
        %1255 = vmatprep.mubr.bf16.mxu0 0
        %1256 = vmatmul.mubr.bf16.gmra.mxu0 %v1209
        %v1257 = vpop.f32.mrf.mxu0
        %v1258 = vadd.f32 %v1194, %v1257
        %v1259 = vpop.f32.mrf.mxu0
        %v1260 = vpop.f32.mrf.mxu0
        %v1261 = vpop.f32.mrf.mxu0
        %1262 = vdwg.mxu0
        %v1263 = vld [vmem:[#allocation13] sm:$0xf]
        %v1264 = vld [vmem:[#allocation13 + $0x4] sm:$0xf]
        %v1265 = vld [vmem:[#allocation13 + $0x8] sm:$0xf]
        %v1266 = vld [vmem:[#allocation13 + $0xc] sm:$0xf]
        %v1267 = vpack.c.bf16 %v1253, %v1250
        %v1268 = vpack.c.bf16 %v1258, %v1258
        %v1269 = vld [vmem:[#allocation15] sm:$0xf]
        %v1270 = vld [vmem:[#allocation15 + $0x4] sm:$0xf]
        %v1271 = vld [vmem:[#allocation15 + $0x8] sm:$0xf]
        %v1272 = vld [vmem:[#allocation15 + $0xc] sm:$0xf]
        %v1277 = vunpack.c.l.b16 %v1269
        %v1278 = vunpack.c.l.b16 %v1270
        %v1279 = vunpack.c.l.b16 %v1271
        %v1280 = vunpack.c.l.b16 %v1272
        %v1281 = vpack.c.b16 %v1278, %v1277
        %v1282 = vpack.c.b16 %v1280, %v1279
        %vm1285 = vcmask 261120
        %v1287 = vsel %vm1285, %v1267, 0
        %v1290 = vsel %vm1285, %v1268, 0
        %1292 = vmatprep.subr.bf16.mxu0 0
        %1293 = vmatpush1.bf16.msra.mxu0 0
        %1294 = vmatprep.subr.bf16.mxu0 0
        %1295 = vmatpush1.bf16.msra.mxu0 0
        %1296 = vmatprep.subr.bf16.mxu0 0
        %1297 = vmatpush1.bf16.msra.mxu0 0
        %1298 = vmatprep.subr.bf16.mxu0 0
        %1299 = vmatpush1.bf16.msra.mxu0 0
        %1300 = vmatprep.subr.bf16.mxu0 0
        %1301 = vmatpush1.bf16.msra.mxu0 0
        %1302 = vmatprep.subr.bf16.mxu0 0
        %1303 = vmatpush1.bf16.msra.mxu0 0
        %1304 = vmatprep.subr.bf16.mxu0 0
        %1305 = vmatpush1.bf16.msra.mxu0 %v1282
        %1306 = vmatprep.subr.bf16.mxu0 0
        %1307 = vmatpush1.bf16.msra.mxu0 %v1281
        %1308 = vmatprep.subr.bf16.mxu0 0
        %1309 = vmatpush2.bf16.msra.mxu0 0
        %1310 = vmatprep.subr.bf16.mxu0 0
        %1311 = vmatpush2.bf16.msra.mxu0 0
        %1312 = vmatprep.subr.bf16.mxu0 0
        %1313 = vmatpush2.bf16.msra.mxu0 0
        %1314 = vmatprep.subr.bf16.mxu0 0
        %1315 = vmatpush2.bf16.msra.mxu0 0
        %1316 = vmatprep.subr.bf16.mxu0 0
        %1317 = vmatpush2.bf16.msra.mxu0 0
        %1318 = vmatprep.subr.bf16.mxu0 0
        %1319 = vmatpush2.bf16.msra.mxu0 0
        %1320 = vmatprep.subr.bf16.mxu0 0
        %1321 = vmatpush2.bf16.msra.mxu0 0
        %1322 = vmatprep.subr.bf16.mxu0 0
        %1323 = vmatpush2.bf16.msra.mxu0 0
        %1324 = vmatprep.mubr.bf16.mxu0 0
        %1325 = vmatmul.mubr.bf16.gmra.mxu0 %v1287
        %v1326 = vpop.f32.mrf.mxu0
        %v1327 = vadd.f32 0.0, %v1326
        %v1328 = vpop.f32.mrf.mxu0
        %v1329 = vpop.f32.mrf.mxu0
        %v1330 = vadd.f32 0.0, %v1329
        %v1331 = vpop.f32.mrf.mxu0
        %1332 = vmatprep.mubr.bf16.mxu0 0
        %1333 = vmatmul.mubr.bf16.gmra.mxu0 %v1290
        %v1334 = vpop.f32.mrf.mxu0
        %v1335 = vadd.f32 0.0, %v1334
        %v1336 = vpop.f32.mrf.mxu0
        %v1337 = vpop.f32.mrf.mxu0
        %v1338 = vpop.f32.mrf.mxu0
        %1339 = vdwg.mxu0
        %v1343 = vunpack.c.l.b16 %v1182
        %v1344 = vunpack.c.l.b16 %v1183
        %v1345 = vunpack.c.l.b16 %v1184
        %v1346 = vpack.c.b16 %v1344, %v1343
        %v1347 = vpack.c.b16 %v1345, %v1345
        %v1352 = vunpack.c.l.b16 %v1263
        %v1353 = vunpack.c.l.b16 %v1264
        %v1354 = vunpack.c.l.b16 %v1265
        %v1355 = vunpack.c.l.b16 %v1266
        %v1356 = vpack.c.b16 %v1353, %v1352
        %v1357 = vpack.c.b16 %v1355, %v1354
        %v1361 = vsel %vm1285, %v1346, 0
        %v1364 = vsel %vm1285, %v1347, 0
        %1366 = vmatprep.subr.bf16.mxu0 0
        %1367 = vmatpush1.bf16.msra.mxu0 0
        %1368 = vmatprep.subr.bf16.mxu0 0
        %1369 = vmatpush1.bf16.msra.mxu0 0
        %1370 = vmatprep.subr.bf16.mxu0 0
        %1371 = vmatpush1.bf16.msra.mxu0 0
        %1372 = vmatprep.subr.bf16.mxu0 0
        %1373 = vmatpush1.bf16.msra.mxu0 0
        %1374 = vmatprep.subr.bf16.mxu0 0
        %1375 = vmatpush1.bf16.msra.mxu0 0
        %1376 = vmatprep.subr.bf16.mxu0 0
        %1377 = vmatpush1.bf16.msra.mxu0 0
        %1378 = vmatprep.subr.bf16.mxu0 0
        %1379 = vmatpush1.bf16.msra.mxu0 %v1357
        %1380 = vmatprep.subr.bf16.mxu0 0
        %1381 = vmatpush1.bf16.msra.mxu0 %v1356
        %1382 = vmatprep.subr.bf16.mxu0 0
        %1383 = vmatpush2.bf16.msra.mxu0 0
        %1384 = vmatprep.subr.bf16.mxu0 0
        %1385 = vmatpush2.bf16.msra.mxu0 0
        %1386 = vmatprep.subr.bf16.mxu0 0
        %1387 = vmatpush2.bf16.msra.mxu0 0
        %1388 = vmatprep.subr.bf16.mxu0 0
        %1389 = vmatpush2.bf16.msra.mxu0 0
        %1390 = vmatprep.subr.bf16.mxu0 0
        %1391 = vmatpush2.bf16.msra.mxu0 0
        %1392 = vmatprep.subr.bf16.mxu0 0
        %1393 = vmatpush2.bf16.msra.mxu0 0
        %1394 = vmatprep.subr.bf16.mxu0 0
        %1395 = vmatpush2.bf16.msra.mxu0 0
        %1396 = vmatprep.subr.bf16.mxu0 0
        %1397 = vmatpush2.bf16.msra.mxu0 0
        %1398 = vmatprep.mubr.bf16.mxu0 0
        %1399 = vmatmul.mubr.bf16.gmra.mxu0 %v1361
        %v1400 = vpop.f32.mrf.mxu0
        %v1401 = vadd.f32 %v1327, %v1400
        %v1402 = vpop.f32.mrf.mxu0
        %v1403 = vpop.f32.mrf.mxu0
        %v1404 = vadd.f32 %v1330, %v1403
        %v1405 = vpop.f32.mrf.mxu0
        %1406 = vmatprep.mubr.bf16.mxu0 0
        %1407 = vmatmul.mubr.bf16.gmra.mxu0 %v1364
        %v1408 = vpop.f32.mrf.mxu0
        %v1409 = vadd.f32 %v1335, %v1408
        %v1410 = vpop.f32.mrf.mxu0
        %v1411 = vpop.f32.mrf.mxu0
        %v1412 = vpop.f32.mrf.mxu0
        %1413 = vdwg.mxu0
        %v1414 = vld [vmem:[#allocation16] sm:$0x1]
        %v1416 = vlaneseq
        %v1417 = vshrl.u32 %v1416, 7
        %v1418 = vsub.s32 0, %v1417
        %v1419 = vrot.slane %v1414, %v1418
        %v1421 = vadd.f32 %v1401, %v1419
        %v1422 = vadd.f32 %v1404, %v1419
        %v1423 = vadd.f32 %v1409, %v1419
        %v1424 = vld [vmem:[%s1035] sm:$0x1]
        %1425 = vxpose.xlu0.b32.start [1/16] %v1424, 128
        %1426 = vxpose.xlu0.b32.cont [2/16] 0.0, 128
        %1427 = vxpose.xlu0.b32.cont [3/16] 0.0, 128
        %1428 = vxpose.xlu0.b32.cont [4/16] 0.0, 128
        %1429 = vxpose.xlu0.b32.cont [5/16] 0.0, 128
        %1430 = vxpose.xlu0.b32.cont [6/16] 0.0, 128
        %1431 = vxpose.xlu0.b32.cont [7/16] 0.0, 128
        %1432 = vxpose.xlu0.b32.cont [8/16] 0.0, 128
        %1433 = vxpose.xlu0.b32.cont [9/16] 0.0, 128
        %1434 = vxpose.xlu0.b32.cont [10/16] 0.0, 128
        %1435 = vxpose.xlu0.b32.cont [11/16] 0.0, 128
        %1436 = vxpose.xlu0.b32.cont [12/16] 0.0, 128
        %1437 = vxpose.xlu0.b32.cont [13/16] 0.0, 128
        %1438 = vxpose.xlu0.b32.cont [14/16] 0.0, 128
        %1439 = vxpose.xlu0.b32.cont [15/16] 0.0, 128
        %1440 = vxpose.xlu0.b32.end [16/16] 0.0, 128
        %v1441 = vpop.trf.xlu0
        %v1442 = vpop.trf.xlu0
        %v1443 = vpop.trf.xlu0
        %v1444 = vpop.trf.xlu0
        %v1445 = vpop.trf.xlu0
        %v1446 = vpop.trf.xlu0
        %v1447 = vpop.trf.xlu0
        %v1448 = vpop.trf.xlu0
        %v1449 = vpop.trf.xlu0
        %v1450 = vpop.trf.xlu0
        %v1451 = vpop.trf.xlu0
        %v1452 = vpop.trf.xlu0
        %v1453 = vpop.trf.xlu0
        %v1454 = vpop.trf.xlu0
        %v1455 = vpop.trf.xlu0
        %v1456 = vpop.trf.xlu0
        %v1457 = vld [vmem:[%s1043] sm:$0x1]
        %1458 = vxpose.xlu0.b32.start [1/16] %v1457, 128
        %1459 = vxpose.xlu0.b32.cont [2/16] 0.0, 128
        %1460 = vxpose.xlu0.b32.cont [3/16] 0.0, 128
        %1461 = vxpose.xlu0.b32.cont [4/16] 0.0, 128
        %1462 = vxpose.xlu0.b32.cont [5/16] 0.0, 128
        %1463 = vxpose.xlu0.b32.cont [6/16] 0.0, 128
        %1464 = vxpose.xlu0.b32.cont [7/16] 0.0, 128
        %1465 = vxpose.xlu0.b32.cont [8/16] 0.0, 128
        %1466 = vxpose.xlu0.b32.cont [9/16] 0.0, 128
        %1467 = vxpose.xlu0.b32.cont [10/16] 0.0, 128
        %1468 = vxpose.xlu0.b32.cont [11/16] 0.0, 128
        %1469 = vxpose.xlu0.b32.cont [12/16] 0.0, 128
        %1470 = vxpose.xlu0.b32.cont [13/16] 0.0, 128
        %1471 = vxpose.xlu0.b32.cont [14/16] 0.0, 128
        %1472 = vxpose.xlu0.b32.cont [15/16] 0.0, 128
        %1473 = vxpose.xlu0.b32.end [16/16] 0.0, 128
        %v1474 = vpop.trf.xlu0
        %v1475 = vpop.trf.xlu0
        %v1476 = vpop.trf.xlu0
        %v1477 = vpop.trf.xlu0
        %v1478 = vpop.trf.xlu0
        %v1479 = vpop.trf.xlu0
        %v1480 = vpop.trf.xlu0
        %v1481 = vpop.trf.xlu0
        %v1482 = vpop.trf.xlu0
        %v1483 = vpop.trf.xlu0
        %v1484 = vpop.trf.xlu0
        %v1485 = vpop.trf.xlu0
        %v1486 = vpop.trf.xlu0
        %v1487 = vpop.trf.xlu0
        %v1488 = vpop.trf.xlu0
        %v1489 = vpop.trf.xlu0
        %v1490 = vld [vmem:[#allocation10] sm:$0xff]
        %v1491 = vadd.f32 %v1421, %v1490
        %1493 = vset.pattern.permute.xlu0 0
        %1494 = vperm.xlu0 %1493, %v1441
        %v1495 = vpop.permute.xlu0 %1494
        %v1497 = vmul.f32 %v1491, %v1495
        %v1498 = vld [vmem:[#allocation9] sm:$0xff]
        %v1499 = vld [vmem:[%s11] sm:$0x1]
        %v1500 = vld [vmem:[%s12] sm:$0x1]
        %v1501 = vsel %vm1285, %v1497, 0.0
        %1502 = vadd.xlane.f32.xlu0 %v1501
        %v1503 = vpop.xlane.xlu0 %1502
        %v1504 = vrcp.pop 32.0
        %v1505 = vmul.f32 %v1503, %v1504
        %v1506 = vsub.f32 %v1497, %v1505
        %v1507 = vmul.f32 %v1506, %v1506
        %v1508 = vsel %vm1285, %v1507, 0.0
        %1509 = vadd.xlane.f32.xlu0 %v1508
        %v1510 = vpop.xlane.xlu0 %1509
        %v1511 = vmul.f32 %v1510, %v1504
        %v1512 = vadd.f32 %v1511, 1e-08
        %v1513 = vrsqrt.pop %v1512
        %v1514 = vmul.f32 %v1506, %v1513
        %v1516 = vlaneseq
        %v1517 = vshrl.u32 %v1516, 7
        %v1518 = vsub.s32 0, %v1517
        %v1519 = vrot.slane %v1499, %v1518
        %v1521 = vmul.f32 %v1514, %v1519
        %v1523 = vlaneseq
        %v1524 = vshrl.u32 %v1523, 7
        %v1525 = vsub.s32 0, %v1524
        %v1526 = vrot.slane %v1500, %v1525
        %v1528 = vadd.f32 %v1521, %v1526
        %v1529 = vpack.c.bf16 %v1528, %v1528
        %v1530 = vld [vmem:[%s13] sm:$0xf]
        %v1531 = vld [vmem:[%s13 + $0x4] sm:$0xf]
        %v1532 = vld [vmem:[%s13 + $0x8] sm:$0xf]
        %v1533 = vld [vmem:[%s13 + $0xc] sm:$0xf]
        %v1534 = vld [vmem:[%s14] sm:$0x1]
        %v1536 = vlaneseq
        %v1537 = vshrl.u32 %v1536, 7
        %v1538 = vsub.s32 0, %v1537
        %v1539 = vrot.slane %v1534, %v1538
        %v1545 = vunpack.c.l.b16 %v1530
        %v1546 = vunpack.c.l.b16 %v1531
        %v1547 = vunpack.c.l.b16 %v1532
        %v1548 = vunpack.c.l.b16 %v1533
        %v1549 = vpack.c.b16 %v1546, %v1545
        %v1550 = vpack.c.b16 %v1548, %v1547
        %v1554 = vsel %vm1285, %v1529, 0
        %1556 = vmatprep.subr.bf16.mxu0 0
        %1557 = vmatpush1.bf16.msra.mxu0 0
        %1558 = vmatprep.subr.bf16.mxu0 0
        %1559 = vmatpush1.bf16.msra.mxu0 0
        %1560 = vmatprep.subr.bf16.mxu0 0
        %1561 = vmatpush1.bf16.msra.mxu0 0
        %1562 = vmatprep.subr.bf16.mxu0 0
        %1563 = vmatpush1.bf16.msra.mxu0 0
        %1564 = vmatprep.subr.bf16.mxu0 0
        %1565 = vmatpush1.bf16.msra.mxu0 0
        %1566 = vmatprep.subr.bf16.mxu0 0
        %1567 = vmatpush1.bf16.msra.mxu0 0
        %1568 = vmatprep.subr.bf16.mxu0 0
        %1569 = vmatpush1.bf16.msra.mxu0 %v1550
        %1570 = vmatprep.subr.bf16.mxu0 0
        %1571 = vmatpush1.bf16.msra.mxu0 %v1549
        %1572 = vmatprep.subr.bf16.mxu0 0
        %1573 = vmatpush2.bf16.msra.mxu0 0
        %1574 = vmatprep.subr.bf16.mxu0 0
        %1575 = vmatpush2.bf16.msra.mxu0 0
        %1576 = vmatprep.subr.bf16.mxu0 0
        %1577 = vmatpush2.bf16.msra.mxu0 0
        %1578 = vmatprep.subr.bf16.mxu0 0
        %1579 = vmatpush2.bf16.msra.mxu0 0
        %1580 = vmatprep.subr.bf16.mxu0 0
        %1581 = vmatpush2.bf16.msra.mxu0 0
        %1582 = vmatprep.subr.bf16.mxu0 0
        %1583 = vmatpush2.bf16.msra.mxu0 0
        %1584 = vmatprep.subr.bf16.mxu0 0
        %1585 = vmatpush2.bf16.msra.mxu0 0
        %1586 = vmatprep.subr.bf16.mxu0 0
        %1587 = vmatpush2.bf16.msra.mxu0 0
        %1588 = vmatprep.mubr.bf16.mxu0 0
        %1589 = vmatmul.mubr.bf16.gmra.mxu0 %v1554
        %v1590 = vpop.f32.mrf.mxu0
        %v1591 = vadd.f32 %v1539, %v1590
        %v1592 = vpop.f32.mrf.mxu0
        %v1593 = vpop.f32.mrf.mxu0
        %v1594 = vpop.f32.mrf.mxu0
        %1595 = vdwg.mxu0
        %v1596 = vld [vmem:[%s16] sm:$0x1]
        %v1598 = vlaneseq
        %v1599 = vshrl.u32 %v1598, 7
        %v1600 = vsub.s32 0, %v1599
        %v1601 = vrot.slane %v1596, %v1600
        %v1603 = vadd.f32 %v1601, 0.0
        %v1604 = vpack.c.bf16 %v1591, %v1591
        %1606 = vrot.lane.b32.xlu0 %v1604, 96
        %v1607 = vpop.permute.xlu0 %1606
        %vm1608 = vcmask 130048
        %v1610 = vsel %vm1608, %v1604, 0
        %v1613 = vsel %vm1608, %v1607, 0
        %1615 = vmatprep.subr.bf16.mxu0 0
        %1616 = vmatpush1.bf16.xpose.msra.mxu0 0
        %1617 = vmatprep.subr.bf16.mxu0 0
        %1618 = vmatpush1.bf16.xpose.msra.mxu0 0
        %1619 = vmatprep.subr.bf16.mxu0 0
        %1620 = vmatpush1.bf16.xpose.msra.mxu0 0
        %1621 = vmatprep.subr.bf16.mxu0 0
        %1622 = vmatpush1.bf16.xpose.msra.mxu0 0
        %1623 = vmatprep.subr.bf16.mxu0 0
        %1624 = vmatpush1.bf16.xpose.msra.mxu0 0
        %1625 = vmatprep.subr.bf16.mxu0 0
        %1626 = vmatpush1.bf16.xpose.msra.mxu0 0
        %1627 = vmatprep.subr.bf16.mxu0 0
        %1628 = vmatpush1.bf16.xpose.msra.mxu0 0
        %1629 = vmatprep.subr.bf16.mxu0 0
        %1630 = vmatpush1.bf16.xpose.msra.mxu0 %v1613
        %1631 = vmatprep.subr.bf16.mxu0 0
        %1632 = vmatpush2.bf16.xpose.msra.mxu0 0
        %1633 = vmatprep.subr.bf16.mxu0 0
        %1634 = vmatpush2.bf16.xpose.msra.mxu0 0
        %1635 = vmatprep.subr.bf16.mxu0 0
        %1636 = vmatpush2.bf16.xpose.msra.mxu0 0
        %1637 = vmatprep.subr.bf16.mxu0 0
        %1638 = vmatpush2.bf16.xpose.msra.mxu0 0
        %1639 = vmatprep.subr.bf16.mxu0 0
        %1640 = vmatpush2.bf16.xpose.msra.mxu0 0
        %1641 = vmatprep.subr.bf16.mxu0 0
        %1642 = vmatpush2.bf16.xpose.msra.mxu0 0
        %1643 = vmatprep.subr.bf16.mxu0 0
        %1644 = vmatpush2.bf16.xpose.msra.mxu0 0
        %1645 = vmatprep.subr.bf16.mxu0 0
        %1646 = vmatpush2.bf16.xpose.msra.mxu0 0
        %1647 = vmatprep.mubr.bf16.mxu0 0
        %1648 = vmatmul.mubr.bf16.gmra.mxu0 %v1610
        %v1649 = vpop.f32.mrf.mxu0
        %v1650 = vadd.f32 %v1498, %v1649
        %v1651 = vpop.f32.mrf.mxu0
        %v1652 = vpop.f32.mrf.mxu0
        %v1653 = vpop.f32.mrf.mxu0
        %1654 = vdwg.mxu0
        %vm1655 = vcmask 64512
        %v1656 = vsel %vm1655, %v1650, -inf
        %1657 = vmax.xlane.f32.xlu0 %v1656
        %v1658 = vpop.xlane.xlu0 %1657
        %v1659 = vsub.f32 %v1650, %v1658
        %v1660 = vmul.f32 %v1659, 1.442695
        %v1661 = vpow.pop %v1660
        %v1662 = vsel %vm1655, %v1661, 0.0
        %1663 = vadd.xlane.f32.xlu0 %v1662
        %v1664 = vpop.xlane.xlu0 %1663
        %v1665 = vrcp.pop %v1664
        %v1666 = vmul.f32 %v1661, %v1665
        %v1667 = vpack.c.bf16 %v1666, %v1666
        %1668 = vrot.lane.b32.xlu0 %v1604, 64
        %v1669 = vpop.permute.xlu0 %1668
        %v1671 = vsel %vm1655, %v1667, 0
        %vm1673 = vcmask 1043456
        %v1675 = vsel %vm1673, %v1669, 0
        %1677 = vmatprep.subr.bf16.mxu0 0
        %1678 = vmatpush1.bf16.msra.mxu0 0
        %1679 = vmatprep.subr.bf16.mxu0 0
        %1680 = vmatpush1.bf16.msra.mxu0 0
        %1681 = vmatprep.subr.bf16.mxu0 0
        %1682 = vmatpush1.bf16.msra.mxu0 0
        %1683 = vmatprep.subr.bf16.mxu0 0
        %1684 = vmatpush1.bf16.msra.mxu0 0
        %1685 = vmatprep.subr.bf16.mxu0 0
        %1686 = vmatpush1.bf16.msra.mxu0 0
        %1687 = vmatprep.subr.bf16.mxu0 0
        %1688 = vmatpush1.bf16.msra.mxu0 0
        %1689 = vmatprep.subr.bf16.mxu0 0
        %1690 = vmatpush1.bf16.msra.mxu0 0
        %1691 = vmatprep.subr.bf16.mxu0 0
        %1692 = vmatpush1.bf16.msra.mxu0 %v1675
        %1693 = vmatprep.subr.bf16.mxu0 0
        %1694 = vmatpush2.bf16.msra.mxu0 0
        %1695 = vmatprep.subr.bf16.mxu0 0
        %1696 = vmatpush2.bf16.msra.mxu0 0
        %1697 = vmatprep.subr.bf16.mxu0 0
        %1698 = vmatpush2.bf16.msra.mxu0 0
        %1699 = vmatprep.subr.bf16.mxu0 0
        %1700 = vmatpush2.bf16.msra.mxu0 0
        %1701 = vmatprep.subr.bf16.mxu0 0
        %1702 = vmatpush2.bf16.msra.mxu0 0
        %1703 = vmatprep.subr.bf16.mxu0 0
        %1704 = vmatpush2.bf16.msra.mxu0 0
        %1705 = vmatprep.subr.bf16.mxu0 0
        %1706 = vmatpush2.bf16.msra.mxu0 0
        %1707 = vmatprep.subr.bf16.mxu0 0
        %1708 = vmatpush2.bf16.msra.mxu0 0
        %1709 = vmatprep.mubr.bf16.mxu0 0
        %1710 = vmatmul.mubr.bf16.gmra.mxu0 %v1671
        %v1711 = vpop.f32.mrf.mxu0
        %v1712 = vadd.f32 0.0, %v1711
        %v1713 = vpop.f32.mrf.mxu0
        %v1714 = vpop.f32.mrf.mxu0
        %v1715 = vpop.f32.mrf.mxu0
        %1716 = vdwg.mxu0
        %v1717 = vpack.c.bf16 %v1712, %v1712
        %v1718 = vld [vmem:[#allocation18] sm:$0xf]
        %v1719 = vld [vmem:[#allocation18 + $0x4] sm:$0xf]
        %v1722 = vunpack.c.l.b16 %v1718
        %v1723 = vunpack.c.l.b16 %v1719
        %v1724 = vpack.c.b16 %v1723, %v1722
        %v1727 = vsel %vm1608, %v1717, 0
        %1729 = vmatprep.subr.bf16.mxu0 0
        %1730 = vmatpush1.bf16.msra.mxu0 0
        %1731 = vmatprep.subr.bf16.mxu0 0
        %1732 = vmatpush1.bf16.msra.mxu0 0
        %1733 = vmatprep.subr.bf16.mxu0 0
        %1734 = vmatpush1.bf16.msra.mxu0 0
        %1735 = vmatprep.subr.bf16.mxu0 0
        %1736 = vmatpush1.bf16.msra.mxu0 0
        %1737 = vmatprep.subr.bf16.mxu0 0
        %1738 = vmatpush1.bf16.msra.mxu0 0
        %1739 = vmatprep.subr.bf16.mxu0 0
        %1740 = vmatpush1.bf16.msra.mxu0 0
        %1741 = vmatprep.subr.bf16.mxu0 0
        %1742 = vmatpush1.bf16.msra.mxu0 0
        %1743 = vmatprep.subr.bf16.mxu0 0
        %1744 = vmatpush1.bf16.msra.mxu0 %v1724
        %1745 = vmatprep.subr.bf16.mxu0 0
        %1746 = vmatpush2.bf16.msra.mxu0 0
        %1747 = vmatprep.subr.bf16.mxu0 0
        %1748 = vmatpush2.bf16.msra.mxu0 0
        %1749 = vmatprep.subr.bf16.mxu0 0
        %1750 = vmatpush2.bf16.msra.mxu0 0
        %1751 = vmatprep.subr.bf16.mxu0 0
        %1752 = vmatpush2.bf16.msra.mxu0 0
        %1753 = vmatprep.subr.bf16.mxu0 0
        %1754 = vmatpush2.bf16.msra.mxu0 0
        %1755 = vmatprep.subr.bf16.mxu0 0
        %1756 = vmatpush2.bf16.msra.mxu0 0
        %1757 = vmatprep.subr.bf16.mxu0 0
        %1758 = vmatpush2.bf16.msra.mxu0 0
        %1759 = vmatprep.subr.bf16.mxu0 0
        %1760 = vmatpush2.bf16.msra.mxu0 0
        %1761 = vmatprep.mubr.bf16.mxu0 0
        %1762 = vmatmul.mubr.bf16.gmra.mxu0 %v1727
        %v1763 = vpop.f32.mrf.mxu0
        %v1764 = vadd.f32 0.0, %v1763
        %v1765 = vpop.f32.mrf.mxu0
        %v1766 = vpop.f32.mrf.mxu0
        %v1767 = vpop.f32.mrf.mxu0
        %1768 = vdwg.mxu0
        %v1769 = vadd.f32 %v1603, %v1764
        %1770 = vrot.lane.b32.xlu0 %v1604, 112
        %v1771 = vpop.permute.xlu0 %1770
        %1772 = vrot.lane.b32.xlu0 %v1604, 80
        %v1773 = vpop.permute.xlu0 %1772
        %v1775 = vsel %vm1608, %v1771, 0
        %v1778 = vsel %vm1608, %v1773, 0
        %1780 = vmatprep.subr.bf16.mxu0 0
        %1781 = vmatpush1.bf16.xpose.msra.mxu0 0
        %1782 = vmatprep.subr.bf16.mxu0 0
        %1783 = vmatpush1.bf16.xpose.msra.mxu0 0
        %1784 = vmatprep.subr.bf16.mxu0 0
        %1785 = vmatpush1.bf16.xpose.msra.mxu0 0
        %1786 = vmatprep.subr.bf16.mxu0 0
        %1787 = vmatpush1.bf16.xpose.msra.mxu0 0
        %1788 = vmatprep.subr.bf16.mxu0 0
        %1789 = vmatpush1.bf16.xpose.msra.mxu0 0
        %1790 = vmatprep.subr.bf16.mxu0 0
        %1791 = vmatpush1.bf16.xpose.msra.mxu0 0
        %1792 = vmatprep.subr.bf16.mxu0 0
        %1793 = vmatpush1.bf16.xpose.msra.mxu0 0
        %1794 = vmatprep.subr.bf16.mxu0 0
        %1795 = vmatpush1.bf16.xpose.msra.mxu0 %v1778
        %1796 = vmatprep.subr.bf16.mxu0 0
        %1797 = vmatpush2.bf16.xpose.msra.mxu0 0
        %1798 = vmatprep.subr.bf16.mxu0 0
        %1799 = vmatpush2.bf16.xpose.msra.mxu0 0
        %1800 = vmatprep.subr.bf16.mxu0 0
        %1801 = vmatpush2.bf16.xpose.msra.mxu0 0
        %1802 = vmatprep.subr.bf16.mxu0 0
        %1803 = vmatpush2.bf16.xpose.msra.mxu0 0
        %1804 = vmatprep.subr.bf16.mxu0 0
        %1805 = vmatpush2.bf16.xpose.msra.mxu0 0
        %1806 = vmatprep.subr.bf16.mxu0 0
        %1807 = vmatpush2.bf16.xpose.msra.mxu0 0
        %1808 = vmatprep.subr.bf16.mxu0 0
        %1809 = vmatpush2.bf16.xpose.msra.mxu0 0
        %1810 = vmatprep.subr.bf16.mxu0 0
        %1811 = vmatpush2.bf16.xpose.msra.mxu0 0
        %1812 = vmatprep.mubr.bf16.mxu0 0
        %1813 = vmatmul.mubr.bf16.gmra.mxu0 %v1775
        %v1814 = vpop.f32.mrf.mxu0
        %v1815 = vadd.f32 %v1498, %v1814
        %v1816 = vpop.f32.mrf.mxu0
        %v1817 = vpop.f32.mrf.mxu0
        %v1818 = vpop.f32.mrf.mxu0
        %1819 = vdwg.mxu0
        %v1820 = vsel %vm1655, %v1815, -inf
        %1821 = vmax.xlane.f32.xlu0 %v1820
        %v1822 = vpop.xlane.xlu0 %1821
        %v1823 = vsub.f32 %v1815, %v1822
        %v1824 = vmul.f32 %v1823, 1.442695
        %v1825 = vpow.pop %v1824
        %v1826 = vsel %vm1655, %v1825, 0.0
        %1827 = vadd.xlane.f32.xlu0 %v1826
        %v1828 = vpop.xlane.xlu0 %1827
        %v1829 = vrcp.pop %v1828
        %v1830 = vmul.f32 %v1825, %v1829
        %v1831 = vpack.c.bf16 %v1830, %v1830
        %1832 = vrot.lane.b32.xlu0 %v1604, 48
        %v1833 = vpop.permute.xlu0 %1832
        %v1835 = vsel %vm1655, %v1831, 0
        %v1838 = vsel %vm1673, %v1833, 0
        %1840 = vmatprep.subr.bf16.mxu0 0
        %1841 = vmatpush1.bf16.msra.mxu0 0
        %1842 = vmatprep.subr.bf16.mxu0 0
        %1843 = vmatpush1.bf16.msra.mxu0 0
        %1844 = vmatprep.subr.bf16.mxu0 0
        %1845 = vmatpush1.bf16.msra.mxu0 0
        %1846 = vmatprep.subr.bf16.mxu0 0
        %1847 = vmatpush1.bf16.msra.mxu0 0
        %1848 = vmatprep.subr.bf16.mxu0 0
        %1849 = vmatpush1.bf16.msra.mxu0 0
        %1850 = vmatprep.subr.bf16.mxu0 0
        %1851 = vmatpush1.bf16.msra.mxu0 0
        %1852 = vmatprep.subr.bf16.mxu0 0
        %1853 = vmatpush1.bf16.msra.mxu0 0
        %1854 = vmatprep.subr.bf16.mxu0 0
        %1855 = vmatpush1.bf16.msra.mxu0 %v1838
        %1856 = vmatprep.subr.bf16.mxu0 0
        %1857 = vmatpush2.bf16.msra.mxu0 0
        %1858 = vmatprep.subr.bf16.mxu0 0
        %1859 = vmatpush2.bf16.msra.mxu0 0
        %1860 = vmatprep.subr.bf16.mxu0 0
        %1861 = vmatpush2.bf16.msra.mxu0 0
        %1862 = vmatprep.subr.bf16.mxu0 0
        %1863 = vmatpush2.bf16.msra.mxu0 0
        %1864 = vmatprep.subr.bf16.mxu0 0
        %1865 = vmatpush2.bf16.msra.mxu0 0
        %1866 = vmatprep.subr.bf16.mxu0 0
        %1867 = vmatpush2.bf16.msra.mxu0 0
        %1868 = vmatprep.subr.bf16.mxu0 0
        %1869 = vmatpush2.bf16.msra.mxu0 0
        %1870 = vmatprep.subr.bf16.mxu0 0
        %1871 = vmatpush2.bf16.msra.mxu0 0
        %1872 = vmatprep.mubr.bf16.mxu0 0
        %1873 = vmatmul.mubr.bf16.gmra.mxu0 %v1835
        %v1874 = vpop.f32.mrf.mxu0
        %v1875 = vadd.f32 0.0, %v1874
        %v1876 = vpop.f32.mrf.mxu0
        %v1877 = vpop.f32.mrf.mxu0
        %v1878 = vpop.f32.mrf.mxu0
        %1879 = vdwg.mxu0
        %v1880 = vpack.c.bf16 %v1875, %v1875
        %s1881 = scalar_lea.vmem [#allocation18], 8
        %v1882 = vld [vmem:[%s1881] sm:$0xf]
        %v1883 = vld [vmem:[%s1881 + $0x4] sm:$0xf]
        %v1886 = vunpack.c.l.b16 %v1882
        %v1887 = vunpack.c.l.b16 %v1883
        %v1888 = vpack.c.b16 %v1887, %v1886
        %v1891 = vsel %vm1608, %v1880, 0
        %1893 = vmatprep.subr.bf16.mxu0 0
        %1894 = vmatpush1.bf16.msra.mxu0 0
        %1895 = vmatprep.subr.bf16.mxu0 0
        %1896 = vmatpush1.bf16.msra.mxu0 0
        %1897 = vmatprep.subr.bf16.mxu0 0
        %1898 = vmatpush1.bf16.msra.mxu0 0
        %1899 = vmatprep.subr.bf16.mxu0 0
        %1900 = vmatpush1.bf16.msra.mxu0 0
        %1901 = vmatprep.subr.bf16.mxu0 0
        %1902 = vmatpush1.bf16.msra.mxu0 0
        %1903 = vmatprep.subr.bf16.mxu0 0
        %1904 = vmatpush1.bf16.msra.mxu0 0
        %1905 = vmatprep.subr.bf16.mxu0 0
        %1906 = vmatpush1.bf16.msra.mxu0 0
        %1907 = vmatprep.subr.bf16.mxu0 0
        %1908 = vmatpush1.bf16.msra.mxu0 %v1888
        %1909 = vmatprep.subr.bf16.mxu0 0
        %1910 = vmatpush2.bf16.msra.mxu0 0
        %1911 = vmatprep.subr.bf16.mxu0 0
        %1912 = vmatpush2.bf16.msra.mxu0 0
        %1913 = vmatprep.subr.bf16.mxu0 0
        %1914 = vmatpush2.bf16.msra.mxu0 0
        %1915 = vmatprep.subr.bf16.mxu0 0
        %1916 = vmatpush2.bf16.msra.mxu0 0
        %1917 = vmatprep.subr.bf16.mxu0 0
        %1918 = vmatpush2.bf16.msra.mxu0 0
        %1919 = vmatprep.subr.bf16.mxu0 0
        %1920 = vmatpush2.bf16.msra.mxu0 0
        %1921 = vmatprep.subr.bf16.mxu0 0
        %1922 = vmatpush2.bf16.msra.mxu0 0
        %1923 = vmatprep.subr.bf16.mxu0 0
        %1924 = vmatpush2.bf16.msra.mxu0 0
        %1925 = vmatprep.mubr.bf16.mxu0 0
        %1926 = vmatmul.mubr.bf16.gmra.mxu0 %v1891
        %v1927 = vpop.f32.mrf.mxu0
        %v1928 = vadd.f32 0.0, %v1927
        %v1929 = vpop.f32.mrf.mxu0
        %v1930 = vpop.f32.mrf.mxu0
        %v1931 = vpop.f32.mrf.mxu0
        %1932 = vdwg.mxu0
        %v1933 = vadd.f32 %v1769, %v1928
        %v1934 = vadd.f32 %v1497, %v1933
        %v1935 = vld [vmem:[%s17] sm:$0x1]
        %v1936 = vld [vmem:[%s18] sm:$0x1]
        %v1937 = vsel %vm1285, %v1934, 0.0
        %1938 = vadd.xlane.f32.xlu0 %v1937
        %v1939 = vpop.xlane.xlu0 %1938
        %v1940 = vmul.f32 %v1939, %v1504
        %v1941 = vsub.f32 %v1934, %v1940
        %v1942 = vmul.f32 %v1941, %v1941
        %v1943 = vsel %vm1285, %v1942, 0.0
        %1944 = vadd.xlane.f32.xlu0 %v1943
        %v1945 = vpop.xlane.xlu0 %1944
        %v1946 = vmul.f32 %v1945, %v1504
        %v1947 = vadd.f32 %v1946, 1e-08
        %v1948 = vrsqrt.pop %v1947
        %v1949 = vmul.f32 %v1941, %v1948
        %v1951 = vlaneseq
        %v1952 = vshrl.u32 %v1951, 7
        %v1953 = vsub.s32 0, %v1952
        %v1954 = vrot.slane %v1935, %v1953
        %v1956 = vmul.f32 %v1949, %v1954
        %v1958 = vlaneseq
        %v1959 = vshrl.u32 %v1958, 7
        %v1960 = vsub.s32 0, %v1959
        %v1961 = vrot.slane %v1936, %v1960
        %v1963 = vadd.f32 %v1956, %v1961
        %v1964 = vpack.c.bf16 %v1963, %v1963
        %v1965 = vld [vmem:[#allocation19] sm:$0xf]
        %v1966 = vld [vmem:[#allocation19 + $0x4] sm:$0xf]
        %v1967 = vld [vmem:[#allocation19 + $0x8] sm:$0xf]
        %v1968 = vld [vmem:[#allocation19 + $0xc] sm:$0xf]
        %v1969 = vld [vmem:[%s20] sm:$0x1]
        %v1971 = vlaneseq
        %v1972 = vshrl.u32 %v1971, 7
        %v1973 = vsub.s32 0, %v1972
        %v1974 = vrot.slane %v1969, %v1973
        %v1980 = vunpack.c.l.b16 %v1965
        %v1981 = vunpack.c.l.b16 %v1966
        %v1982 = vunpack.c.l.b16 %v1967
        %v1983 = vunpack.c.l.b16 %v1968
        %v1984 = vpack.c.b16 %v1981, %v1980
        %v1985 = vpack.c.b16 %v1983, %v1982
        %v1989 = vsel %vm1285, %v1964, 0
        %1991 = vmatprep.subr.bf16.mxu0 0
        %1992 = vmatpush1.bf16.msra.mxu0 0
        %1993 = vmatprep.subr.bf16.mxu0 0
        %1994 = vmatpush1.bf16.msra.mxu0 0
        %1995 = vmatprep.subr.bf16.mxu0 0
        %1996 = vmatpush1.bf16.msra.mxu0 0
        %1997 = vmatprep.subr.bf16.mxu0 0
        %1998 = vmatpush1.bf16.msra.mxu0 0
        %1999 = vmatprep.subr.bf16.mxu0 0
        %2000 = vmatpush1.bf16.msra.mxu0 0
        %2001 = vmatprep.subr.bf16.mxu0 0
        %2002 = vmatpush1.bf16.msra.mxu0 0
        %2003 = vmatprep.subr.bf16.mxu0 0
        %2004 = vmatpush1.bf16.msra.mxu0 %v1985
        %2005 = vmatprep.subr.bf16.mxu0 0
        %2006 = vmatpush1.bf16.msra.mxu0 %v1984
        %2007 = vmatprep.subr.bf16.mxu0 0
        %2008 = vmatpush2.bf16.msra.mxu0 0
        %2009 = vmatprep.subr.bf16.mxu0 0
        %2010 = vmatpush2.bf16.msra.mxu0 0
        %2011 = vmatprep.subr.bf16.mxu0 0
        %2012 = vmatpush2.bf16.msra.mxu0 0
        %2013 = vmatprep.subr.bf16.mxu0 0
        %2014 = vmatpush2.bf16.msra.mxu0 0
        %2015 = vmatprep.subr.bf16.mxu0 0
        %2016 = vmatpush2.bf16.msra.mxu0 0
        %2017 = vmatprep.subr.bf16.mxu0 0
        %2018 = vmatpush2.bf16.msra.mxu0 0
        %2019 = vmatprep.subr.bf16.mxu0 0
        %2020 = vmatpush2.bf16.msra.mxu0 0
        %2021 = vmatprep.subr.bf16.mxu0 0
        %2022 = vmatpush2.bf16.msra.mxu0 0
        %2023 = vmatprep.mubr.bf16.mxu0 0
        %2024 = vmatmul.mubr.bf16.gmra.mxu0 %v1989
        %v2025 = vpop.f32.mrf.mxu0
        %v2026 = vadd.f32 %v1974, %v2025
        %v2027 = vpop.f32.mrf.mxu0
        %v2028 = vpop.f32.mrf.mxu0
        %v2029 = vpop.f32.mrf.mxu0
        %2030 = vdwg.mxu0
        %v2031 = vmul.f32 %v2026, 0.5
        %v2032 = vmul.f32 %v2026, 0.044715
        %v2033 = vmul.f32 %v2032, %v2026
        %v2034 = vmul.f32 %v2033, %v2026
        %v2035 = vadd.f32 %v2026, %v2034
        %v2036 = vmul.f32 %v2035, 0.7978846
        %v2037 = vtanh.pop %v2036
        %v2038 = vadd.f32 %v2037, 1.0
        %v2039 = vmul.f32 %v2031, %v2038
        %v2040 = vpack.c.bf16 %v2039, %v2039
        %v2041 = vld [vmem:[#allocation21] sm:$0xf]
        %v2042 = vld [vmem:[#allocation21 + $0x4] sm:$0xf]
        %v2043 = vld [vmem:[#allocation21 + $0x8] sm:$0xf]
        %v2044 = vld [vmem:[#allocation21 + $0xc] sm:$0xf]
        %v2045 = vld [vmem:[%s22] sm:$0x1]
        %v2047 = vlaneseq
        %v2048 = vshrl.u32 %v2047, 7
        %v2049 = vsub.s32 0, %v2048
        %v2050 = vrot.slane %v2045, %v2049
        %v2056 = vunpack.c.l.b16 %v2041
        %v2057 = vunpack.c.l.b16 %v2042
        %v2058 = vunpack.c.l.b16 %v2043
        %v2059 = vunpack.c.l.b16 %v2044
        %v2060 = vpack.c.b16 %v2057, %v2056
        %v2061 = vpack.c.b16 %v2059, %v2058
        %v2065 = vsel %vm1285, %v2040, 0
        %2067 = vmatprep.subr.bf16.mxu0 0
        %2068 = vmatpush1.bf16.msra.mxu0 0
        %2069 = vmatprep.subr.bf16.mxu0 0
        %2070 = vmatpush1.bf16.msra.mxu0 0
        %2071 = vmatprep.subr.bf16.mxu0 0
        %2072 = vmatpush1.bf16.msra.mxu0 0
        %2073 = vmatprep.subr.bf16.mxu0 0
        %2074 = vmatpush1.bf16.msra.mxu0 0
        %2075 = vmatprep.subr.bf16.mxu0 0
        %2076 = vmatpush1.bf16.msra.mxu0 0
        %2077 = vmatprep.subr.bf16.mxu0 0
        %2078 = vmatpush1.bf16.msra.mxu0 0
        %2079 = vmatprep.subr.bf16.mxu0 0
        %2080 = vmatpush1.bf16.msra.mxu0 %v2061
        %2081 = vmatprep.subr.bf16.mxu0 0
        %2082 = vmatpush1.bf16.msra.mxu0 %v2060
        %2083 = vmatprep.subr.bf16.mxu0 0
        %2084 = vmatpush2.bf16.msra.mxu0 0
        %2085 = vmatprep.subr.bf16.mxu0 0
        %2086 = vmatpush2.bf16.msra.mxu0 0
        %2087 = vmatprep.subr.bf16.mxu0 0
        %2088 = vmatpush2.bf16.msra.mxu0 0
        %2089 = vmatprep.subr.bf16.mxu0 0
        %2090 = vmatpush2.bf16.msra.mxu0 0
        %2091 = vmatprep.subr.bf16.mxu0 0
        %2092 = vmatpush2.bf16.msra.mxu0 0
        %2093 = vmatprep.subr.bf16.mxu0 0
        %2094 = vmatpush2.bf16.msra.mxu0 0
        %2095 = vmatprep.subr.bf16.mxu0 0
        %2096 = vmatpush2.bf16.msra.mxu0 0
        %2097 = vmatprep.subr.bf16.mxu0 0
        %2098 = vmatpush2.bf16.msra.mxu0 0
        %2099 = vmatprep.mubr.bf16.mxu0 0
        %2100 = vmatmul.mubr.bf16.gmra.mxu0 %v2065
        %v2101 = vpop.f32.mrf.mxu0
        %v2102 = vadd.f32 %v2050, %v2101
        %v2103 = vpop.f32.mrf.mxu0
        %v2104 = vpop.f32.mrf.mxu0
        %v2105 = vpop.f32.mrf.mxu0
        %2106 = vdwg.mxu0
        %v2107 = vadd.f32 %v1934, %v2102
        %v2108 = vmul.f32 %v2107, %v1495
        %s2109 = scalar_lea.vmem %s11, 1
        %v2110 = vld [vmem:[%s2109] sm:$0x1]
        %s2111 = scalar_lea.vmem %s12, 1
        %v2112 = vld [vmem:[%s2111] sm:$0x1]
        %v2113 = vsel %vm1285, %v2108, 0.0
        %2114 = vadd.xlane.f32.xlu0 %v2113
        %v2115 = vpop.xlane.xlu0 %2114
        %v2116 = vmul.f32 %v2115, %v1504
        %v2117 = vsub.f32 %v2108, %v2116
        %v2118 = vmul.f32 %v2117, %v2117
        %v2119 = vsel %vm1285, %v2118, 0.0
        %2120 = vadd.xlane.f32.xlu0 %v2119
        %v2121 = vpop.xlane.xlu0 %2120
        %v2122 = vmul.f32 %v2121, %v1504
        %v2123 = vadd.f32 %v2122, 1e-08
        %v2124 = vrsqrt.pop %v2123
        %v2125 = vmul.f32 %v2117, %v2124
        %v2127 = vlaneseq
        %v2128 = vshrl.u32 %v2127, 7
        %v2129 = vsub.s32 0, %v2128
        %v2130 = vrot.slane %v2110, %v2129
        %v2132 = vmul.f32 %v2125, %v2130
        %v2134 = vlaneseq
        %v2135 = vshrl.u32 %v2134, 7
        %v2136 = vsub.s32 0, %v2135
        %v2137 = vrot.slane %v2112, %v2136
        %v2139 = vadd.f32 %v2132, %v2137
        %v2140 = vpack.c.bf16 %v2139, %v2139
        %s2141 = scalar_lea.vmem %s13, 16
        %v2142 = vld [vmem:[%s2141] sm:$0xf]
        %v2143 = vld [vmem:[%s2141 + $0x4] sm:$0xf]
        %v2144 = vld [vmem:[%s2141 + $0x8] sm:$0xf]
        %v2145 = vld [vmem:[%s2141 + $0xc] sm:$0xf]
        %s2146 = scalar_lea.vmem %s14, 1
        %v2147 = vld [vmem:[%s2146] sm:$0x1]
        %v2149 = vlaneseq
        %v2150 = vshrl.u32 %v2149, 7
        %v2151 = vsub.s32 0, %v2150
        %v2152 = vrot.slane %v2147, %v2151
        %v2158 = vunpack.c.l.b16 %v2142
        %v2159 = vunpack.c.l.b16 %v2143
        %v2160 = vunpack.c.l.b16 %v2144
        %v2161 = vunpack.c.l.b16 %v2145
        %v2162 = vpack.c.b16 %v2159, %v2158
        %v2163 = vpack.c.b16 %v2161, %v2160
        %v2167 = vsel %vm1285, %v2140, 0
        %2169 = vmatprep.subr.bf16.mxu0 0
        %2170 = vmatpush1.bf16.msra.mxu0 0
        %2171 = vmatprep.subr.bf16.mxu0 0
        %2172 = vmatpush1.bf16.msra.mxu0 0
        %2173 = vmatprep.subr.bf16.mxu0 0
        %2174 = vmatpush1.bf16.msra.mxu0 0
        %2175 = vmatprep.subr.bf16.mxu0 0
        %2176 = vmatpush1.bf16.msra.mxu0 0
        %2177 = vmatprep.subr.bf16.mxu0 0
        %2178 = vmatpush1.bf16.msra.mxu0 0
        %2179 = vmatprep.subr.bf16.mxu0 0
        %2180 = vmatpush1.bf16.msra.mxu0 0
        %2181 = vmatprep.subr.bf16.mxu0 0
        %2182 = vmatpush1.bf16.msra.mxu0 %v2163
        %2183 = vmatprep.subr.bf16.mxu0 0
        %2184 = vmatpush1.bf16.msra.mxu0 %v2162
        %2185 = vmatprep.subr.bf16.mxu0 0
        %2186 = vmatpush2.bf16.msra.mxu0 0
        %2187 = vmatprep.subr.bf16.mxu0 0
        %2188 = vmatpush2.bf16.msra.mxu0 0
        %2189 = vmatprep.subr.bf16.mxu0 0
        %2190 = vmatpush2.bf16.msra.mxu0 0
        %2191 = vmatprep.subr.bf16.mxu0 0
        %2192 = vmatpush2.bf16.msra.mxu0 0
        %2193 = vmatprep.subr.bf16.mxu0 0
        %2194 = vmatpush2.bf16.msra.mxu0 0
        %2195 = vmatprep.subr.bf16.mxu0 0
        %2196 = vmatpush2.bf16.msra.mxu0 0
        %2197 = vmatprep.subr.bf16.mxu0 0
        %2198 = vmatpush2.bf16.msra.mxu0 0
        %2199 = vmatprep.subr.bf16.mxu0 0
        %2200 = vmatpush2.bf16.msra.mxu0 0
        %2201 = vmatprep.mubr.bf16.mxu0 0
        %2202 = vmatmul.mubr.bf16.gmra.mxu0 %v2167
        %v2203 = vpop.f32.mrf.mxu0
        %v2204 = vadd.f32 %v2152, %v2203
        %v2205 = vpop.f32.mrf.mxu0
        %v2206 = vpop.f32.mrf.mxu0
        %v2207 = vpop.f32.mrf.mxu0
        %2208 = vdwg.mxu0
        %s2209 = scalar_lea.vmem %s16, 1
        %v2210 = vld [vmem:[%s2209] sm:$0x1]
        %v2212 = vlaneseq
        %v2213 = vshrl.u32 %v2212, 7
        %v2214 = vsub.s32 0, %v2213
        %v2215 = vrot.slane %v2210, %v2214
        %v2217 = vadd.f32 %v2215, 0.0
        %v2218 = vpack.c.bf16 %v2204, %v2204
        %2220 = vrot.lane.b32.xlu0 %v2218, 96
        %v2221 = vpop.permute.xlu0 %2220
        %v2223 = vsel %vm1608, %v2218, 0
        %v2226 = vsel %vm1608, %v2221, 0
        %2228 = vmatprep.subr.bf16.mxu0 0
        %2229 = vmatpush1.bf16.xpose.msra.mxu0 0
        %2230 = vmatprep.subr.bf16.mxu0 0
        %2231 = vmatpush1.bf16.xpose.msra.mxu0 0
        %2232 = vmatprep.subr.bf16.mxu0 0
        %2233 = vmatpush1.bf16.xpose.msra.mxu0 0
        %2234 = vmatprep.subr.bf16.mxu0 0
        %2235 = vmatpush1.bf16.xpose.msra.mxu0 0
        %2236 = vmatprep.subr.bf16.mxu0 0
        %2237 = vmatpush1.bf16.xpose.msra.mxu0 0
        %2238 = vmatprep.subr.bf16.mxu0 0
        %2239 = vmatpush1.bf16.xpose.msra.mxu0 0
        %2240 = vmatprep.subr.bf16.mxu0 0
        %2241 = vmatpush1.bf16.xpose.msra.mxu0 0
        %2242 = vmatprep.subr.bf16.mxu0 0
        %2243 = vmatpush1.bf16.xpose.msra.mxu0 %v2226
        %2244 = vmatprep.subr.bf16.mxu0 0
        %2245 = vmatpush2.bf16.xpose.msra.mxu0 0
        %2246 = vmatprep.subr.bf16.mxu0 0
        %2247 = vmatpush2.bf16.xpose.msra.mxu0 0
        %2248 = vmatprep.subr.bf16.mxu0 0
        %2249 = vmatpush2.bf16.xpose.msra.mxu0 0
        %2250 = vmatprep.subr.bf16.mxu0 0
        %2251 = vmatpush2.bf16.xpose.msra.mxu0 0
        %2252 = vmatprep.subr.bf16.mxu0 0
        %2253 = vmatpush2.bf16.xpose.msra.mxu0 0
        %2254 = vmatprep.subr.bf16.mxu0 0
        %2255 = vmatpush2.bf16.xpose.msra.mxu0 0
        %2256 = vmatprep.subr.bf16.mxu0 0
        %2257 = vmatpush2.bf16.xpose.msra.mxu0 0
        %2258 = vmatprep.subr.bf16.mxu0 0
        %2259 = vmatpush2.bf16.xpose.msra.mxu0 0
        %2260 = vmatprep.mubr.bf16.mxu0 0
        %2261 = vmatmul.mubr.bf16.gmra.mxu0 %v2223
        %v2262 = vpop.f32.mrf.mxu0
        %v2263 = vadd.f32 %v1498, %v2262
        %v2264 = vpop.f32.mrf.mxu0
        %v2265 = vpop.f32.mrf.mxu0
        %v2266 = vpop.f32.mrf.mxu0
        %2267 = vdwg.mxu0
        %v2268 = vsel %vm1655, %v2263, -inf
        %2269 = vmax.xlane.f32.xlu0 %v2268
        %v2270 = vpop.xlane.xlu0 %2269
        %v2271 = vsub.f32 %v2263, %v2270
        %v2272 = vmul.f32 %v2271, 1.442695
        %v2273 = vpow.pop %v2272
        %v2274 = vsel %vm1655, %v2273, 0.0
        %2275 = vadd.xlane.f32.xlu0 %v2274
        %v2276 = vpop.xlane.xlu0 %2275
        %v2277 = vrcp.pop %v2276
        %v2278 = vmul.f32 %v2273, %v2277
        %v2279 = vpack.c.bf16 %v2278, %v2278
        %2280 = vrot.lane.b32.xlu0 %v2218, 64
        %v2281 = vpop.permute.xlu0 %2280
        %v2283 = vsel %vm1655, %v2279, 0
        %v2286 = vsel %vm1673, %v2281, 0
        %2288 = vmatprep.subr.bf16.mxu0 0
        %2289 = vmatpush1.bf16.msra.mxu0 0
        %2290 = vmatprep.subr.bf16.mxu0 0
        %2291 = vmatpush1.bf16.msra.mxu0 0
        %2292 = vmatprep.subr.bf16.mxu0 0
        %2293 = vmatpush1.bf16.msra.mxu0 0
        %2294 = vmatprep.subr.bf16.mxu0 0
        %2295 = vmatpush1.bf16.msra.mxu0 0
        %2296 = vmatprep.subr.bf16.mxu0 0
        %2297 = vmatpush1.bf16.msra.mxu0 0
        %2298 = vmatprep.subr.bf16.mxu0 0
        %2299 = vmatpush1.bf16.msra.mxu0 0
        %2300 = vmatprep.subr.bf16.mxu0 0
        %2301 = vmatpush1.bf16.msra.mxu0 0
        %2302 = vmatprep.subr.bf16.mxu0 0
        %2303 = vmatpush1.bf16.msra.mxu0 %v2286
        %2304 = vmatprep.subr.bf16.mxu0 0
        %2305 = vmatpush2.bf16.msra.mxu0 0
        %2306 = vmatprep.subr.bf16.mxu0 0
        %2307 = vmatpush2.bf16.msra.mxu0 0
        %2308 = vmatprep.subr.bf16.mxu0 0
        %2309 = vmatpush2.bf16.msra.mxu0 0
        %2310 = vmatprep.subr.bf16.mxu0 0
        %2311 = vmatpush2.bf16.msra.mxu0 0
        %2312 = vmatprep.subr.bf16.mxu0 0
        %2313 = vmatpush2.bf16.msra.mxu0 0
        %2314 = vmatprep.subr.bf16.mxu0 0
        %2315 = vmatpush2.bf16.msra.mxu0 0
        %2316 = vmatprep.subr.bf16.mxu0 0
        %2317 = vmatpush2.bf16.msra.mxu0 0
        %2318 = vmatprep.subr.bf16.mxu0 0
        %2319 = vmatpush2.bf16.msra.mxu0 0
        %2320 = vmatprep.mubr.bf16.mxu0 0
        %2321 = vmatmul.mubr.bf16.gmra.mxu0 %v2283
        %v2322 = vpop.f32.mrf.mxu0
        %v2323 = vadd.f32 0.0, %v2322
        %v2324 = vpop.f32.mrf.mxu0
        %v2325 = vpop.f32.mrf.mxu0
        %v2326 = vpop.f32.mrf.mxu0
        %2327 = vdwg.mxu0
        %v2328 = vpack.c.bf16 %v2323, %v2323
        %s2329 = scalar_lea.vmem [#allocation18], 16
        %v2330 = vld [vmem:[%s2329] sm:$0xf]
        %v2331 = vld [vmem:[%s2329 + $0x4] sm:$0xf]
        %v2334 = vunpack.c.l.b16 %v2330
        %v2335 = vunpack.c.l.b16 %v2331
        %v2336 = vpack.c.b16 %v2335, %v2334
        %v2339 = vsel %vm1608, %v2328, 0
        %2341 = vmatprep.subr.bf16.mxu0 0
        %2342 = vmatpush1.bf16.msra.mxu0 0
        %2343 = vmatprep.subr.bf16.mxu0 0
        %2344 = vmatpush1.bf16.msra.mxu0 0
        %2345 = vmatprep.subr.bf16.mxu0 0
        %2346 = vmatpush1.bf16.msra.mxu0 0
        %2347 = vmatprep.subr.bf16.mxu0 0
        %2348 = vmatpush1.bf16.msra.mxu0 0
        %2349 = vmatprep.subr.bf16.mxu0 0
        %2350 = vmatpush1.bf16.msra.mxu0 0
        %2351 = vmatprep.subr.bf16.mxu0 0
        %2352 = vmatpush1.bf16.msra.mxu0 0
        %2353 = vmatprep.subr.bf16.mxu0 0
        %2354 = vmatpush1.bf16.msra.mxu0 0
        %2355 = vmatprep.subr.bf16.mxu0 0
        %2356 = vmatpush1.bf16.msra.mxu0 %v2336
        %2357 = vmatprep.subr.bf16.mxu0 0
        %2358 = vmatpush2.bf16.msra.mxu0 0
        %2359 = vmatprep.subr.bf16.mxu0 0
        %2360 = vmatpush2.bf16.msra.mxu0 0
        %2361 = vmatprep.subr.bf16.mxu0 0
        %2362 = vmatpush2.bf16.msra.mxu0 0
        %2363 = vmatprep.subr.bf16.mxu0 0
        %2364 = vmatpush2.bf16.msra.mxu0 0
        %2365 = vmatprep.subr.bf16.mxu0 0
        %2366 = vmatpush2.bf16.msra.mxu0 0
        %2367 = vmatprep.subr.bf16.mxu0 0
        %2368 = vmatpush2.bf16.msra.mxu0 0
        %2369 = vmatprep.subr.bf16.mxu0 0
        %2370 = vmatpush2.bf16.msra.mxu0 0
        %2371 = vmatprep.subr.bf16.mxu0 0
        %2372 = vmatpush2.bf16.msra.mxu0 0
        %2373 = vmatprep.mubr.bf16.mxu0 0
        %2374 = vmatmul.mubr.bf16.gmra.mxu0 %v2339
        %v2375 = vpop.f32.mrf.mxu0
        %v2376 = vadd.f32 0.0, %v2375
        %v2377 = vpop.f32.mrf.mxu0
        %v2378 = vpop.f32.mrf.mxu0
        %v2379 = vpop.f32.mrf.mxu0
        %2380 = vdwg.mxu0
        %v2381 = vadd.f32 %v2217, %v2376
        %2382 = vrot.lane.b32.xlu0 %v2218, 112
        %v2383 = vpop.permute.xlu0 %2382
        %2384 = vrot.lane.b32.xlu0 %v2218, 80
        %v2385 = vpop.permute.xlu0 %2384
        %v2387 = vsel %vm1608, %v2383, 0
        %v2390 = vsel %vm1608, %v2385, 0
        %2392 = vmatprep.subr.bf16.mxu0 0
        %2393 = vmatpush1.bf16.xpose.msra.mxu0 0
        %2394 = vmatprep.subr.bf16.mxu0 0
        %2395 = vmatpush1.bf16.xpose.msra.mxu0 0
        %2396 = vmatprep.subr.bf16.mxu0 0
        %2397 = vmatpush1.bf16.xpose.msra.mxu0 0
        %2398 = vmatprep.subr.bf16.mxu0 0
        %2399 = vmatpush1.bf16.xpose.msra.mxu0 0
        %2400 = vmatprep.subr.bf16.mxu0 0
        %2401 = vmatpush1.bf16.xpose.msra.mxu0 0
        %2402 = vmatprep.subr.bf16.mxu0 0
        %2403 = vmatpush1.bf16.xpose.msra.mxu0 0
        %2404 = vmatprep.subr.bf16.mxu0 0
        %2405 = vmatpush1.bf16.xpose.msra.mxu0 0
        %2406 = vmatprep.subr.bf16.mxu0 0
        %2407 = vmatpush1.bf16.xpose.msra.mxu0 %v2390
        %2408 = vmatprep.subr.bf16.mxu0 0
        %2409 = vmatpush2.bf16.xpose.msra.mxu0 0
        %2410 = vmatprep.subr.bf16.mxu0 0
        %2411 = vmatpush2.bf16.xpose.msra.mxu0 0
        %2412 = vmatprep.subr.bf16.mxu0 0
        %2413 = vmatpush2.bf16.xpose.msra.mxu0 0
        %2414 = vmatprep.subr.bf16.mxu0 0
        %2415 = vmatpush2.bf16.xpose.msra.mxu0 0
        %2416 = vmatprep.subr.bf16.mxu0 0
        %2417 = vmatpush2.bf16.xpose.msra.mxu0 0
        %2418 = vmatprep.subr.bf16.mxu0 0
        %2419 = vmatpush2.bf16.xpose.msra.mxu0 0
        %2420 = vmatprep.subr.bf16.mxu0 0
        %2421 = vmatpush2.bf16.xpose.msra.mxu0 0
        %2422 = vmatprep.subr.bf16.mxu0 0
        %2423 = vmatpush2.bf16.xpose.msra.mxu0 0
        %2424 = vmatprep.mubr.bf16.mxu0 0
        %2425 = vmatmul.mubr.bf16.gmra.mxu0 %v2387
        %v2426 = vpop.f32.mrf.mxu0
        %v2427 = vadd.f32 %v1498, %v2426
        %v2428 = vpop.f32.mrf.mxu0
        %v2429 = vpop.f32.mrf.mxu0
        %v2430 = vpop.f32.mrf.mxu0
        %2431 = vdwg.mxu0
        %v2432 = vsel %vm1655, %v2427, -inf
        %2433 = vmax.xlane.f32.xlu0 %v2432
        %v2434 = vpop.xlane.xlu0 %2433
        %v2435 = vsub.f32 %v2427, %v2434
        %v2436 = vmul.f32 %v2435, 1.442695
        %v2437 = vpow.pop %v2436
        %v2438 = vsel %vm1655, %v2437, 0.0
        %2439 = vadd.xlane.f32.xlu0 %v2438
        %v2440 = vpop.xlane.xlu0 %2439
        %v2441 = vrcp.pop %v2440
        %v2442 = vmul.f32 %v2437, %v2441
        %v2443 = vpack.c.bf16 %v2442, %v2442
        %2444 = vrot.lane.b32.xlu0 %v2218, 48
        %v2445 = vpop.permute.xlu0 %2444
        %v2447 = vsel %vm1655, %v2443, 0
        %v2450 = vsel %vm1673, %v2445, 0
        %2452 = vmatprep.subr.bf16.mxu0 0
        %2453 = vmatpush1.bf16.msra.mxu0 0
        %2454 = vmatprep.subr.bf16.mxu0 0
        %2455 = vmatpush1.bf16.msra.mxu0 0
        %2456 = vmatprep.subr.bf16.mxu0 0
        %2457 = vmatpush1.bf16.msra.mxu0 0
        %2458 = vmatprep.subr.bf16.mxu0 0
        %2459 = vmatpush1.bf16.msra.mxu0 0
        %2460 = vmatprep.subr.bf16.mxu0 0
        %2461 = vmatpush1.bf16.msra.mxu0 0
        %2462 = vmatprep.subr.bf16.mxu0 0
        %2463 = vmatpush1.bf16.msra.mxu0 0
        %2464 = vmatprep.subr.bf16.mxu0 0
        %2465 = vmatpush1.bf16.msra.mxu0 0
        %2466 = vmatprep.subr.bf16.mxu0 0
        %2467 = vmatpush1.bf16.msra.mxu0 %v2450
        %2468 = vmatprep.subr.bf16.mxu0 0
        %2469 = vmatpush2.bf16.msra.mxu0 0
        %2470 = vmatprep.subr.bf16.mxu0 0
        %2471 = vmatpush2.bf16.msra.mxu0 0
        %2472 = vmatprep.subr.bf16.mxu0 0
        %2473 = vmatpush2.bf16.msra.mxu0 0
        %2474 = vmatprep.subr.bf16.mxu0 0
        %2475 = vmatpush2.bf16.msra.mxu0 0
        %2476 = vmatprep.subr.bf16.mxu0 0
        %2477 = vmatpush2.bf16.msra.mxu0 0
        %2478 = vmatprep.subr.bf16.mxu0 0
        %2479 = vmatpush2.bf16.msra.mxu0 0
        %2480 = vmatprep.subr.bf16.mxu0 0
        %2481 = vmatpush2.bf16.msra.mxu0 0
        %2482 = vmatprep.subr.bf16.mxu0 0
        %2483 = vmatpush2.bf16.msra.mxu0 0
        %2484 = vmatprep.mubr.bf16.mxu0 0
        %2485 = vmatmul.mubr.bf16.gmra.mxu0 %v2447
        %v2486 = vpop.f32.mrf.mxu0
        %v2487 = vadd.f32 0.0, %v2486
        %v2488 = vpop.f32.mrf.mxu0
        %v2489 = vpop.f32.mrf.mxu0
        %v2490 = vpop.f32.mrf.mxu0
        %2491 = vdwg.mxu0
        %v2492 = vpack.c.bf16 %v2487, %v2487
        %s2493 = scalar_lea.vmem [#allocation18], 24
        %v2494 = vld [vmem:[%s2493] sm:$0xf]
        %v2495 = vld [vmem:[%s2493 + $0x4] sm:$0xf]
        %v2498 = vunpack.c.l.b16 %v2494
        %v2499 = vunpack.c.l.b16 %v2495
        %v2500 = vpack.c.b16 %v2499, %v2498
        %v2503 = vsel %vm1608, %v2492, 0
        %2505 = vmatprep.subr.bf16.mxu0 0
        %2506 = vmatpush1.bf16.msra.mxu0 0
        %2507 = vmatprep.subr.bf16.mxu0 0
        %2508 = vmatpush1.bf16.msra.mxu0 0
        %2509 = vmatprep.subr.bf16.mxu0 0
        %2510 = vmatpush1.bf16.msra.mxu0 0
        %2511 = vmatprep.subr.bf16.mxu0 0
        %2512 = vmatpush1.bf16.msra.mxu0 0
        %2513 = vmatprep.subr.bf16.mxu0 0
        %2514 = vmatpush1.bf16.msra.mxu0 0
        %2515 = vmatprep.subr.bf16.mxu0 0
        %2516 = vmatpush1.bf16.msra.mxu0 0
        %2517 = vmatprep.subr.bf16.mxu0 0
        %2518 = vmatpush1.bf16.msra.mxu0 0
        %2519 = vmatprep.subr.bf16.mxu0 0
        %2520 = vmatpush1.bf16.msra.mxu0 %v2500
        %2521 = vmatprep.subr.bf16.mxu0 0
        %2522 = vmatpush2.bf16.msra.mxu0 0
        %2523 = vmatprep.subr.bf16.mxu0 0
        %2524 = vmatpush2.bf16.msra.mxu0 0
        %2525 = vmatprep.subr.bf16.mxu0 0
        %2526 = vmatpush2.bf16.msra.mxu0 0
        %2527 = vmatprep.subr.bf16.mxu0 0
        %2528 = vmatpush2.bf16.msra.mxu0 0
        %2529 = vmatprep.subr.bf16.mxu0 0
        %2530 = vmatpush2.bf16.msra.mxu0 0
        %2531 = vmatprep.subr.bf16.mxu0 0
        %2532 = vmatpush2.bf16.msra.mxu0 0
        %2533 = vmatprep.subr.bf16.mxu0 0
        %2534 = vmatpush2.bf16.msra.mxu0 0
        %2535 = vmatprep.subr.bf16.mxu0 0
        %2536 = vmatpush2.bf16.msra.mxu0 0
        %2537 = vmatprep.mubr.bf16.mxu0 0
        %2538 = vmatmul.mubr.bf16.gmra.mxu0 %v2503
        %v2539 = vpop.f32.mrf.mxu0
        %v2540 = vadd.f32 0.0, %v2539
        %v2541 = vpop.f32.mrf.mxu0
        %v2542 = vpop.f32.mrf.mxu0
        %v2543 = vpop.f32.mrf.mxu0
        %2544 = vdwg.mxu0
        %v2545 = vadd.f32 %v2381, %v2540
        %v2546 = vadd.f32 %v2108, %v2545
        %s2547 = scalar_lea.vmem %s17, 1
        %v2548 = vld [vmem:[%s2547] sm:$0x1]
        %s2549 = scalar_lea.vmem %s18, 1
        %v2550 = vld [vmem:[%s2549] sm:$0x1]
        %v2551 = vsel %vm1285, %v2546, 0.0
        %2552 = vadd.xlane.f32.xlu0 %v2551
        %v2553 = vpop.xlane.xlu0 %2552
        %v2554 = vmul.f32 %v2553, %v1504
        %v2555 = vsub.f32 %v2546, %v2554
        %v2556 = vmul.f32 %v2555, %v2555
        %v2557 = vsel %vm1285, %v2556, 0.0
        %2558 = vadd.xlane.f32.xlu0 %v2557
        %v2559 = vpop.xlane.xlu0 %2558
        %v2560 = vmul.f32 %v2559, %v1504
        %v2561 = vadd.f32 %v2560, 1e-08
        %v2562 = vrsqrt.pop %v2561
        %v2563 = vmul.f32 %v2555, %v2562
        %v2565 = vlaneseq
        %v2566 = vshrl.u32 %v2565, 7
        %v2567 = vsub.s32 0, %v2566
        %v2568 = vrot.slane %v2548, %v2567
        %v2570 = vmul.f32 %v2563, %v2568
        %v2572 = vlaneseq
        %v2573 = vshrl.u32 %v2572, 7
        %v2574 = vsub.s32 0, %v2573
        %v2575 = vrot.slane %v2550, %v2574
        %v2577 = vadd.f32 %v2570, %v2575
        %v2578 = vpack.c.bf16 %v2577, %v2577
        %s2579 = scalar_lea.vmem [#allocation19], 16
        %v2580 = vld [vmem:[%s2579] sm:$0xf]
        %v2581 = vld [vmem:[%s2579 + $0x4] sm:$0xf]
        %v2582 = vld [vmem:[%s2579 + $0x8] sm:$0xf]
        %v2583 = vld [vmem:[%s2579 + $0xc] sm:$0xf]
        %s2584 = scalar_lea.vmem %s20, 1
        %v2585 = vld [vmem:[%s2584] sm:$0x1]
        %v2587 = vlaneseq
        %v2588 = vshrl.u32 %v2587, 7
        %v2589 = vsub.s32 0, %v2588
        %v2590 = vrot.slane %v2585, %v2589
        %v2596 = vunpack.c.l.b16 %v2580
        %v2597 = vunpack.c.l.b16 %v2581
        %v2598 = vunpack.c.l.b16 %v2582
        %v2599 = vunpack.c.l.b16 %v2583
        %v2600 = vpack.c.b16 %v2597, %v2596
        %v2601 = vpack.c.b16 %v2599, %v2598
        %v2605 = vsel %vm1285, %v2578, 0
        %2607 = vmatprep.subr.bf16.mxu0 0
        %2608 = vmatpush1.bf16.msra.mxu0 0
        %2609 = vmatprep.subr.bf16.mxu0 0
        %2610 = vmatpush1.bf16.msra.mxu0 0
        %2611 = vmatprep.subr.bf16.mxu0 0
        %2612 = vmatpush1.bf16.msra.mxu0 0
        %2613 = vmatprep.subr.bf16.mxu0 0
        %2614 = vmatpush1.bf16.msra.mxu0 0
        %2615 = vmatprep.subr.bf16.mxu0 0
        %2616 = vmatpush1.bf16.msra.mxu0 0
        %2617 = vmatprep.subr.bf16.mxu0 0
        %2618 = vmatpush1.bf16.msra.mxu0 0
        %2619 = vmatprep.subr.bf16.mxu0 0
        %2620 = vmatpush1.bf16.msra.mxu0 %v2601
        %2621 = vmatprep.subr.bf16.mxu0 0
        %2622 = vmatpush1.bf16.msra.mxu0 %v2600
        %2623 = vmatprep.subr.bf16.mxu0 0
        %2624 = vmatpush2.bf16.msra.mxu0 0
        %2625 = vmatprep.subr.bf16.mxu0 0
        %2626 = vmatpush2.bf16.msra.mxu0 0
        %2627 = vmatprep.subr.bf16.mxu0 0
        %2628 = vmatpush2.bf16.msra.mxu0 0
        %2629 = vmatprep.subr.bf16.mxu0 0
        %2630 = vmatpush2.bf16.msra.mxu0 0
        %2631 = vmatprep.subr.bf16.mxu0 0
        %2632 = vmatpush2.bf16.msra.mxu0 0
        %2633 = vmatprep.subr.bf16.mxu0 0
        %2634 = vmatpush2.bf16.msra.mxu0 0
        %2635 = vmatprep.subr.bf16.mxu0 0
        %2636 = vmatpush2.bf16.msra.mxu0 0
        %2637 = vmatprep.subr.bf16.mxu0 0
        %2638 = vmatpush2.bf16.msra.mxu0 0
        %2639 = vmatprep.mubr.bf16.mxu0 0
        %2640 = vmatmul.mubr.bf16.gmra.mxu0 %v2605
        %v2641 = vpop.f32.mrf.mxu0
        %v2642 = vadd.f32 %v2590, %v2641
        %v2643 = vpop.f32.mrf.mxu0
        %v2644 = vpop.f32.mrf.mxu0
        %v2645 = vpop.f32.mrf.mxu0
        %2646 = vdwg.mxu0
        %v2647 = vmul.f32 %v2642, 0.5
        %v2648 = vmul.f32 %v2642, 0.044715
        %v2649 = vmul.f32 %v2648, %v2642
        %v2650 = vmul.f32 %v2649, %v2642
        %v2651 = vadd.f32 %v2642, %v2650
        %v2652 = vmul.f32 %v2651, 0.7978846
        %v2653 = vtanh.pop %v2652
        %v2654 = vadd.f32 %v2653, 1.0
        %v2655 = vmul.f32 %v2647, %v2654
        %v2656 = vpack.c.bf16 %v2655, %v2655
        %s2657 = scalar_lea.vmem [#allocation21], 16
        %v2658 = vld [vmem:[%s2657] sm:$0xf]
        %v2659 = vld [vmem:[%s2657 + $0x4] sm:$0xf]
        %v2660 = vld [vmem:[%s2657 + $0x8] sm:$0xf]
        %v2661 = vld [vmem:[%s2657 + $0xc] sm:$0xf]
        %s2662 = scalar_lea.vmem %s22, 1
        %v2663 = vld [vmem:[%s2662] sm:$0x1]
        %v2665 = vlaneseq
        %v2666 = vshrl.u32 %v2665, 7
        %v2667 = vsub.s32 0, %v2666
        %v2668 = vrot.slane %v2663, %v2667
        %v2674 = vunpack.c.l.b16 %v2658
        %v2675 = vunpack.c.l.b16 %v2659
        %v2676 = vunpack.c.l.b16 %v2660
        %v2677 = vunpack.c.l.b16 %v2661
        %v2678 = vpack.c.b16 %v2675, %v2674
        %v2679 = vpack.c.b16 %v2677, %v2676
        %v2683 = vsel %vm1285, %v2656, 0
        %2685 = vmatprep.subr.bf16.mxu0 0
        %2686 = vmatpush1.bf16.msra.mxu0 0
        %2687 = vmatprep.subr.bf16.mxu0 0
        %2688 = vmatpush1.bf16.msra.mxu0 0
        %2689 = vmatprep.subr.bf16.mxu0 0
        %2690 = vmatpush1.bf16.msra.mxu0 0
        %2691 = vmatprep.subr.bf16.mxu0 0
        %2692 = vmatpush1.bf16.msra.mxu0 0
        %2693 = vmatprep.subr.bf16.mxu0 0
        %2694 = vmatpush1.bf16.msra.mxu0 0
        %2695 = vmatprep.subr.bf16.mxu0 0
        %2696 = vmatpush1.bf16.msra.mxu0 0
        %2697 = vmatprep.subr.bf16.mxu0 0
        %2698 = vmatpush1.bf16.msra.mxu0 %v2679
        %2699 = vmatprep.subr.bf16.mxu0 0
        %2700 = vmatpush1.bf16.msra.mxu0 %v2678
        %2701 = vmatprep.subr.bf16.mxu0 0
        %2702 = vmatpush2.bf16.msra.mxu0 0
        %2703 = vmatprep.subr.bf16.mxu0 0
        %2704 = vmatpush2.bf16.msra.mxu0 0
        %2705 = vmatprep.subr.bf16.mxu0 0
        %2706 = vmatpush2.bf16.msra.mxu0 0
        %2707 = vmatprep.subr.bf16.mxu0 0
        %2708 = vmatpush2.bf16.msra.mxu0 0
        %2709 = vmatprep.subr.bf16.mxu0 0
        %2710 = vmatpush2.bf16.msra.mxu0 0
        %2711 = vmatprep.subr.bf16.mxu0 0
        %2712 = vmatpush2.bf16.msra.mxu0 0
        %2713 = vmatprep.subr.bf16.mxu0 0
        %2714 = vmatpush2.bf16.msra.mxu0 0
        %2715 = vmatprep.subr.bf16.mxu0 0
        %2716 = vmatpush2.bf16.msra.mxu0 0
        %2717 = vmatprep.mubr.bf16.mxu0 0
        %2718 = vmatmul.mubr.bf16.gmra.mxu0 %v2683
        %v2719 = vpop.f32.mrf.mxu0
        %v2720 = vadd.f32 %v2668, %v2719
        %v2721 = vpop.f32.mrf.mxu0
        %v2722 = vpop.f32.mrf.mxu0
        %v2723 = vpop.f32.mrf.mxu0
        %2724 = vdwg.mxu0
        %v2725 = vadd.f32 %v2546, %v2720
        %v2726 = vmul.f32 %v2725, %v1495
        %v2727 = vld [vmem:[%s23] sm:$0x1]
        %v2728 = vld [vmem:[%s24] sm:$0x1]
        %v2729 = vsel %vm1285, %v2726, 0.0
        %2730 = vadd.xlane.f32.xlu0 %v2729
        %v2731 = vpop.xlane.xlu0 %2730
        %v2732 = vmul.f32 %v2731, %v1504
        %v2733 = vsub.f32 %v2726, %v2732
        %v2734 = vmul.f32 %v2733, %v2733
        %v2735 = vsel %vm1285, %v2734, 0.0
        %2736 = vadd.xlane.f32.xlu0 %v2735
        %v2737 = vpop.xlane.xlu0 %2736
        %v2738 = vmul.f32 %v2737, %v1504
        %v2739 = vadd.f32 %v2738, 1e-08
        %v2740 = vrsqrt.pop %v2739
        %v2741 = vmul.f32 %v2733, %v2740
        %v2743 = vlaneseq
        %v2744 = vshrl.u32 %v2743, 7
        %v2745 = vsub.s32 0, %v2744
        %v2746 = vrot.slane %v2727, %v2745
        %v2748 = vmul.f32 %v2741, %v2746
        %v2750 = vlaneseq
        %v2751 = vshrl.u32 %v2750, 7
        %v2752 = vsub.s32 0, %v2751
        %v2753 = vrot.slane %v2728, %v2752
        %v2755 = vadd.f32 %v2748, %v2753
        %2756 = vst.msk [vmem:[%s1156] sm:$0xff] %vm1285, %v2755
        %v2757 = vmul.f32 %v1422, %v2755
        %v2758 = vsel %vm1285, %v2757, 0.0
        %2759 = vadd.xlane.f32.xlu0 %v2758
        %v2760 = vpop.xlane.xlu0 %2759
        %v2761 = vmul.f32 %v1423, %v2755
        %v2762 = vsel %vm1285, %v2761, 0.0
        %2763 = vadd.xlane.f32.xlu0 %v2762
        %v2764 = vpop.xlane.xlu0 %2763
        %v2765 = vmin.f32 %v2760, 0.0
        %v2766 = vand.u32 2147483647, %v2760
        %v2767 = vsub.f32 0.0, %v2766
        %v2768 = vmul.f32 %v2767, 1.442695
        %v2769 = vpow.pop %v2768
        %v2770 = vadd.f32 %v2769, 1.0
        %v2771 = vlog2.pop %v2770
        %v2772 = vmul.f32 %v2771, 0.6931472
        %v2773 = vsub.f32 %v2765, %v2772
        %v2774 = vsub.f32 0.0, %v2764
        %v2775 = vmin.f32 %v2774, 0.0
        %v2776 = vand.u32 2147483647, %v2774
        %v2777 = vsub.f32 0.0, %v2776
        %v2778 = vmul.f32 %v2777, 1.442695
        %v2779 = vpow.pop %v2778
        %v2780 = vadd.f32 %v2779, 1.0
        %v2781 = vlog2.pop %v2780
        %v2782 = vmul.f32 %v2781, 0.6931472
        %v2783 = vsub.f32 %v2775, %v2782
        %v2784 = vadd.f32 %v2773, %v2783
        %v2785 = vmul.f32 %v2784, %v1474
        %v2786 = vsub.f32 %v2760, %v2764
        %vm2787 = vcmp.gt.f32.partialorder %v2786, 0.0
        %vm2788 = vcmp.lt.f32.partialorder %v2786, 0.0
        %v2789 = vsel %vm2788, -1.0, 0.0
        %v2790 = vsel %vm2787, 1.0, %v2789
        %v2791 = vadd.f32 %v2790, 1.0
        %v2792 = vmul.f32 %v2791, 0.5
        %v2793 = vmul.f32 %v2792, %v1474
        %vm2794 = vcmask 7168
        %v2795 = vsel %vm2794, %v2785, 0.0
        %v2796 = vrot.slane %v2795, 4
        %v2797 = vadd.f32 %v2795, %v2796
        %v2798 = vrot.slane %v2797, 2
        %v2799 = vadd.f32 %v2797, %v2798
        %v2800 = vrot.slane %v2799, 1
        %v2801 = vadd.f32 %v2799, %v2800
        %vm2802 = vcmask 0
        %2803 = vst.msk [vmem:[%s1174] sm:$0x1] %vm2802, %v2801
        %v2804 = vsel %vm2794, %v2793, 0.0
        %v2805 = vrot.slane %v2804, 4
        %v2806 = vadd.f32 %v2804, %v2805
        %v2807 = vrot.slane %v2806, 2
        %v2808 = vadd.f32 %v2806, %v2807
        %v2809 = vrot.slane %v2808, 1
        %v2810 = vadd.f32 %v2808, %v2809
        %2811 = vst.msk [vmem:[%s1177] sm:$0x1] %vm2802, %v2810
        %v2812 = vsel %vm2794, %v1474, 0.0
        %v2813 = vrot.slane %v2812, 4
        %v2814 = vadd.f32 %v2812, %v2813
        %v2815 = vrot.slane %v2814, 2
        %v2816 = vadd.f32 %v2814, %v2815
        %v2817 = vrot.slane %v2816, 1
        %v2818 = vadd.f32 %v2816, %v2817
        %2819 = vst.msk [vmem:[%s1180] sm:$0x1] %vm2802, %v2818
        %s2820 = sand.u32 %s606, 1
        %s2821 = scalar_lea.sflag [#allocation6], %s2820
        %s2822 = sand.u32 %s606, 1
        %s2823 = smul.addr %s2822, 8
        %s2824 = scalar_lea.vmem [#allocation22], %s2823
        %p2825 = scmp.lt.s32.totalorder %s53, 3
        %s2826 = scalar_select %p2825, %s53, 3
        %s2827 = scalar_lea.vmem %s26, %s2826
        %p2828 = scmp.lt.s32.totalorder %s53, 3
        %s2829 = scalar_select %p2828, %s53, 3
        %s2830 = scalar_lea.vmem %s27, %s2829
        %p2831 = scmp.lt.s32.totalorder %s53, 3
        %s2832 = scalar_select %p2831, %s53, 3
        %s2833 = scalar_lea.vmem %s28, %s2832
        // Predicated region
        $region247: #{tpu_custom_call.1} parent=193 // pred_check
          %p2834 = pneg %p616
        $region248: #{tpu_custom_call.1} parent=193 // pred_check_branch
          %2836 = sbr.rel (%p2834) target = $region250
        $region249: #{tpu_custom_call.1} parent=193 // pred_region
          %s2838 = ssub.s32 128, 128
          %2839 = vsyncadd %s2821, %s2838
          %s2840 = smul.addr %s53, 128
          %s2841 = scalar_lea.hbm %s25, %s2840
          %s2843 = sshll.u32 %s2824, 4
          %s2844 = int_to_ptr.vmem [resolvable:$true] %s2843
          %2846 = dma.vmem_to_hbm [thread:$0]  %s2844, 128, %s2841, %s2821
        $region250: #{tpu_custom_call.1} parent=193 // pred_fallthru
          _
        // Predicated region
        $region251: #{tpu_custom_call.1} parent=193 // pred_check
          %p2847 = pneg %p642
        $region252: #{tpu_custom_call.1} parent=193 // pred_check_branch
          %2849 = sbr.rel (%p2847) target = $region254
        $region253: #{tpu_custom_call.1} parent=193 // pred_region
          _
        $region254: #{tpu_custom_call.1} parent=193 // pred_fallthru
          _
        // Predicated region
        $region255: #{tpu_custom_call.1} parent=193 // pred_check
          %p2850 = pneg %p668
        $region256: #{tpu_custom_call.1} parent=193 // pred_check_branch
          %2852 = sbr.rel (%p2850) target = $region258
        $region257: #{tpu_custom_call.1} parent=193 // pred_region
          _
        $region258: #{tpu_custom_call.1} parent=193 // pred_fallthru
          _
        // Predicated region
        $region259: #{tpu_custom_call.1} parent=193 // pred_check
          %p2853 = pneg %p694
        $region260: #{tpu_custom_call.1} parent=193 // pred_check_branch
          %2855 = sbr.rel (%p2853) target = $region262
        $region261: #{tpu_custom_call.1} parent=193 // pred_region
          _
        $region262: #{tpu_custom_call.1} parent=193 // pred_fallthru
          _
      $region194: #{tpu_custom_call.1} parent=5 // pred_fallthru
        _
      %p2856 = scmp.le.s32.totalorder 2, %s48
      // Predicated region
      $region263: #{tpu_custom_call.1} parent=5 // pred_check
        %p2857 = pneg %p2856
      $region264: #{tpu_custom_call.1} parent=5 // pred_check_branch
        %2859 = sbr.rel (%p2857) target = $region266
      $region265: #{tpu_custom_call.1} parent=5 // pred_region
        %s2860 = ssub.s32 %s48, 2
        // Predicated region
        $region267: #{tpu_custom_call.1} parent=265 // pred_check
          %p2861 = pneg %p622
        $region268: #{tpu_custom_call.1} parent=265 // pred_check_branch
          %2863 = sbr.rel (%p2861) target = $region270
        $region269: #{tpu_custom_call.1} parent=265 // pred_region
          %s2864 = sand.u32 %s607, 1
          %s2865 = scalar_lea.sflag [#allocation6], %s2864
          %s2866 = sand.u32 %s607, 1
          %s2867 = smul.addr %s2866, 8
          %s2868 = scalar_lea.vmem [#allocation22], %s2867
          %2869 = dma.done %s2865, 128
        $region270: #{tpu_custom_call.1} parent=265 // pred_fallthru
          _
        // Predicated region
        $region271: #{tpu_custom_call.1} parent=265 // pred_check
          %p2870 = pneg %p648
        $region272: #{tpu_custom_call.1} parent=265 // pred_check_branch
          %2872 = sbr.rel (%p2870) target = $region274
        $region273: #{tpu_custom_call.1} parent=265 // pred_region
          %p2873 = scmp.lt.s32.totalorder %s54, 3
          %s2874 = scalar_select %p2873, %s54, 3
          %s2875 = scalar_lea.vmem %s26, %s2874
        $region274: #{tpu_custom_call.1} parent=265 // pred_fallthru
          _
        // Predicated region
        $region275: #{tpu_custom_call.1} parent=265 // pred_check
          %p2876 = pneg %p674
        $region276: #{tpu_custom_call.1} parent=265 // pred_check_branch
          %2878 = sbr.rel (%p2876) target = $region278
        $region277: #{tpu_custom_call.1} parent=265 // pred_region
          %p2879 = scmp.lt.s32.totalorder %s54, 3
          %s2880 = scalar_select %p2879, %s54, 3
          %s2881 = scalar_lea.vmem %s27, %s2880
        $region278: #{tpu_custom_call.1} parent=265 // pred_fallthru
          _
        // Predicated region
        $region279: #{tpu_custom_call.1} parent=265 // pred_check
          %p2882 = pneg %p700
        $region280: #{tpu_custom_call.1} parent=265 // pred_check_branch
          %2884 = sbr.rel (%p2882) target = $region282
        $region281: #{tpu_custom_call.1} parent=265 // pred_region
          %p2885 = scmp.lt.s32.totalorder %s54, 3
          %s2886 = scalar_select %p2885, %s54, 3
          %s2887 = scalar_lea.vmem %s28, %s2886
        $region282: #{tpu_custom_call.1} parent=265 // pred_fallthru
          _
      $region266: #{tpu_custom_call.1} parent=5 // pred_fallthru
        _
    $region6: #{tpu_custom_call.1} parent=1 // loop_footer
      %s52 = sadd.s32 1, %s48
    $region7: #{tpu_custom_call.1} parent=1 // loop_footer_branch
      %47 = sbr.rel target = $region3
    $region8: #{tpu_custom_call.1} parent=1 // loop_exit
      _
    %2888 = vsyncpa [#allocation5], 1
    %s2889 = scalar_lea.sflag [#allocation5], 1
    %2890 = vsyncpa %s2889, 1
    %2891 = vsyncpa [#allocation8], 1
    %s2892 = scalar_lea.sflag [#allocation8], 1
    %2893 = vsyncpa %s2892, 1
    %2894 = vsyncpa [#allocation11], 1
    %2895 = vsyncpa [#allocation14], 1
    %2896 = vsyncpa [#allocation17], 1
    %2897 = vsyncpa [#allocation20], 1
    %2898 = vsyncpa [#allocation6], 1
    %s2899 = scalar_lea.sflag [#allocation6], 1
    %2900 = vsyncpa %s2899, 1

</llo_original>
